<compile_context>
chip_gen: v7x
topology: tpu7x:2x2x1
jax: 0.10.0
libtpu: 0.0.40
codegen_flags: <defaults>
</compile_context>

<pallas_src>
import numpy as np
import jax
import jax.numpy as jnp
from jax.experimental import pallas as pl
from jax.experimental.pallas import tpu as pltpu  # noqa: F401  (kept for parity / easy tuning)

# ---------------- model hyper-parameters (small, consistent with the module) ------------
NENV = 8              # config.pretext.batch_size
SEQ = 8               # config.pretext.num_steps
LATENT = 6            # latent_size
STATE_ACTION = 2      # self.state_action_size
EMB = 32              # config.network.embedding_size
HID = 32              # config.network.rnn_hidden_size  (self.output_size)
HALF = NENV // 2      # two interleaved "software threads" of 4 envs each

# ---------------- packed-weight slab layout (rows x 128 lanes, f32) ---------------------
ROW_WG = 0            # rows 0:64,   lanes 0:128  fused GRU weight (EMB+HID, 4H)
ROW_BG = 64           # row  64,     lanes 0:128  fused GRU bias
ROW_B1 = 65           # row  65,     lanes 0:32   mlp_in bias 1
ROW_B2 = 66           # row  66,     lanes 0:32   mlp_in bias 2
ROW_W1S0 = 67         # row  67,     lanes 0:32   w1s row 0 (state feature 0)
ROW_W1S1 = 68         # row  68,     lanes 0:32   w1s row 1 (state feature 1)
ROW_BO1 = 69          # row  69,     lanes 0:16   output_linear bias 1
ROW_WO2C0 = 70        # row  70,     lanes 0:16   wo2 column 0 (as a row)
ROW_WO2C1 = 71        # row  71,     lanes 0:16   wo2 column 1 (as a row)
ROW_BO2 = 72          # row  72,     lanes 0:2    output_linear bias 2
ROW_W2 = 80           # rows 80:112, lanes 0:32   mlp_in weight 2 (32,32)
ROW_WO1 = 80          # rows 80:112, lanes 64:80  output_linear weight 1 (32,16)
ROW_W1Z = 112         # rows 112:118,lanes 0:32   latent projection weight (6,32)
SLAB_ROWS = 120
SLAB_LANES = 128


def _orthogonal(key, shape, gain=1.0):
    """Deterministic orthogonal-ish init (QR of a Gaussian), like nn.init.orthogonal_."""
    rows, cols = shape
    n = max(rows, cols)
    a = jax.random.normal(key, (n, n), dtype=jnp.float32)
    q, r = jnp.linalg.qr(a)
    q = q * jnp.sign(jnp.diag(r))  # make deterministic
    return gain * q[:rows, :cols].astype(jnp.float32)


def init_params(key):
    ks = jax.random.split(key, 8)
    g = np.sqrt(2.0)
    p = {}
    # mlp_in: Linear(STATE_ACTION + LATENT, 32) -> ReLU -> Linear(32, EMB) -> ReLU
    w1 = _orthogonal(ks[0], (32, STATE_ACTION + LATENT), gain=g)      # torch layout (out, in)
    p["w1s"] = w1[:, :STATE_ACTION].T                                  # (2, 32)
    p["w1z"] = w1[:, STATE_ACTION:].T                                  # (LATENT, 32)
    p["b1"] = jnp.zeros((1, 32), jnp.float32)
    p["w2"] = _orthogonal(ks[1], (EMB, 32), gain=g).T                  # (32, EMB)
    p["b2"] = jnp.zeros((1, EMB), jnp.float32)
    # GRU(EMB, HID): weight_ih (3H, EMB), weight_hh (3H, H), biases = 0 (per module init)
    p["wih"] = _orthogonal(ks[2], (3 * HID, EMB), gain=1.0).T          # (EMB, 3H)
    p["whh"] = _orthogonal(ks[3], (3 * HID, HID), gain=1.0).T          # (HID, 3H)
    p["bih"] = jnp.zeros((1, 3 * HID), jnp.float32)
    p["bhh"] = jnp.zeros((1, 3 * HID), jnp.float32)
    # output_linear: Linear(HID, HID//2) -> ReLU -> Linear(HID//2, 2) -> Tanh
    p["wo1"] = _orthogonal(ks[4], (HID // 2, HID), gain=g).T           # (HID, HID//2)
    p["bo1"] = jnp.zeros((1, HID // 2), jnp.float32)
    p["wo2"] = _orthogonal(ks[5], (STATE_ACTION, HID // 2), gain=g).T  # (HID//2, 2)
    p["bo2"] = jnp.zeros((1, STATE_ACTION), jnp.float32)
    return p


def pack_param_slab(p):
    """Pack all weights/biases into one lane-dense (SLAB_ROWS, 128) f32 slab. Done ONCE."""
    H = HID
    wih, whh = p["wih"], p["whh"]
    bih, bhh = p["bih"], p["bhh"]
    # fused GRU weight (EMB+HID, 4H) and bias (1, 4H):
    #   cols [0:2H]  : ih_{r,z} stacked over K with hh_{r,z}; bias = b_ih + b_hh
    #   cols [2H:3H] : ih_n only;  cols [3H:4H] : hh_n only  (so n = tanh(g2 + r*g3))
    wg = jnp.zeros((EMB + HID, 4 * H), jnp.float32)
    wg = wg.at[:EMB, :2 * H].set(wih[:, :2 * H])
    wg = wg.at[EMB:, :2 * H].set(whh[:, :2 * H])
    wg = wg.at[:EMB, 2 * H:3 * H].set(wih[:, 2 * H:])
    wg = wg.at[EMB:, 3 * H:].set(whh[:, 2 * H:])
    bg = jnp.concatenate(
        [bih[:, :2 * H] + bhh[:, :2 * H], bih[:, 2 * H:], bhh[:, 2 * H:]], axis=1)  # (1, 4H)

    slab = jnp.zeros((SLAB_ROWS, SLAB_LANES), jnp.float32)
    slab = slab.at[ROW_WG:ROW_WG + EMB + HID, :4 * H].set(wg)
    slab = slab.at[ROW_BG, :4 * H].set(bg[0])
    slab = slab.at[ROW_B1, :32].set(p["b1"][0])
    slab = slab.at[ROW_B2, :EMB].set(p["b2"][0])
    slab = slab.at[ROW_W1S0, :32].set(p["w1s"][0])
    slab = slab.at[ROW_W1S1, :32].set(p["w1s"][1])
    slab = slab.at[ROW_BO1, :H // 2].set(p["bo1"][0])
    slab = slab.at[ROW_WO2C0, :H // 2].set(p["wo2"][:, 0])
    slab = slab.at[ROW_WO2C1, :H // 2].set(p["wo2"][:, 1])
    slab = slab.at[ROW_BO2, :STATE_ACTION].set(p["bo2"][0])
    slab = slab.at[ROW_W2:ROW_W2 + 32, :EMB].set(p["w2"])
    slab = slab.at[ROW_WO1:ROW_WO1 + HID, 64:64 + H // 2].set(p["wo1"])
    slab = slab.at[ROW_W1Z:ROW_W1Z + LATENT, :32].set(p["w1z"])
    return slab


# ------------------------------------ Pallas kernel -------------------------------------
def decoder_kernel(zflat_ref, slab_ref, out_ref, hfin_ref):
    H = HID

    # ---- carve all weights from the packed slab (static slices, hoisted before the loop)
    wg = slab_ref[ROW_WG:ROW_WG + EMB + HID, :]               # (64, 128)
    bg = slab_ref[ROW_BG:ROW_BG + 1, :]                       # (1, 128)
    b1 = slab_ref[ROW_B1:ROW_B1 + 1, 0:32]                    # (1, 32)
    b2 = slab_ref[ROW_B2:ROW_B2 + 1, 0:EMB]                   # (1, 32)
    w1s0 = slab_ref[ROW_W1S0:ROW_W1S0 + 1, 0:32]              # (1, 32)
    w1s1 = slab_ref[ROW_W1S1:ROW_W1S1 + 1, 0:32]              # (1, 32)
    bo1 = slab_ref[ROW_BO1:ROW_BO1 + 1, 0:H // 2]             # (1, 16)
    wo2c0 = slab_ref[ROW_WO2C0:ROW_WO2C0 + 1, 0:H // 2]       # (1, 16)
    wo2c1 = slab_ref[ROW_WO2C1:ROW_WO2C1 + 1, 0:H // 2]       # (1, 16)
    bo2_0 = slab_ref[ROW_BO2:ROW_BO2 + 1, 0:1]                # (1, 1)
    bo2_1 = slab_ref[ROW_BO2:ROW_BO2 + 1, 1:2]                # (1, 1)
    w2 = slab_ref[ROW_W2:ROW_W2 + 32, 0:EMB]                  # (32, 32)
    wo1 = slab_ref[ROW_WO1:ROW_WO1 + HID, 64:64 + H // 2]     # (32, 16)
    w1z = slab_ref[ROW_W1Z:ROW_W1Z + LATENT, 0:32]            # (6, 32)

    # Latent projection hoisted out of the recurrence (bias b1 folded in): (SEQ*NENV, 32)
    zproj = jnp.dot(zflat_ref[...], w1z, preferred_element_type=jnp.float32) + b1

    def half_step(s0, s1, h, zp):
        """One time step for one group of HALF envs.  s0/s1: (HALF,1), h: (HALF,HID)."""
        # mlp_in layer 1: K=2 matmul replaced by two broadcast VPU FMAs (no MXU trip).
        x1 = jnp.maximum(s0 * w1s0 + s1 * w1s1 + zp, 0.0)                         # (HALF, 32)
        xe = jnp.maximum(jnp.dot(x1, w2, preferred_element_type=jnp.float32) + b2, 0.0)
        # Fused GRU cell: single (HALF, EMB+HID) @ (EMB+HID, 4H) MXU pass.
        xh = jnp.concatenate([xe, h], axis=-1)                                    # (HALF, 64)
        g = jnp.dot(xh, wg, preferred_element_type=jnp.float32) + bg              # (HALF, 128)
        rz = 0.5 * jnp.tanh(0.5 * g[:, :2 * H]) + 0.5   # sigmoid(x) == 0.5*tanh(x/2) + 0.5
        r = rz[:, :H]
        zg = rz[:, H:2 * H]
        n = jnp.tanh(g[:, 2 * H:3 * H] + r * g[:, 3 * H:4 * H])
        h_new = n + zg * (h - n)                        # == (1 - z) * n + z * h
        # output_linear: Linear(32->16) on MXU, then (16->2) as VPU mul + 16-lane reduce.
        o1 = jnp.maximum(jnp.dot(h_new, wo1, preferred_element_type=jnp.float32) + bo1, 0.0)
        s0n = jnp.tanh(jnp.sum(o1 * wo2c0, axis=-1, keepdims=True) + bo2_0)       # (HALF, 1)
        s1n = jnp.tanh(jnp.sum(o1 * wo2c1, axis=-1, keepdims=True) + bo2_1)       # (HALF, 1)
        return s0n, s1n, h_new

    # carries: state = -2 * ones(nenv, 2); hidden = 0 (the torch module asserts h0 == 0)
    neg2 = jnp.full((HALF, 1), -2.0, dtype=jnp.float32)
    s0a, s1a, s0b, s1b = neg2, neg2, neg2, neg2
    ha = jnp.zeros((HALF, HID), jnp.float32)
    hb = jnp.zeros((HALF, HID), jnp.float32)

    # Fully unrolled time loop; two independent 4-env chains interleaved per step so their
    # MXU / EUP latencies overlap (each chain only depends on its own previous step).
    cols_a = []
    cols_b = []
    for i in range(SEQ):
        base = i * NENV
        s0a, s1a, ha = half_step(s0a, s1a, ha, zproj[base:base + HALF, :])
        s0b, s1b, hb = half_step(s0b, s1b, hb, zproj[base + HALF:base + NENV, :])
        cols_a += [s0a, s1a]
        cols_b += [s0b, s1b]

    # Lane-dense output (NENV, SEQ*2) assembled in vregs, written once; wrapper reshapes.
    out_ref[0:HALF, :] = jnp.concatenate(cols_a, axis=-1)         # (HALF, SEQ*2)
    out_ref[HALF:NENV, :] = jnp.concatenate(cols_b, axis=-1)
    hfin_ref[0:HALF, :] = ha                                      # final hidden, written once
    hfin_ref[HALF:NENV, :] = hb


def lstm_decoder_forward(z, rnn_h0, slab):
    """z: (nenv, seq, latent); rnn_h0 is asserted zero by the torch module (h inits in-kernel)."""
    del rnn_h0  # torch asserts rnn_hxs['rnn'] == 0; not DMA'd (saves one prologue DMA)
    # time-major, flattened rows: (SEQ*NENV, LATENT); trivial layout reshape outside kernel.
    z_flat = jnp.transpose(z, (1, 0, 2)).reshape(SEQ * NENV, LATENT).astype(jnp.float32)

    # Single kernel invocation, no grid: 2 input DMAs (z, weight slab), 2 output writebacks.
    out_flat, h_final = pl.pallas_call(
        decoder_kernel,
        out_shape=(
            jax.ShapeDtypeStruct((NENV, SEQ * STATE_ACTION), jnp.float32),
            jax.ShapeDtypeStruct((NENV, HID), jnp.float32),
        ),
    )(z_flat, slab)

    # flat[n, 2*i + j] = output j of env n at step i  ->  (nenv, seq, 2), matching torch.
    return out_flat.reshape(NENV, SEQ, STATE_ACTION), h_final


# ----------------------------- pure-JAX reference (for checking) ------------------------
def reference_forward(z, rnn_h0, p):
    z_tm = jnp.transpose(z, (1, 0, 2))
    state = -2.0 * jnp.ones((NENV, STATE_ACTION), jnp.float32)
    h = rnn_h0
    outs = []
    for i in range(SEQ):
        x1 = jnp.maximum(state @ p["w1s"] + z_tm[i] @ p["w1z"] + p["b1"], 0.0)
        xe = jnp.maximum(x1 @ p["w2"] + p["b2"], 0.0)
        gx = xe @ p["wih"] + p["bih"]
        gh = h @ p["whh"] + p["bhh"]
        r = jax.nn.sigmoid(gx[:, :HID] + gh[:, :HID])
        zg = jax.nn.sigmoid(gx[:, HID:2 * HID] + gh[:, HID:2 * HID])
        n = jnp.tanh(gx[:, 2 * HID:] + r * gh[:, 2 * HID:])
        h = (1.0 - zg) * n + zg * h
        o1 = jnp.maximum(h @ p["wo1"] + p["bo1"], 0.0)
        state = jnp.tanh(o1 @ p["wo2"] + p["bo2"])
        outs.append(state)
    return jnp.transpose(jnp.stack(outs, 0), (1, 0, 2)), h


if __name__ == "__main__":
    key = jax.random.PRNGKey(0)
    kp, kz = jax.random.split(key)
    params = init_params(kp)
    slab = jax.block_until_ready(pack_param_slab(params))   # built ONCE, reused every call

    z = jax.random.normal(kz, (NENV, SEQ, LATENT), dtype=jnp.float32)
    rnn_h0 = jnp.zeros((NENV, HID), jnp.float32)   # torch asserts rnn_hxs['rnn'] == 0

    fwd = jax.jit(lstm_decoder_forward)
    outputs, h_final = fwd(z, rnn_h0, slab)
    jax.block_until_ready((outputs, h_final))

    ref_out, ref_h = reference_forward(z, rnn_h0, params)
    np.testing.assert_allclose(np.asarray(outputs), np.asarray(ref_out), rtol=1e-5, atol=2e-5)
    np.testing.assert_allclose(np.asarray(h_final), np.asarray(ref_h), rtol=1e-5, atol=2e-5)

    print("KERNEL_OK")
</pallas_src>

<mosaic_0001>
module attributes {stable_mosaic.version = 11 : i64} {
  func.func @decoder_kernel(%arg0: memref<64x6xf32, #tpu.memory_space<vmem>>, %arg1: memref<120x128xf32, #tpu.memory_space<vmem>>, %arg2: memref<8x16xf32, #tpu.memory_space<vmem>>, %arg3: memref<8x32xf32, #tpu.memory_space<vmem>>) attributes {dimension_semantics = [], scalar_prefetch = 0 : i64, scratch_operands = 0 : i64, tpu.core_type = #tpu.core_type<tc>} {
    %c0 = arith.constant 0 : index
    %c0_0 = arith.constant 0 : index
    %0 = vector.load %arg1[%c0, %c0_0] : memref<120x128xf32, #tpu.memory_space<vmem>>, vector<64x128xf32>
    %c64 = arith.constant 64 : index
    %c0_1 = arith.constant 0 : index
    %1 = vector.load %arg1[%c64, %c0_1] : memref<120x128xf32, #tpu.memory_space<vmem>>, vector<1x128xf32>
    %c65 = arith.constant 65 : index
    %c0_2 = arith.constant 0 : index
    %2 = vector.load %arg1[%c65, %c0_2] : memref<120x128xf32, #tpu.memory_space<vmem>>, vector<1x32xf32>
    %c66 = arith.constant 66 : index
    %c0_3 = arith.constant 0 : index
    %3 = vector.load %arg1[%c66, %c0_3] : memref<120x128xf32, #tpu.memory_space<vmem>>, vector<1x32xf32>
    %c67 = arith.constant 67 : index
    %c0_4 = arith.constant 0 : index
    %4 = vector.load %arg1[%c67, %c0_4] : memref<120x128xf32, #tpu.memory_space<vmem>>, vector<1x32xf32>
    %c68 = arith.constant 68 : index
    %c0_5 = arith.constant 0 : index
    %5 = vector.load %arg1[%c68, %c0_5] : memref<120x128xf32, #tpu.memory_space<vmem>>, vector<1x32xf32>
    %c69 = arith.constant 69 : index
    %c0_6 = arith.constant 0 : index
    %6 = vector.load %arg1[%c69, %c0_6] : memref<120x128xf32, #tpu.memory_space<vmem>>, vector<1x16xf32>
    %c70 = arith.constant 70 : index
    %c0_7 = arith.constant 0 : index
    %7 = vector.load %arg1[%c70, %c0_7] : memref<120x128xf32, #tpu.memory_space<vmem>>, vector<1x16xf32>
    %c71 = arith.constant 71 : index
    %c0_8 = arith.constant 0 : index
    %8 = vector.load %arg1[%c71, %c0_8] : memref<120x128xf32, #tpu.memory_space<vmem>>, vector<1x16xf32>
    %c72 = arith.constant 72 : index
    %c0_9 = arith.constant 0 : index
    %9 = vector.load %arg1[%c72, %c0_9] : memref<120x128xf32, #tpu.memory_space<vmem>>, vector<1x1xf32>
    %c72_10 = arith.constant 72 : index
    %c1 = arith.constant 1 : index
    %10 = vector.load %arg1[%c72_10, %c1] : memref<120x128xf32, #tpu.memory_space<vmem>>, vector<1x1xf32>
    %c80 = arith.constant 80 : index
    %c0_11 = arith.constant 0 : index
    %11 = vector.load %arg1[%c80, %c0_11] : memref<120x128xf32, #tpu.memory_space<vmem>>, vector<32x32xf32>
    %c80_12 = arith.constant 80 : index
    %c64_13 = arith.constant 64 : index
    %12 = vector.load %arg1[%c80_12, %c64_13] : memref<120x128xf32, #tpu.memory_space<vmem>>, vector<32x16xf32>
    %c112 = arith.constant 112 : index
    %c0_14 = arith.constant 0 : index
    %13 = vector.load %arg1[%c112, %c0_14] : memref<120x128xf32, #tpu.memory_space<vmem>>, vector<6x32xf32>
    %c0_15 = arith.constant 0 : index
    %c0_16 = arith.constant 0 : index
    %14 = vector.load %arg0[%c0_15, %c0_16] : memref<64x6xf32, #tpu.memory_space<vmem>>, vector<64x6xf32>
    %cst = arith.constant dense<0.000000e+00> : vector<64x32xf32>
    %15 = tpu.matmul %14, %13, %cst {dimension_numbers = #tpu.dot_dimension_numbers<[1], [0], [0], [1], [0, 0, 1, 1], [], []>} : vector<64x6xf32>, vector<6x32xf32>, vector<64x32xf32> -> vector<64x32xf32>
    %16 = vector.broadcast %2 : vector<1x32xf32> to vector<64x32xf32>
    %17 = arith.addf %15, %16 : vector<64x32xf32>
    %cst_17 = arith.constant -2.000000e+00 : f32
    %18 = vector.broadcast %cst_17 : f32 to vector<4x1xf32>
    %cst_18 = arith.constant 0.000000e+00 : f32
    %19 = vector.broadcast %cst_18 : f32 to vector<4x32xf32>
    %cst_19 = arith.constant 0.000000e+00 : f32
    %20 = vector.broadcast %cst_19 : f32 to vector<4x32xf32>
    %21 = vector.extract_strided_slice %17 {offsets = [0, 0], sizes = [4, 32], strides = [1, 1]} : vector<64x32xf32> to vector<4x32xf32>
    %22 = vector.broadcast %18 : vector<4x1xf32> to vector<4x32xf32>
    %23 = vector.broadcast %4 : vector<1x32xf32> to vector<4x32xf32>
    %24 = arith.mulf %22, %23 : vector<4x32xf32>
    %25 = vector.broadcast %18 : vector<4x1xf32> to vector<4x32xf32>
    %26 = vector.broadcast %5 : vector<1x32xf32> to vector<4x32xf32>
    %27 = arith.mulf %25, %26 : vector<4x32xf32>
    %28 = arith.addf %24, %27 : vector<4x32xf32>
    %29 = arith.addf %28, %21 : vector<4x32xf32>
    %cst_20 = arith.constant 0.000000e+00 : f32
    %30 = vector.broadcast %cst_20 : f32 to vector<4x32xf32>
    %31 = arith.maximumf %29, %30 : vector<4x32xf32>
    %cst_21 = arith.constant dense<0.000000e+00> : vector<4x32xf32>
    %32 = tpu.matmul %31, %11, %cst_21 {dimension_numbers = #tpu.dot_dimension_numbers<[1], [0], [0], [1], [0, 0, 1, 1], [], []>} : vector<4x32xf32>, vector<32x32xf32>, vector<4x32xf32> -> vector<4x32xf32>
    %33 = vector.broadcast %3 : vector<1x32xf32> to vector<4x32xf32>
    %34 = arith.addf %32, %33 : vector<4x32xf32>
    %cst_22 = arith.constant 0.000000e+00 : f32
    %35 = vector.broadcast %cst_22 : f32 to vector<4x32xf32>
    %36 = arith.maximumf %34, %35 : vector<4x32xf32>
    %37 = tpu.concatenate %36, %19 in 1 : vector<4x32xf32>, vector<4x32xf32> -> vector<4x64xf32>
    %cst_23 = arith.constant dense<0.000000e+00> : vector<4x128xf32>
    %38 = tpu.matmul %37, %0, %cst_23 {dimension_numbers = #tpu.dot_dimension_numbers<[1], [0], [0], [1], [0, 0, 1, 1], [], []>} : vector<4x64xf32>, vector<64x128xf32>, vector<4x128xf32> -> vector<4x128xf32>
    %39 = vector.broadcast %1 : vector<1x128xf32> to vector<4x128xf32>
    %40 = arith.addf %38, %39 : vector<4x128xf32>
    %41 = vector.extract_strided_slice %40 {offsets = [0, 0], sizes = [4, 64], strides = [1, 1]} : vector<4x128xf32> to vector<4x64xf32>
    %cst_24 = arith.constant 5.000000e-01 : f32
    %42 = vector.broadcast %cst_24 : f32 to vector<4x64xf32>
    %43 = arith.mulf %42, %41 : vector<4x64xf32>
    %44 = math.tanh %43 : vector<4x64xf32>
    %cst_25 = arith.constant 5.000000e-01 : f32
    %45 = vector.broadcast %cst_25 : f32 to vector<4x64xf32>
    %46 = arith.mulf %45, %44 : vector<4x64xf32>
    %cst_26 = arith.constant 5.000000e-01 : f32
    %47 = vector.broadcast %cst_26 : f32 to vector<4x64xf32>
    %48 = arith.addf %46, %47 : vector<4x64xf32>
    %49 = vector.extract_strided_slice %48 {offsets = [0, 0], sizes = [4, 32], strides = [1, 1]} : vector<4x64xf32> to vector<4x32xf32>
    %50 = vector.extract_strided_slice %48 {offsets = [0, 32], sizes = [4, 32], strides = [1, 1]} : vector<4x64xf32> to vector<4x32xf32>
    %51 = vector.extract_strided_slice %40 {offsets = [0, 64], sizes = [4, 32], strides = [1, 1]} : vector<4x128xf32> to vector<4x32xf32>
    %52 = vector.extract_strided_slice %40 {offsets = [0, 96], sizes = [4, 32], strides = [1, 1]} : vector<4x128xf32> to vector<4x32xf32>
    %53 = arith.mulf %49, %52 : vector<4x32xf32>
    %54 = arith.addf %51, %53 : vector<4x32xf32>
    %55 = math.tanh %54 : vector<4x32xf32>
    %56 = arith.subf %19, %55 : vector<4x32xf32>
    %57 = arith.mulf %50, %56 : vector<4x32xf32>
    %58 = arith.addf %55, %57 : vector<4x32xf32>
    %cst_27 = arith.constant dense<0.000000e+00> : vector<4x16xf32>
    %59 = tpu.matmul %58, %12, %cst_27 {dimension_numbers = #tpu.dot_dimension_numbers<[1], [0], [0], [1], [0, 0, 1, 1], [], []>} : vector<4x32xf32>, vector<32x16xf32>, vector<4x16xf32> -> vector<4x16xf32>
    %60 = vector.broadcast %6 : vector<1x16xf32> to vector<4x16xf32>
    %61 = arith.addf %59, %60 : vector<4x16xf32>
    %cst_28 = arith.constant 0.000000e+00 : f32
    %62 = vector.broadcast %cst_28 : f32 to vector<4x16xf32>
    %63 = arith.maximumf %61, %62 : vector<4x16xf32>
    %64 = vector.broadcast %7 : vector<1x16xf32> to vector<4x16xf32>
    %65 = arith.mulf %63, %64 : vector<4x16xf32>
    %cst_29 = arith.constant dense<0.000000e+00> : vector<4xf32>
    %66 = vector.multi_reduction <add>, %65, %cst_29 [1] : vector<4x16xf32> to vector<4xf32>
    %67 = vector.shape_cast %66 : vector<4xf32> to vector<4x1xf32>
    %68 = vector.broadcast %9 : vector<1x1xf32> to vector<4x1xf32>
    %69 = arith.addf %67, %68 : vector<4x1xf32>
    %70 = math.tanh %69 : vector<4x1xf32>
    %71 = vector.broadcast %8 : vector<1x16xf32> to vector<4x16xf32>
    %72 = arith.mulf %63, %71 : vector<4x16xf32>
    %cst_30 = arith.constant dense<0.000000e+00> : vector<4xf32>
    %73 = vector.multi_reduction <add>, %72, %cst_30 [1] : vector<4x16xf32> to vector<4xf32>
    %74 = vector.shape_cast %73 : vector<4xf32> to vector<4x1xf32>
    %75 = vector.broadcast %10 : vector<1x1xf32> to vector<4x1xf32>
    %76 = arith.addf %74, %75 : vector<4x1xf32>
    %77 = math.tanh %76 : vector<4x1xf32>
    %78 = vector.extract_strided_slice %17 {offsets = [4, 0], sizes = [4, 32], strides = [1, 1]} : vector<64x32xf32> to vector<4x32xf32>
    %79 = vector.broadcast %18 : vector<4x1xf32> to vector<4x32xf32>
    %80 = vector.broadcast %4 : vector<1x32xf32> to vector<4x32xf32>
    %81 = arith.mulf %79, %80 : vector<4x32xf32>
    %82 = vector.broadcast %18 : vector<4x1xf32> to vector<4x32xf32>
    %83 = vector.broadcast %5 : vector<1x32xf32> to vector<4x32xf32>
    %84 = arith.mulf %82, %83 : vector<4x32xf32>
    %85 = arith.addf %81, %84 : vector<4x32xf32>
    %86 = arith.addf %85, %78 : vector<4x32xf32>
    %cst_31 = arith.constant 0.000000e+00 : f32
    %87 = vector.broadcast %cst_31 : f32 to vector<4x32xf32>
    %88 = arith.maximumf %86, %87 : vector<4x32xf32>
    %cst_32 = arith.constant dense<0.000000e+00> : vector<4x32xf32>
    %89 = tpu.matmul %88, %11, %cst_32 {dimension_numbers = #tpu.dot_dimension_numbers<[1], [0], [0], [1], [0, 0, 1, 1], [], []>} : vector<4x32xf32>, vector<32x32xf32>, vector<4x32xf32> -> vector<4x32xf32>
    %90 = vector.broadcast %3 : vector<1x32xf32> to vector<4x32xf32>
    %91 = arith.addf %89, %90 : vector<4x32xf32>
    %cst_33 = arith.constant 0.000000e+00 : f32
    %92 = vector.broadcast %cst_33 : f32 to vector<4x32xf32>
    %93 = arith.maximumf %91, %92 : vector<4x32xf32>
    %94 = tpu.concatenate %93, %20 in 1 : vector<4x32xf32>, vector<4x32xf32> -> vector<4x64xf32>
    %cst_34 = arith.constant dense<0.000000e+00> : vector<4x128xf32>
    %95 = tpu.matmul %94, %0, %cst_34 {dimension_numbers = #tpu.dot_dimension_numbers<[1], [0], [0], [1], [0, 0, 1, 1], [], []>} : vector<4x64xf32>, vector<64x128xf32>, vector<4x128xf32> -> vector<4x128xf32>
    %96 = vector.broadcast %1 : vector<1x128xf32> to vector<4x128xf32>
    %97 = arith.addf %95, %96 : vector<4x128xf32>
    %98 = vector.extract_strided_slice %97 {offsets = [0, 0], sizes = [4, 64], strides = [1, 1]} : vector<4x128xf32> to vector<4x64xf32>
    %cst_35 = arith.constant 5.000000e-01 : f32
    %99 = vector.broadcast %cst_35 : f32 to vector<4x64xf32>
    %100 = arith.mulf %99, %98 : vector<4x64xf32>
    %101 = math.tanh %100 : vector<4x64xf32>
    %cst_36 = arith.constant 5.000000e-01 : f32
    %102 = vector.broadcast %cst_36 : f32 to vector<4x64xf32>
    %103 = arith.mulf %102, %101 : vector<4x64xf32>
    %cst_37 = arith.constant 5.000000e-01 : f32
    %104 = vector.broadcast %cst_37 : f32 to vector<4x64xf32>
    %105 = arith.addf %103, %104 : vector<4x64xf32>
    %106 = vector.extract_strided_slice %105 {offsets = [0, 0], sizes = [4, 32], strides = [1, 1]} : vector<4x64xf32> to vector<4x32xf32>
    %107 = vector.extract_strided_slice %105 {offsets = [0, 32], sizes = [4, 32], strides = [1, 1]} : vector<4x64xf32> to vector<4x32xf32>
    %108 = vector.extract_strided_slice %97 {offsets = [0, 64], sizes = [4, 32], strides = [1, 1]} : vector<4x128xf32> to vector<4x32xf32>
    %109 = vector.extract_strided_slice %97 {offsets = [0, 96], sizes = [4, 32], strides = [1, 1]} : vector<4x128xf32> to vector<4x32xf32>
    %110 = arith.mulf %106, %109 : vector<4x32xf32>
    %111 = arith.addf %108, %110 : vector<4x32xf32>
    %112 = math.tanh %111 : vector<4x32xf32>
    %113 = arith.subf %20, %112 : vector<4x32xf32>
    %114 = arith.mulf %107, %113 : vector<4x32xf32>
    %115 = arith.addf %112, %114 : vector<4x32xf32>
    %cst_38 = arith.constant dense<0.000000e+00> : vector<4x16xf32>
    %116 = tpu.matmul %115, %12, %cst_38 {dimension_numbers = #tpu.dot_dimension_numbers<[1], [0], [0], [1], [0, 0, 1, 1], [], []>} : vector<4x32xf32>, vector<32x16xf32>, vector<4x16xf32> -> vector<4x16xf32>
    %117 = vector.broadcast %6 : vector<1x16xf32> to vector<4x16xf32>
    %118 = arith.addf %116, %117 : vector<4x16xf32>
    %cst_39 = arith.constant 0.000000e+00 : f32
    %119 = vector.broadcast %cst_39 : f32 to vector<4x16xf32>
    %120 = arith.maximumf %118, %119 : vector<4x16xf32>
    %121 = vector.broadcast %7 : vector<1x16xf32> to vector<4x16xf32>
    %122 = arith.mulf %120, %121 : vector<4x16xf32>
    %cst_40 = arith.constant dense<0.000000e+00> : vector<4xf32>
    %123 = vector.multi_reduction <add>, %122, %cst_40 [1] : vector<4x16xf32> to vector<4xf32>
    %124 = vector.shape_cast %123 : vector<4xf32> to vector<4x1xf32>
    %125 = vector.broadcast %9 : vector<1x1xf32> to vector<4x1xf32>
    %126 = arith.addf %124, %125 : vector<4x1xf32>
    %127 = math.tanh %126 : vector<4x1xf32>
    %128 = vector.broadcast %8 : vector<1x16xf32> to vector<4x16xf32>
    %129 = arith.mulf %120, %128 : vector<4x16xf32>
    %cst_41 = arith.constant dense<0.000000e+00> : vector<4xf32>
    %130 = vector.multi_reduction <add>, %129, %cst_41 [1] : vector<4x16xf32> to vector<4xf32>
    %131 = vector.shape_cast %130 : vector<4xf32> to vector<4x1xf32>
    %132 = vector.broadcast %10 : vector<1x1xf32> to vector<4x1xf32>
    %133 = arith.addf %131, %132 : vector<4x1xf32>
    %134 = math.tanh %133 : vector<4x1xf32>
    %135 = vector.extract_strided_slice %17 {offsets = [8, 0], sizes = [4, 32], strides = [1, 1]} : vector<64x32xf32> to vector<4x32xf32>
    %136 = vector.broadcast %70 : vector<4x1xf32> to vector<4x32xf32>
    %137 = vector.broadcast %4 : vector<1x32xf32> to vector<4x32xf32>
    %138 = arith.mulf %136, %137 : vector<4x32xf32>
    %139 = vector.broadcast %77 : vector<4x1xf32> to vector<4x32xf32>
    %140 = vector.broadcast %5 : vector<1x32xf32> to vector<4x32xf32>
    %141 = arith.mulf %139, %140 : vector<4x32xf32>
    %142 = arith.addf %138, %141 : vector<4x32xf32>
    %143 = arith.addf %142, %135 : vector<4x32xf32>
    %cst_42 = arith.constant 0.000000e+00 : f32
    %144 = vector.broadcast %cst_42 : f32 to vector<4x32xf32>
    %145 = arith.maximumf %143, %144 : vector<4x32xf32>
    %cst_43 = arith.constant dense<0.000000e+00> : vector<4x32xf32>
    %146 = tpu.matmul %145, %11, %cst_43 {dimension_numbers = #tpu.dot_dimension_numbers<[1], [0], [0], [1], [0, 0, 1, 1], [], []>} : vector<4x32xf32>, vector<32x32xf32>, vector<4x32xf32> -> vector<4x32xf32>
    %147 = vector.broadcast %3 : vector<1x32xf32> to vector<4x32xf32>
    %148 = arith.addf %146, %147 : vector<4x32xf32>
    %cst_44 = arith.constant 0.000000e+00 : f32
    %149 = vector.broadcast %cst_44 : f32 to vector<4x32xf32>
    %150 = arith.maximumf %148, %149 : vector<4x32xf32>
    %151 = tpu.concatenate %150, %58 in 1 : vector<4x32xf32>, vector<4x32xf32> -> vector<4x64xf32>
    %cst_45 = arith.constant dense<0.000000e+00> : vector<4x128xf32>
    %152 = tpu.matmul %151, %0, %cst_45 {dimension_numbers = #tpu.dot_dimension_numbers<[1], [0], [0], [1], [0, 0, 1, 1], [], []>} : vector<4x64xf32>, vector<64x128xf32>, vector<4x128xf32> -> vector<4x128xf32>
    %153 = vector.broadcast %1 : vector<1x128xf32> to vector<4x128xf32>
    %154 = arith.addf %152, %153 : vector<4x128xf32>
    %155 = vector.extract_strided_slice %154 {offsets = [0, 0], sizes = [4, 64], strides = [1, 1]} : vector<4x128xf32> to vector<4x64xf32>
    %cst_46 = arith.constant 5.000000e-01 : f32
    %156 = vector.broadcast %cst_46 : f32 to vector<4x64xf32>
    %157 = arith.mulf %156, %155 : vector<4x64xf32>
    %158 = math.tanh %157 : vector<4x64xf32>
    %cst_47 = arith.constant 5.000000e-01 : f32
    %159 = vector.broadcast %cst_47 : f32 to vector<4x64xf32>
    %160 = arith.mulf %159, %158 : vector<4x64xf32>
    %cst_48 = arith.constant 5.000000e-01 : f32
    %161 = vector.broadcast %cst_48 : f32 to vector<4x64xf32>
    %162 = arith.addf %160, %161 : vector<4x64xf32>
    %163 = vector.extract_strided_slice %162 {offsets = [0, 0], sizes = [4, 32], strides = [1, 1]} : vector<4x64xf32> to vector<4x32xf32>
    %164 = vector.extract_strided_slice %162 {offsets = [0, 32], sizes = [4, 32], strides = [1, 1]} : vector<4x64xf32> to vector<4x32xf32>
    %165 = vector.extract_strided_slice %154 {offsets = [0, 64], sizes = [4, 32], strides = [1, 1]} : vector<4x128xf32> to vector<4x32xf32>
    %166 = vector.extract_strided_slice %154 {offsets = [0, 96], sizes = [4, 32], strides = [1, 1]} : vector<4x128xf32> to vector<4x32xf32>
    %167 = arith.mulf %163, %166 : vector<4x32xf32>
    %168 = arith.addf %165, %167 : vector<4x32xf32>
    %169 = math.tanh %168 : vector<4x32xf32>
    %170 = arith.subf %58, %169 : vector<4x32xf32>
    %171 = arith.mulf %164, %170 : vector<4x32xf32>
    %172 = arith.addf %169, %171 : vector<4x32xf32>
    %cst_49 = arith.constant dense<0.000000e+00> : vector<4x16xf32>
    %173 = tpu.matmul %172, %12, %cst_49 {dimension_numbers = #tpu.dot_dimension_numbers<[1], [0], [0], [1], [0, 0, 1, 1], [], []>} : vector<4x32xf32>, vector<32x16xf32>, vector<4x16xf32> -> vector<4x16xf32>
    %174 = vector.broadcast %6 : vector<1x16xf32> to vector<4x16xf32>
    %175 = arith.addf %173, %174 : vector<4x16xf32>
    %cst_50 = arith.constant 0.000000e+00 : f32
    %176 = vector.broadcast %cst_50 : f32 to vector<4x16xf32>
    %177 = arith.maximumf %175, %176 : vector<4x16xf32>
    %178 = vector.broadcast %7 : vector<1x16xf32> to vector<4x16xf32>
    %179 = arith.mulf %177, %178 : vector<4x16xf32>
    %cst_51 = arith.constant dense<0.000000e+00> : vector<4xf32>
    %180 = vector.multi_reduction <add>, %179, %cst_51 [1] : vector<4x16xf32> to vector<4xf32>
    %181 = vector.shape_cast %180 : vector<4xf32> to vector<4x1xf32>
    %182 = vector.broadcast %9 : vector<1x1xf32> to vector<4x1xf32>
    %183 = arith.addf %181, %182 : vector<4x1xf32>
    %184 = math.tanh %183 : vector<4x1xf32>
    %185 = vector.broadcast %8 : vector<1x16xf32> to vector<4x16xf32>
    %186 = arith.mulf %177, %185 : vector<4x16xf32>
    %cst_52 = arith.constant dense<0.000000e+00> : vector<4xf32>
    %187 = vector.multi_reduction <add>, %186, %cst_52 [1] : vector<4x16xf32> to vector<4xf32>
    %188 = vector.shape_cast %187 : vector<4xf32> to vector<4x1xf32>
    %189 = vector.broadcast %10 : vector<1x1xf32> to vector<4x1xf32>
    %190 = arith.addf %188, %189 : vector<4x1xf32>
    %191 = math.tanh %190 : vector<4x1xf32>
    %192 = vector.extract_strided_slice %17 {offsets = [12, 0], sizes = [4, 32], strides = [1, 1]} : vector<64x32xf32> to vector<4x32xf32>
    %193 = vector.broadcast %127 : vector<4x1xf32> to vector<4x32xf32>
    %194 = vector.broadcast %4 : vector<1x32xf32> to vector<4x32xf32>
    %195 = arith.mulf %193, %194 : vector<4x32xf32>
    %196 = vector.broadcast %134 : vector<4x1xf32> to vector<4x32xf32>
    %197 = vector.broadcast %5 : vector<1x32xf32> to vector<4x32xf32>
    %198 = arith.mulf %196, %197 : vector<4x32xf32>
    %199 = arith.addf %195, %198 : vector<4x32xf32>
    %200 = arith.addf %199, %192 : vector<4x32xf32>
    %cst_53 = arith.constant 0.000000e+00 : f32
    %201 = vector.broadcast %cst_53 : f32 to vector<4x32xf32>
    %202 = arith.maximumf %200, %201 : vector<4x32xf32>
    %cst_54 = arith.constant dense<0.000000e+00> : vector<4x32xf32>
    %203 = tpu.matmul %202, %11, %cst_54 {dimension_numbers = #tpu.dot_dimension_numbers<[1], [0], [0], [1], [0, 0, 1, 1], [], []>} : vector<4x32xf32>, vector<32x32xf32>, vector<4x32xf32> -> vector<4x32xf32>
    %204 = vector.broadcast %3 : vector<1x32xf32> to vector<4x32xf32>
    %205 = arith.addf %203, %204 : vector<4x32xf32>
    %cst_55 = arith.constant 0.000000e+00 : f32
    %206 = vector.broadcast %cst_55 : f32 to vector<4x32xf32>
    %207 = arith.maximumf %205, %206 : vector<4x32xf32>
    %208 = tpu.concatenate %207, %115 in 1 : vector<4x32xf32>, vector<4x32xf32> -> vector<4x64xf32>
    %cst_56 = arith.constant dense<0.000000e+00> : vector<4x128xf32>
    %209 = tpu.matmul %208, %0, %cst_56 {dimension_numbers = #tpu.dot_dimension_numbers<[1], [0], [0], [1], [0, 0, 1, 1], [], []>} : vector<4x64xf32>, vector<64x128xf32>, vector<4x128xf32> -> vector<4x128xf32>
    %210 = vector.broadcast %1 : vector<1x128xf32> to vector<4x128xf32>
    %211 = arith.addf %209, %210 : vector<4x128xf32>
    %212 = vector.extract_strided_slice %211 {offsets = [0, 0], sizes = [4, 64], strides = [1, 1]} : vector<4x128xf32> to vector<4x64xf32>
    %cst_57 = arith.constant 5.000000e-01 : f32
    %213 = vector.broadcast %cst_57 : f32 to vector<4x64xf32>
    %214 = arith.mulf %213, %212 : vector<4x64xf32>
    %215 = math.tanh %214 : vector<4x64xf32>
    %cst_58 = arith.constant 5.000000e-01 : f32
    %216 = vector.broadcast %cst_58 : f32 to vector<4x64xf32>
    %217 = arith.mulf %216, %215 : vector<4x64xf32>
    %cst_59 = arith.constant 5.000000e-01 : f32
    %218 = vector.broadcast %cst_59 : f32 to vector<4x64xf32>
    %219 = arith.addf %217, %218 : vector<4x64xf32>
    %220 = vector.extract_strided_slice %219 {offsets = [0, 0], sizes = [4, 32], strides = [1, 1]} : vector<4x64xf32> to vector<4x32xf32>
    %221 = vector.extract_strided_slice %219 {offsets = [0, 32], sizes = [4, 32], strides = [1, 1]} : vector<4x64xf32> to vector<4x32xf32>
    %222 = vector.extract_strided_slice %211 {offsets = [0, 64], sizes = [4, 32], strides = [1, 1]} : vector<4x128xf32> to vector<4x32xf32>
    %223 = vector.extract_strided_slice %211 {offsets = [0, 96], sizes = [4, 32], strides = [1, 1]} : vector<4x128xf32> to vector<4x32xf32>
    %224 = arith.mulf %220, %223 : vector<4x32xf32>
    %225 = arith.addf %222, %224 : vector<4x32xf32>
    %226 = math.tanh %225 : vector<4x32xf32>
    %227 = arith.subf %115, %226 : vector<4x32xf32>
    %228 = arith.mulf %221, %227 : vector<4x32xf32>
    %229 = arith.addf %226, %228 : vector<4x32xf32>
    %cst_60 = arith.constant dense<0.000000e+00> : vector<4x16xf32>
    %230 = tpu.matmul %229, %12, %cst_60 {dimension_numbers = #tpu.dot_dimension_numbers<[1], [0], [0], [1], [0, 0, 1, 1], [], []>} : vector<4x32xf32>, vector<32x16xf32>, vector<4x16xf32> -> vector<4x16xf32>
    %231 = vector.broadcast %6 : vector<1x16xf32> to vector<4x16xf32>
    %232 = arith.addf %230, %231 : vector<4x16xf32>
    %cst_61 = arith.constant 0.000000e+00 : f32
    %233 = vector.broadcast %cst_61 : f32 to vector<4x16xf32>
    %234 = arith.maximumf %232, %233 : vector<4x16xf32>
    %235 = vector.broadcast %7 : vector<1x16xf32> to vector<4x16xf32>
    %236 = arith.mulf %234, %235 : vector<4x16xf32>
    %cst_62 = arith.constant dense<0.000000e+00> : vector<4xf32>
    %237 = vector.multi_reduction <add>, %236, %cst_62 [1] : vector<4x16xf32> to vector<4xf32>
    %238 = vector.shape_cast %237 : vector<4xf32> to vector<4x1xf32>
    %239 = vector.broadcast %9 : vector<1x1xf32> to vector<4x1xf32>
    %240 = arith.addf %238, %239 : vector<4x1xf32>
    %241 = math.tanh %240 : vector<4x1xf32>
    %242 = vector.broadcast %8 : vector<1x16xf32> to vector<4x16xf32>
    %243 = arith.mulf %234, %242 : vector<4x16xf32>
    %cst_63 = arith.constant dense<0.000000e+00> : vector<4xf32>
    %244 = vector.multi_reduction <add>, %243, %cst_63 [1] : vector<4x16xf32> to vector<4xf32>
    %245 = vector.shape_cast %244 : vector<4xf32> to vector<4x1xf32>
    %246 = vector.broadcast %10 : vector<1x1xf32> to vector<4x1xf32>
    %247 = arith.addf %245, %246 : vector<4x1xf32>
    %248 = math.tanh %247 : vector<4x1xf32>
    %249 = vector.extract_strided_slice %17 {offsets = [16, 0], sizes = [4, 32], strides = [1, 1]} : vector<64x32xf32> to vector<4x32xf32>
    %250 = vector.broadcast %184 : vector<4x1xf32> to vector<4x32xf32>
    %251 = vector.broadcast %4 : vector<1x32xf32> to vector<4x32xf32>
    %252 = arith.mulf %250, %251 : vector<4x32xf32>
    %253 = vector.broadcast %191 : vector<4x1xf32> to vector<4x32xf32>
    %254 = vector.broadcast %5 : vector<1x32xf32> to vector<4x32xf32>
    %255 = arith.mulf %253, %254 : vector<4x32xf32>
    %256 = arith.addf %252, %255 : vector<4x32xf32>
    %257 = arith.addf %256, %249 : vector<4x32xf32>
    %cst_64 = arith.constant 0.000000e+00 : f32
    %258 = vector.broadcast %cst_64 : f32 to vector<4x32xf32>
    %259 = arith.maximumf %257, %258 : vector<4x32xf32>
    %cst_65 = arith.constant dense<0.000000e+00> : vector<4x32xf32>
    %260 = tpu.matmul %259, %11, %cst_65 {dimension_numbers = #tpu.dot_dimension_numbers<[1], [0], [0], [1], [0, 0, 1, 1], [], []>} : vector<4x32xf32>, vector<32x32xf32>, vector<4x32xf32> -> vector<4x32xf32>
    %261 = vector.broadcast %3 : vector<1x32xf32> to vector<4x32xf32>
    %262 = arith.addf %260, %261 : vector<4x32xf32>
    %cst_66 = arith.constant 0.000000e+00 : f32
    %263 = vector.broadcast %cst_66 : f32 to vector<4x32xf32>
    %264 = arith.maximumf %262, %263 : vector<4x32xf32>
    %265 = tpu.concatenate %264, %172 in 1 : vector<4x32xf32>, vector<4x32xf32> -> vector<4x64xf32>
    %cst_67 = arith.constant dense<0.000000e+00> : vector<4x128xf32>
    %266 = tpu.matmul %265, %0, %cst_67 {dimension_numbers = #tpu.dot_dimension_numbers<[1], [0], [0], [1], [0, 0, 1, 1], [], []>} : vector<4x64xf32>, vector<64x128xf32>, vector<4x128xf32> -> vector<4x128xf32>
    %267 = vector.broadcast %1 : vector<1x128xf32> to vector<4x128xf32>
    %268 = arith.addf %266, %267 : vector<4x128xf32>
    %269 = vector.extract_strided_slice %268 {offsets = [0, 0], sizes = [4, 64], strides = [1, 1]} : vector<4x128xf32> to vector<4x64xf32>
    %cst_68 = arith.constant 5.000000e-01 : f32
    %270 = vector.broadcast %cst_68 : f32 to vector<4x64xf32>
    %271 = arith.mulf %270, %269 : vector<4x64xf32>
    %272 = math.tanh %271 : vector<4x64xf32>
    %cst_69 = arith.constant 5.000000e-01 : f32
    %273 = vector.broadcast %cst_69 : f32 to vector<4x64xf32>
    %274 = arith.mulf %273, %272 : vector<4x64xf32>
    %cst_70 = arith.constant 5.000000e-01 : f32
    %275 = vector.broadcast %cst_70 : f32 to vector<4x64xf32>
    %276 = arith.addf %274, %275 : vector<4x64xf32>
    %277 = vector.extract_strided_slice %276 {offsets = [0, 0], sizes = [4, 32], strides = [1, 1]} : vector<4x64xf32> to vector<4x32xf32>
    %278 = vector.extract_strided_slice %276 {offsets = [0, 32], sizes = [4, 32], strides = [1, 1]} : vector<4x64xf32> to vector<4x32xf32>
    %279 = vector.extract_strided_slice %268 {offsets = [0, 64], sizes = [4, 32], strides = [1, 1]} : vector<4x128xf32> to vector<4x32xf32>
    %280 = vector.extract_strided_slice %268 {offsets = [0, 96], sizes = [4, 32], strides = [1, 1]} : vector<4x128xf32> to vector<4x32xf32>
    %281 = arith.mulf %277, %280 : vector<4x32xf32>
    %282 = arith.addf %279, %281 : vector<4x32xf32>
    %283 = math.tanh %282 : vector<4x32xf32>
    %284 = arith.subf %172, %283 : vector<4x32xf32>
    %285 = arith.mulf %278, %284 : vector<4x32xf32>
    %286 = arith.addf %283, %285 : vector<4x32xf32>
    %cst_71 = arith.constant dense<0.000000e+00> : vector<4x16xf32>
    %287 = tpu.matmul %286, %12, %cst_71 {dimension_numbers = #tpu.dot_dimension_numbers<[1], [0], [0], [1], [0, 0, 1, 1], [], []>} : vector<4x32xf32>, vector<32x16xf32>, vector<4x16xf32> -> vector<4x16xf32>
    %288 = vector.broadcast %6 : vector<1x16xf32> to vector<4x16xf32>
    %289 = arith.addf %287, %288 : vector<4x16xf32>
    %cst_72 = arith.constant 0.000000e+00 : f32
    %290 = vector.broadcast %cst_72 : f32 to vector<4x16xf32>
    %291 = arith.maximumf %289, %290 : vector<4x16xf32>
    %292 = vector.broadcast %7 : vector<1x16xf32> to vector<4x16xf32>
    %293 = arith.mulf %291, %292 : vector<4x16xf32>
    %cst_73 = arith.constant dense<0.000000e+00> : vector<4xf32>
    %294 = vector.multi_reduction <add>, %293, %cst_73 [1] : vector<4x16xf32> to vector<4xf32>
    %295 = vector.shape_cast %294 : vector<4xf32> to vector<4x1xf32>
    %296 = vector.broadcast %9 : vector<1x1xf32> to vector<4x1xf32>
    %297 = arith.addf %295, %296 : vector<4x1xf32>
    %298 = math.tanh %297 : vector<4x1xf32>
    %299 = vector.broadcast %8 : vector<1x16xf32> to vector<4x16xf32>
    %300 = arith.mulf %291, %299 : vector<4x16xf32>
    %cst_74 = arith.constant dense<0.000000e+00> : vector<4xf32>
    %301 = vector.multi_reduction <add>, %300, %cst_74 [1] : vector<4x16xf32> to vector<4xf32>
    %302 = vector.shape_cast %301 : vector<4xf32> to vector<4x1xf32>
    %303 = vector.broadcast %10 : vector<1x1xf32> to vector<4x1xf32>
    %304 = arith.addf %302, %303 : vector<4x1xf32>
    %305 = math.tanh %304 : vector<4x1xf32>
    %306 = vector.extract_strided_slice %17 {offsets = [20, 0], sizes = [4, 32], strides = [1, 1]} : vector<64x32xf32> to vector<4x32xf32>
    %307 = vector.broadcast %241 : vector<4x1xf32> to vector<4x32xf32>
    %308 = vector.broadcast %4 : vector<1x32xf32> to vector<4x32xf32>
    %309 = arith.mulf %307, %308 : vector<4x32xf32>
    %310 = vector.broadcast %248 : vector<4x1xf32> to vector<4x32xf32>
    %311 = vector.broadcast %5 : vector<1x32xf32> to vector<4x32xf32>
    %312 = arith.mulf %310, %311 : vector<4x32xf32>
    %313 = arith.addf %309, %312 : vector<4x32xf32>
    %314 = arith.addf %313, %306 : vector<4x32xf32>
    %cst_75 = arith.constant 0.000000e+00 : f32
    %315 = vector.broadcast %cst_75 : f32 to vector<4x32xf32>
    %316 = arith.maximumf %314, %315 : vector<4x32xf32>
    %cst_76 = arith.constant dense<0.000000e+00> : vector<4x32xf32>
    %317 = tpu.matmul %316, %11, %cst_76 {dimension_numbers = #tpu.dot_dimension_numbers<[1], [0], [0], [1], [0, 0, 1, 1], [], []>} : vector<4x32xf32>, vector<32x32xf32>, vector<4x32xf32> -> vector<4x32xf32>
    %318 = vector.broadcast %3 : vector<1x32xf32> to vector<4x32xf32>
    %319 = arith.addf %317, %318 : vector<4x32xf32>
    %cst_77 = arith.constant 0.000000e+00 : f32
    %320 = vector.broadcast %cst_77 : f32 to vector<4x32xf32>
    %321 = arith.maximumf %319, %320 : vector<4x32xf32>
    %322 = tpu.concatenate %321, %229 in 1 : vector<4x32xf32>, vector<4x32xf32> -> vector<4x64xf32>
    %cst_78 = arith.constant dense<0.000000e+00> : vector<4x128xf32>
    %323 = tpu.matmul %322, %0, %cst_78 {dimension_numbers = #tpu.dot_dimension_numbers<[1], [0], [0], [1], [0, 0, 1, 1], [], []>} : vector<4x64xf32>, vector<64x128xf32>, vector<4x128xf32> -> vector<4x128xf32>
    %324 = vector.broadcast %1 : vector<1x128xf32> to vector<4x128xf32>
    %325 = arith.addf %323, %324 : vector<4x128xf32>
    %326 = vector.extract_strided_slice %325 {offsets = [0, 0], sizes = [4, 64], strides = [1, 1]} : vector<4x128xf32> to vector<4x64xf32>
    %cst_79 = arith.constant 5.000000e-01 : f32
    %327 = vector.broadcast %cst_79 : f32 to vector<4x64xf32>
    %328 = arith.mulf %327, %326 : vector<4x64xf32>
    %329 = math.tanh %328 : vector<4x64xf32>
    %cst_80 = arith.constant 5.000000e-01 : f32
    %330 = vector.broadcast %cst_80 : f32 to vector<4x64xf32>
    %331 = arith.mulf %330, %329 : vector<4x64xf32>
    %cst_81 = arith.constant 5.000000e-01 : f32
    %332 = vector.broadcast %cst_81 : f32 to vector<4x64xf32>
    %333 = arith.addf %331, %332 : vector<4x64xf32>
    %334 = vector.extract_strided_slice %333 {offsets = [0, 0], sizes = [4, 32], strides = [1, 1]} : vector<4x64xf32> to vector<4x32xf32>
    %335 = vector.extract_strided_slice %333 {offsets = [0, 32], sizes = [4, 32], strides = [1, 1]} : vector<4x64xf32> to vector<4x32xf32>
    %336 = vector.extract_strided_slice %325 {offsets = [0, 64], sizes = [4, 32], strides = [1, 1]} : vector<4x128xf32> to vector<4x32xf32>
    %337 = vector.extract_strided_slice %325 {offsets = [0, 96], sizes = [4, 32], strides = [1, 1]} : vector<4x128xf32> to vector<4x32xf32>
    %338 = arith.mulf %334, %337 : vector<4x32xf32>
    %339 = arith.addf %336, %338 : vector<4x32xf32>
    %340 = math.tanh %339 : vector<4x32xf32>
    %341 = arith.subf %229, %340 : vector<4x32xf32>
    %342 = arith.mulf %335, %341 : vector<4x32xf32>
    %343 = arith.addf %340, %342 : vector<4x32xf32>
    %cst_82 = arith.constant dense<0.000000e+00> : vector<4x16xf32>
    %344 = tpu.matmul %343, %12, %cst_82 {dimension_numbers = #tpu.dot_dimension_numbers<[1], [0], [0], [1], [0, 0, 1, 1], [], []>} : vector<4x32xf32>, vector<32x16xf32>, vector<4x16xf32> -> vector<4x16xf32>
    %345 = vector.broadcast %6 : vector<1x16xf32> to vector<4x16xf32>
    %346 = arith.addf %344, %345 : vector<4x16xf32>
    %cst_83 = arith.constant 0.000000e+00 : f32
    %347 = vector.broadcast %cst_83 : f32 to vector<4x16xf32>
    %348 = arith.maximumf %346, %347 : vector<4x16xf32>
    %349 = vector.broadcast %7 : vector<1x16xf32> to vector<4x16xf32>
    %350 = arith.mulf %348, %349 : vector<4x16xf32>
    %cst_84 = arith.constant dense<0.000000e+00> : vector<4xf32>
    %351 = vector.multi_reduction <add>, %350, %cst_84 [1] : vector<4x16xf32> to vector<4xf32>
    %352 = vector.shape_cast %351 : vector<4xf32> to vector<4x1xf32>
    %353 = vector.broadcast %9 : vector<1x1xf32> to vector<4x1xf32>
    %354 = arith.addf %352, %353 : vector<4x1xf32>
    %355 = math.tanh %354 : vector<4x1xf32>
    %356 = vector.broadcast %8 : vector<1x16xf32> to vector<4x16xf32>
    %357 = arith.mulf %348, %356 : vector<4x16xf32>
    %cst_85 = arith.constant dense<0.000000e+00> : vector<4xf32>
    %358 = vector.multi_reduction <add>, %357, %cst_85 [1] : vector<4x16xf32> to vector<4xf32>
    %359 = vector.shape_cast %358 : vector<4xf32> to vector<4x1xf32>
    %360 = vector.broadcast %10 : vector<1x1xf32> to vector<4x1xf32>
    %361 = arith.addf %359, %360 : vector<4x1xf32>
    %362 = math.tanh %361 : vector<4x1xf32>
    %363 = vector.extract_strided_slice %17 {offsets = [24, 0], sizes = [4, 32], strides = [1, 1]} : vector<64x32xf32> to vector<4x32xf32>
    %364 = vector.broadcast %298 : vector<4x1xf32> to vector<4x32xf32>
    %365 = vector.broadcast %4 : vector<1x32xf32> to vector<4x32xf32>
    %366 = arith.mulf %364, %365 : vector<4x32xf32>
    %367 = vector.broadcast %305 : vector<4x1xf32> to vector<4x32xf32>
    %368 = vector.broadcast %5 : vector<1x32xf32> to vector<4x32xf32>
    %369 = arith.mulf %367, %368 : vector<4x32xf32>
    %370 = arith.addf %366, %369 : vector<4x32xf32>
    %371 = arith.addf %370, %363 : vector<4x32xf32>
    %cst_86 = arith.constant 0.000000e+00 : f32
    %372 = vector.broadcast %cst_86 : f32 to vector<4x32xf32>
    %373 = arith.maximumf %371, %372 : vector<4x32xf32>
    %cst_87 = arith.constant dense<0.000000e+00> : vector<4x32xf32>
    %374 = tpu.matmul %373, %11, %cst_87 {dimension_numbers = #tpu.dot_dimension_numbers<[1], [0], [0], [1], [0, 0, 1, 1], [], []>} : vector<4x32xf32>, vector<32x32xf32>, vector<4x32xf32> -> vector<4x32xf32>
    %375 = vector.broadcast %3 : vector<1x32xf32> to vector<4x32xf32>
    %376 = arith.addf %374, %375 : vector<4x32xf32>
    %cst_88 = arith.constant 0.000000e+00 : f32
    %377 = vector.broadcast %cst_88 : f32 to vector<4x32xf32>
    %378 = arith.maximumf %376, %377 : vector<4x32xf32>
    %379 = tpu.concatenate %378, %286 in 1 : vector<4x32xf32>, vector<4x32xf32> -> vector<4x64xf32>
    %cst_89 = arith.constant dense<0.000000e+00> : vector<4x128xf32>
    %380 = tpu.matmul %379, %0, %cst_89 {dimension_numbers = #tpu.dot_dimension_numbers<[1], [0], [0], [1], [0, 0, 1, 1], [], []>} : vector<4x64xf32>, vector<64x128xf32>, vector<4x128xf32> -> vector<4x128xf32>
    %381 = vector.broadcast %1 : vector<1x128xf32> to vector<4x128xf32>
    %382 = arith.addf %380, %381 : vector<4x128xf32>
    %383 = vector.extract_strided_slice %382 {offsets = [0, 0], sizes = [4, 64], strides = [1, 1]} : vector<4x128xf32> to vector<4x64xf32>
    %cst_90 = arith.constant 5.000000e-01 : f32
    %384 = vector.broadcast %cst_90 : f32 to vector<4x64xf32>
    %385 = arith.mulf %384, %383 : vector<4x64xf32>
    %386 = math.tanh %385 : vector<4x64xf32>
    %cst_91 = arith.constant 5.000000e-01 : f32
    %387 = vector.broadcast %cst_91 : f32 to vector<4x64xf32>
    %388 = arith.mulf %387, %386 : vector<4x64xf32>
    %cst_92 = arith.constant 5.000000e-01 : f32
    %389 = vector.broadcast %cst_92 : f32 to vector<4x64xf32>
    %390 = arith.addf %388, %389 : vector<4x64xf32>
    %391 = vector.extract_strided_slice %390 {offsets = [0, 0], sizes = [4, 32], strides = [1, 1]} : vector<4x64xf32> to vector<4x32xf32>
    %392 = vector.extract_strided_slice %390 {offsets = [0, 32], sizes = [4, 32], strides = [1, 1]} : vector<4x64xf32> to vector<4x32xf32>
    %393 = vector.extract_strided_slice %382 {offsets = [0, 64], sizes = [4, 32], strides = [1, 1]} : vector<4x128xf32> to vector<4x32xf32>
    %394 = vector.extract_strided_slice %382 {offsets = [0, 96], sizes = [4, 32], strides = [1, 1]} : vector<4x128xf32> to vector<4x32xf32>
    %395 = arith.mulf %391, %394 : vector<4x32xf32>
    %396 = arith.addf %393, %395 : vector<4x32xf32>
    %397 = math.tanh %396 : vector<4x32xf32>
    %398 = arith.subf %286, %397 : vector<4x32xf32>
    %399 = arith.mulf %392, %398 : vector<4x32xf32>
    %400 = arith.addf %397, %399 : vector<4x32xf32>
    %cst_93 = arith.constant dense<0.000000e+00> : vector<4x16xf32>
    %401 = tpu.matmul %400, %12, %cst_93 {dimension_numbers = #tpu.dot_dimension_numbers<[1], [0], [0], [1], [0, 0, 1, 1], [], []>} : vector<4x32xf32>, vector<32x16xf32>, vector<4x16xf32> -> vector<4x16xf32>
    %402 = vector.broadcast %6 : vector<1x16xf32> to vector<4x16xf32>
    %403 = arith.addf %401, %402 : vector<4x16xf32>
    %cst_94 = arith.constant 0.000000e+00 : f32
    %404 = vector.broadcast %cst_94 : f32 to vector<4x16xf32>
    %405 = arith.maximumf %403, %404 : vector<4x16xf32>
    %406 = vector.broadcast %7 : vector<1x16xf32> to vector<4x16xf32>
    %407 = arith.mulf %405, %406 : vector<4x16xf32>
    %cst_95 = arith.constant dense<0.000000e+00> : vector<4xf32>
    %408 = vector.multi_reduction <add>, %407, %cst_95 [1] : vector<4x16xf32> to vector<4xf32>
    %409 = vector.shape_cast %408 : vector<4xf32> to vector<4x1xf32>
    %410 = vector.broadcast %9 : vector<1x1xf32> to vector<4x1xf32>
    %411 = arith.addf %409, %410 : vector<4x1xf32>
    %412 = math.tanh %411 : vector<4x1xf32>
    %413 = vector.broadcast %8 : vector<1x16xf32> to vector<4x16xf32>
    %414 = arith.mulf %405, %413 : vector<4x16xf32>
    %cst_96 = arith.constant dense<0.000000e+00> : vector<4xf32>
    %415 = vector.multi_reduction <add>, %414, %cst_96 [1] : vector<4x16xf32> to vector<4xf32>
    %416 = vector.shape_cast %415 : vector<4xf32> to vector<4x1xf32>
    %417 = vector.broadcast %10 : vector<1x1xf32> to vector<4x1xf32>
    %418 = arith.addf %416, %417 : vector<4x1xf32>
    %419 = math.tanh %418 : vector<4x1xf32>
    %420 = vector.extract_strided_slice %17 {offsets = [28, 0], sizes = [4, 32], strides = [1, 1]} : vector<64x32xf32> to vector<4x32xf32>
    %421 = vector.broadcast %355 : vector<4x1xf32> to vector<4x32xf32>
    %422 = vector.broadcast %4 : vector<1x32xf32> to vector<4x32xf32>
    %423 = arith.mulf %421, %422 : vector<4x32xf32>
    %424 = vector.broadcast %362 : vector<4x1xf32> to vector<4x32xf32>
    %425 = vector.broadcast %5 : vector<1x32xf32> to vector<4x32xf32>
    %426 = arith.mulf %424, %425 : vector<4x32xf32>
    %427 = arith.addf %423, %426 : vector<4x32xf32>
    %428 = arith.addf %427, %420 : vector<4x32xf32>
    %cst_97 = arith.constant 0.000000e+00 : f32
    %429 = vector.broadcast %cst_97 : f32 to vector<4x32xf32>
    %430 = arith.maximumf %428, %429 : vector<4x32xf32>
    %cst_98 = arith.constant dense<0.000000e+00> : vector<4x32xf32>
    %431 = tpu.matmul %430, %11, %cst_98 {dimension_numbers = #tpu.dot_dimension_numbers<[1], [0], [0], [1], [0, 0, 1, 1], [], []>} : vector<4x32xf32>, vector<32x32xf32>, vector<4x32xf32> -> vector<4x32xf32>
    %432 = vector.broadcast %3 : vector<1x32xf32> to vector<4x32xf32>
    %433 = arith.addf %431, %432 : vector<4x32xf32>
    %cst_99 = arith.constant 0.000000e+00 : f32
    %434 = vector.broadcast %cst_99 : f32 to vector<4x32xf32>
    %435 = arith.maximumf %433, %434 : vector<4x32xf32>
    %436 = tpu.concatenate %435, %343 in 1 : vector<4x32xf32>, vector<4x32xf32> -> vector<4x64xf32>
    %cst_100 = arith.constant dense<0.000000e+00> : vector<4x128xf32>
    %437 = tpu.matmul %436, %0, %cst_100 {dimension_numbers = #tpu.dot_dimension_numbers<[1], [0], [0], [1], [0, 0, 1, 1], [], []>} : vector<4x64xf32>, vector<64x128xf32>, vector<4x128xf32> -> vector<4x128xf32>
    %438 = vector.broadcast %1 : vector<1x128xf32> to vector<4x128xf32>
    %439 = arith.addf %437, %438 : vector<4x128xf32>
    %440 = vector.extract_strided_slice %439 {offsets = [0, 0], sizes = [4, 64], strides = [1, 1]} : vector<4x128xf32> to vector<4x64xf32>
    %cst_101 = arith.constant 5.000000e-01 : f32
    %441 = vector.broadcast %cst_101 : f32 to vector<4x64xf32>
    %442 = arith.mulf %441, %440 : vector<4x64xf32>
    %443 = math.tanh %442 : vector<4x64xf32>
    %cst_102 = arith.constant 5.000000e-01 : f32
    %444 = vector.broadcast %cst_102 : f32 to vector<4x64xf32>
    %445 = arith.mulf %444, %443 : vector<4x64xf32>
    %cst_103 = arith.constant 5.000000e-01 : f32
    %446 = vector.broadcast %cst_103 : f32 to vector<4x64xf32>
    %447 = arith.addf %445, %446 : vector<4x64xf32>
    %448 = vector.extract_strided_slice %447 {offsets = [0, 0], sizes = [4, 32], strides = [1, 1]} : vector<4x64xf32> to vector<4x32xf32>
    %449 = vector.extract_strided_slice %447 {offsets = [0, 32], sizes = [4, 32], strides = [1, 1]} : vector<4x64xf32> to vector<4x32xf32>
    %450 = vector.extract_strided_slice %439 {offsets = [0, 64], sizes = [4, 32], strides = [1, 1]} : vector<4x128xf32> to vector<4x32xf32>
    %451 = vector.extract_strided_slice %439 {offsets = [0, 96], sizes = [4, 32], strides = [1, 1]} : vector<4x128xf32> to vector<4x32xf32>
    %452 = arith.mulf %448, %451 : vector<4x32xf32>
    %453 = arith.addf %450, %452 : vector<4x32xf32>
    %454 = math.tanh %453 : vector<4x32xf32>
    %455 = arith.subf %343, %454 : vector<4x32xf32>
    %456 = arith.mulf %449, %455 : vector<4x32xf32>
    %457 = arith.addf %454, %456 : vector<4x32xf32>
    %cst_104 = arith.constant dense<0.000000e+00> : vector<4x16xf32>
    %458 = tpu.matmul %457, %12, %cst_104 {dimension_numbers = #tpu.dot_dimension_numbers<[1], [0], [0], [1], [0, 0, 1, 1], [], []>} : vector<4x32xf32>, vector<32x16xf32>, vector<4x16xf32> -> vector<4x16xf32>
    %459 = vector.broadcast %6 : vector<1x16xf32> to vector<4x16xf32>
    %460 = arith.addf %458, %459 : vector<4x16xf32>
    %cst_105 = arith.constant 0.000000e+00 : f32
    %461 = vector.broadcast %cst_105 : f32 to vector<4x16xf32>
    %462 = arith.maximumf %460, %461 : vector<4x16xf32>
    %463 = vector.broadcast %7 : vector<1x16xf32> to vector<4x16xf32>
    %464 = arith.mulf %462, %463 : vector<4x16xf32>
    %cst_106 = arith.constant dense<0.000000e+00> : vector<4xf32>
    %465 = vector.multi_reduction <add>, %464, %cst_106 [1] : vector<4x16xf32> to vector<4xf32>
    %466 = vector.shape_cast %465 : vector<4xf32> to vector<4x1xf32>
    %467 = vector.broadcast %9 : vector<1x1xf32> to vector<4x1xf32>
    %468 = arith.addf %466, %467 : vector<4x1xf32>
    %469 = math.tanh %468 : vector<4x1xf32>
    %470 = vector.broadcast %8 : vector<1x16xf32> to vector<4x16xf32>
    %471 = arith.mulf %462, %470 : vector<4x16xf32>
    %cst_107 = arith.constant dense<0.000000e+00> : vector<4xf32>
    %472 = vector.multi_reduction <add>, %471, %cst_107 [1] : vector<4x16xf32> to vector<4xf32>
    %473 = vector.shape_cast %472 : vector<4xf32> to vector<4x1xf32>
    %474 = vector.broadcast %10 : vector<1x1xf32> to vector<4x1xf32>
    %475 = arith.addf %473, %474 : vector<4x1xf32>
    %476 = math.tanh %475 : vector<4x1xf32>
    %477 = vector.extract_strided_slice %17 {offsets = [32, 0], sizes = [4, 32], strides = [1, 1]} : vector<64x32xf32> to vector<4x32xf32>
    %478 = vector.broadcast %412 : vector<4x1xf32> to vector<4x32xf32>
    %479 = vector.broadcast %4 : vector<1x32xf32> to vector<4x32xf32>
    %480 = arith.mulf %478, %479 : vector<4x32xf32>
    %481 = vector.broadcast %419 : vector<4x1xf32> to vector<4x32xf32>
    %482 = vector.broadcast %5 : vector<1x32xf32> to vector<4x32xf32>
    %483 = arith.mulf %481, %482 : vector<4x32xf32>
    %484 = arith.addf %480, %483 : vector<4x32xf32>
    %485 = arith.addf %484, %477 : vector<4x32xf32>
    %cst_108 = arith.constant 0.000000e+00 : f32
    %486 = vector.broadcast %cst_108 : f32 to vector<4x32xf32>
    %487 = arith.maximumf %485, %486 : vector<4x32xf32>
    %cst_109 = arith.constant dense<0.000000e+00> : vector<4x32xf32>
    %488 = tpu.matmul %487, %11, %cst_109 {dimension_numbers = #tpu.dot_dimension_numbers<[1], [0], [0], [1], [0, 0, 1, 1], [], []>} : vector<4x32xf32>, vector<32x32xf32>, vector<4x32xf32> -> vector<4x32xf32>
    %489 = vector.broadcast %3 : vector<1x32xf32> to vector<4x32xf32>
    %490 = arith.addf %488, %489 : vector<4x32xf32>
    %cst_110 = arith.constant 0.000000e+00 : f32
    %491 = vector.broadcast %cst_110 : f32 to vector<4x32xf32>
    %492 = arith.maximumf %490, %491 : vector<4x32xf32>
    %493 = tpu.concatenate %492, %400 in 1 : vector<4x32xf32>, vector<4x32xf32> -> vector<4x64xf32>
    %cst_111 = arith.constant dense<0.000000e+00> : vector<4x128xf32>
    %494 = tpu.matmul %493, %0, %cst_111 {dimension_numbers = #tpu.dot_dimension_numbers<[1], [0], [0], [1], [0, 0, 1, 1], [], []>} : vector<4x64xf32>, vector<64x128xf32>, vector<4x128xf32> -> vector<4x128xf32>
    %495 = vector.broadcast %1 : vector<1x128xf32> to vector<4x128xf32>
    %496 = arith.addf %494, %495 : vector<4x128xf32>
    %497 = vector.extract_strided_slice %496 {offsets = [0, 0], sizes = [4, 64], strides = [1, 1]} : vector<4x128xf32> to vector<4x64xf32>
    %cst_112 = arith.constant 5.000000e-01 : f32
    %498 = vector.broadcast %cst_112 : f32 to vector<4x64xf32>
    %499 = arith.mulf %498, %497 : vector<4x64xf32>
    %500 = math.tanh %499 : vector<4x64xf32>
    %cst_113 = arith.constant 5.000000e-01 : f32
    %501 = vector.broadcast %cst_113 : f32 to vector<4x64xf32>
    %502 = arith.mulf %501, %500 : vector<4x64xf32>
    %cst_114 = arith.constant 5.000000e-01 : f32
    %503 = vector.broadcast %cst_114 : f32 to vector<4x64xf32>
    %504 = arith.addf %502, %503 : vector<4x64xf32>
    %505 = vector.extract_strided_slice %504 {offsets = [0, 0], sizes = [4, 32], strides = [1, 1]} : vector<4x64xf32> to vector<4x32xf32>
    %506 = vector.extract_strided_slice %504 {offsets = [0, 32], sizes = [4, 32], strides = [1, 1]} : vector<4x64xf32> to vector<4x32xf32>
    %507 = vector.extract_strided_slice %496 {offsets = [0, 64], sizes = [4, 32], strides = [1, 1]} : vector<4x128xf32> to vector<4x32xf32>
    %508 = vector.extract_strided_slice %496 {offsets = [0, 96], sizes = [4, 32], strides = [1, 1]} : vector<4x128xf32> to vector<4x32xf32>
    %509 = arith.mulf %505, %508 : vector<4x32xf32>
    %510 = arith.addf %507, %509 : vector<4x32xf32>
    %511 = math.tanh %510 : vector<4x32xf32>
    %512 = arith.subf %400, %511 : vector<4x32xf32>
    %513 = arith.mulf %506, %512 : vector<4x32xf32>
    %514 = arith.addf %511, %513 : vector<4x32xf32>
    %cst_115 = arith.constant dense<0.000000e+00> : vector<4x16xf32>
    %515 = tpu.matmul %514, %12, %cst_115 {dimension_numbers = #tpu.dot_dimension_numbers<[1], [0], [0], [1], [0, 0, 1, 1], [], []>} : vector<4x32xf32>, vector<32x16xf32>, vector<4x16xf32> -> vector<4x16xf32>
    %516 = vector.broadcast %6 : vector<1x16xf32> to vector<4x16xf32>
    %517 = arith.addf %515, %516 : vector<4x16xf32>
    %cst_116 = arith.constant 0.000000e+00 : f32
    %518 = vector.broadcast %cst_116 : f32 to vector<4x16xf32>
    %519 = arith.maximumf %517, %518 : vector<4x16xf32>
    %520 = vector.broadcast %7 : vector<1x16xf32> to vector<4x16xf32>
    %521 = arith.mulf %519, %520 : vector<4x16xf32>
    %cst_117 = arith.constant dense<0.000000e+00> : vector<4xf32>
    %522 = vector.multi_reduction <add>, %521, %cst_117 [1] : vector<4x16xf32> to vector<4xf32>
    %523 = vector.shape_cast %522 : vector<4xf32> to vector<4x1xf32>
    %524 = vector.broadcast %9 : vector<1x1xf32> to vector<4x1xf32>
    %525 = arith.addf %523, %524 : vector<4x1xf32>
    %526 = math.tanh %525 : vector<4x1xf32>
    %527 = vector.broadcast %8 : vector<1x16xf32> to vector<4x16xf32>
    %528 = arith.mulf %519, %527 : vector<4x16xf32>
    %cst_118 = arith.constant dense<0.000000e+00> : vector<4xf32>
    %529 = vector.multi_reduction <add>, %528, %cst_118 [1] : vector<4x16xf32> to vector<4xf32>
    %530 = vector.shape_cast %529 : vector<4xf32> to vector<4x1xf32>
    %531 = vector.broadcast %10 : vector<1x1xf32> to vector<4x1xf32>
    %532 = arith.addf %530, %531 : vector<4x1xf32>
    %533 = math.tanh %532 : vector<4x1xf32>
    %534 = vector.extract_strided_slice %17 {offsets = [36, 0], sizes = [4, 32], strides = [1, 1]} : vector<64x32xf32> to vector<4x32xf32>
    %535 = vector.broadcast %469 : vector<4x1xf32> to vector<4x32xf32>
    %536 = vector.broadcast %4 : vector<1x32xf32> to vector<4x32xf32>
    %537 = arith.mulf %535, %536 : vector<4x32xf32>
    %538 = vector.broadcast %476 : vector<4x1xf32> to vector<4x32xf32>
    %539 = vector.broadcast %5 : vector<1x32xf32> to vector<4x32xf32>
    %540 = arith.mulf %538, %539 : vector<4x32xf32>
    %541 = arith.addf %537, %540 : vector<4x32xf32>
    %542 = arith.addf %541, %534 : vector<4x32xf32>
    %cst_119 = arith.constant 0.000000e+00 : f32
    %543 = vector.broadcast %cst_119 : f32 to vector<4x32xf32>
    %544 = arith.maximumf %542, %543 : vector<4x32xf32>
    %cst_120 = arith.constant dense<0.000000e+00> : vector<4x32xf32>
    %545 = tpu.matmul %544, %11, %cst_120 {dimension_numbers = #tpu.dot_dimension_numbers<[1], [0], [0], [1], [0, 0, 1, 1], [], []>} : vector<4x32xf32>, vector<32x32xf32>, vector<4x32xf32> -> vector<4x32xf32>
    %546 = vector.broadcast %3 : vector<1x32xf32> to vector<4x32xf32>
    %547 = arith.addf %545, %546 : vector<4x32xf32>
    %cst_121 = arith.constant 0.000000e+00 : f32
    %548 = vector.broadcast %cst_121 : f32 to vector<4x32xf32>
    %549 = arith.maximumf %547, %548 : vector<4x32xf32>
    %550 = tpu.concatenate %549, %457 in 1 : vector<4x32xf32>, vector<4x32xf32> -> vector<4x64xf32>
    %cst_122 = arith.constant dense<0.000000e+00> : vector<4x128xf32>
    %551 = tpu.matmul %550, %0, %cst_122 {dimension_numbers = #tpu.dot_dimension_numbers<[1], [0], [0], [1], [0, 0, 1, 1], [], []>} : vector<4x64xf32>, vector<64x128xf32>, vector<4x128xf32> -> vector<4x128xf32>
    %552 = vector.broadcast %1 : vector<1x128xf32> to vector<4x128xf32>
    %553 = arith.addf %551, %552 : vector<4x128xf32>
    %554 = vector.extract_strided_slice %553 {offsets = [0, 0], sizes = [4, 64], strides = [1, 1]} : vector<4x128xf32> to vector<4x64xf32>
    %cst_123 = arith.constant 5.000000e-01 : f32
    %555 = vector.broadcast %cst_123 : f32 to vector<4x64xf32>
    %556 = arith.mulf %555, %554 : vector<4x64xf32>
    %557 = math.tanh %556 : vector<4x64xf32>
    %cst_124 = arith.constant 5.000000e-01 : f32
    %558 = vector.broadcast %cst_124 : f32 to vector<4x64xf32>
    %559 = arith.mulf %558, %557 : vector<4x64xf32>
    %cst_125 = arith.constant 5.000000e-01 : f32
    %560 = vector.broadcast %cst_125 : f32 to vector<4x64xf32>
    %561 = arith.addf %559, %560 : vector<4x64xf32>
    %562 = vector.extract_strided_slice %561 {offsets = [0, 0], sizes = [4, 32], strides = [1, 1]} : vector<4x64xf32> to vector<4x32xf32>
    %563 = vector.extract_strided_slice %561 {offsets = [0, 32], sizes = [4, 32], strides = [1, 1]} : vector<4x64xf32> to vector<4x32xf32>
    %564 = vector.extract_strided_slice %553 {offsets = [0, 64], sizes = [4, 32], strides = [1, 1]} : vector<4x128xf32> to vector<4x32xf32>
    %565 = vector.extract_strided_slice %553 {offsets = [0, 96], sizes = [4, 32], strides = [1, 1]} : vector<4x128xf32> to vector<4x32xf32>
    %566 = arith.mulf %562, %565 : vector<4x32xf32>
    %567 = arith.addf %564, %566 : vector<4x32xf32>
    %568 = math.tanh %567 : vector<4x32xf32>
    %569 = arith.subf %457, %568 : vector<4x32xf32>
    %570 = arith.mulf %563, %569 : vector<4x32xf32>
    %571 = arith.addf %568, %570 : vector<4x32xf32>
    %cst_126 = arith.constant dense<0.000000e+00> : vector<4x16xf32>
    %572 = tpu.matmul %571, %12, %cst_126 {dimension_numbers = #tpu.dot_dimension_numbers<[1], [0], [0], [1], [0, 0, 1, 1], [], []>} : vector<4x32xf32>, vector<32x16xf32>, vector<4x16xf32> -> vector<4x16xf32>
    %573 = vector.broadcast %6 : vector<1x16xf32> to vector<4x16xf32>
    %574 = arith.addf %572, %573 : vector<4x16xf32>
    %cst_127 = arith.constant 0.000000e+00 : f32
    %575 = vector.broadcast %cst_127 : f32 to vector<4x16xf32>
    %576 = arith.maximumf %574, %575 : vector<4x16xf32>
    %577 = vector.broadcast %7 : vector<1x16xf32> to vector<4x16xf32>
    %578 = arith.mulf %576, %577 : vector<4x16xf32>
    %cst_128 = arith.constant dense<0.000000e+00> : vector<4xf32>
    %579 = vector.multi_reduction <add>, %578, %cst_128 [1] : vector<4x16xf32> to vector<4xf32>
    %580 = vector.shape_cast %579 : vector<4xf32> to vector<4x1xf32>
    %581 = vector.broadcast %9 : vector<1x1xf32> to vector<4x1xf32>
    %582 = arith.addf %580, %581 : vector<4x1xf32>
    %583 = math.tanh %582 : vector<4x1xf32>
    %584 = vector.broadcast %8 : vector<1x16xf32> to vector<4x16xf32>
    %585 = arith.mulf %576, %584 : vector<4x16xf32>
    %cst_129 = arith.constant dense<0.000000e+00> : vector<4xf32>
    %586 = vector.multi_reduction <add>, %585, %cst_129 [1] : vector<4x16xf32> to vector<4xf32>
    %587 = vector.shape_cast %586 : vector<4xf32> to vector<4x1xf32>
    %588 = vector.broadcast %10 : vector<1x1xf32> to vector<4x1xf32>
    %589 = arith.addf %587, %588 : vector<4x1xf32>
    %590 = math.tanh %589 : vector<4x1xf32>
    %591 = vector.extract_strided_slice %17 {offsets = [40, 0], sizes = [4, 32], strides = [1, 1]} : vector<64x32xf32> to vector<4x32xf32>
    %592 = vector.broadcast %526 : vector<4x1xf32> to vector<4x32xf32>
    %593 = vector.broadcast %4 : vector<1x32xf32> to vector<4x32xf32>
    %594 = arith.mulf %592, %593 : vector<4x32xf32>
    %595 = vector.broadcast %533 : vector<4x1xf32> to vector<4x32xf32>
    %596 = vector.broadcast %5 : vector<1x32xf32> to vector<4x32xf32>
    %597 = arith.mulf %595, %596 : vector<4x32xf32>
    %598 = arith.addf %594, %597 : vector<4x32xf32>
    %599 = arith.addf %598, %591 : vector<4x32xf32>
    %cst_130 = arith.constant 0.000000e+00 : f32
    %600 = vector.broadcast %cst_130 : f32 to vector<4x32xf32>
    %601 = arith.maximumf %599, %600 : vector<4x32xf32>
    %cst_131 = arith.constant dense<0.000000e+00> : vector<4x32xf32>
    %602 = tpu.matmul %601, %11, %cst_131 {dimension_numbers = #tpu.dot_dimension_numbers<[1], [0], [0], [1], [0, 0, 1, 1], [], []>} : vector<4x32xf32>, vector<32x32xf32>, vector<4x32xf32> -> vector<4x32xf32>
    %603 = vector.broadcast %3 : vector<1x32xf32> to vector<4x32xf32>
    %604 = arith.addf %602, %603 : vector<4x32xf32>
    %cst_132 = arith.constant 0.000000e+00 : f32
    %605 = vector.broadcast %cst_132 : f32 to vector<4x32xf32>
    %606 = arith.maximumf %604, %605 : vector<4x32xf32>
    %607 = tpu.concatenate %606, %514 in 1 : vector<4x32xf32>, vector<4x32xf32> -> vector<4x64xf32>
    %cst_133 = arith.constant dense<0.000000e+00> : vector<4x128xf32>
    %608 = tpu.matmul %607, %0, %cst_133 {dimension_numbers = #tpu.dot_dimension_numbers<[1], [0], [0], [1], [0, 0, 1, 1], [], []>} : vector<4x64xf32>, vector<64x128xf32>, vector<4x128xf32> -> vector<4x128xf32>
    %609 = vector.broadcast %1 : vector<1x128xf32> to vector<4x128xf32>
    %610 = arith.addf %608, %609 : vector<4x128xf32>
    %611 = vector.extract_strided_slice %610 {offsets = [0, 0], sizes = [4, 64], strides = [1, 1]} : vector<4x128xf32> to vector<4x64xf32>
    %cst_134 = arith.constant 5.000000e-01 : f32
    %612 = vector.broadcast %cst_134 : f32 to vector<4x64xf32>
    %613 = arith.mulf %612, %611 : vector<4x64xf32>
    %614 = math.tanh %613 : vector<4x64xf32>
    %cst_135 = arith.constant 5.000000e-01 : f32
    %615 = vector.broadcast %cst_135 : f32 to vector<4x64xf32>
    %616 = arith.mulf %615, %614 : vector<4x64xf32>
    %cst_136 = arith.constant 5.000000e-01 : f32
    %617 = vector.broadcast %cst_136 : f32 to vector<4x64xf32>
    %618 = arith.addf %616, %617 : vector<4x64xf32>
    %619 = vector.extract_strided_slice %618 {offsets = [0, 0], sizes = [4, 32], strides = [1, 1]} : vector<4x64xf32> to vector<4x32xf32>
    %620 = vector.extract_strided_slice %618 {offsets = [0, 32], sizes = [4, 32], strides = [1, 1]} : vector<4x64xf32> to vector<4x32xf32>
    %621 = vector.extract_strided_slice %610 {offsets = [0, 64], sizes = [4, 32], strides = [1, 1]} : vector<4x128xf32> to vector<4x32xf32>
    %622 = vector.extract_strided_slice %610 {offsets = [0, 96], sizes = [4, 32], strides = [1, 1]} : vector<4x128xf32> to vector<4x32xf32>
    %623 = arith.mulf %619, %622 : vector<4x32xf32>
    %624 = arith.addf %621, %623 : vector<4x32xf32>
    %625 = math.tanh %624 : vector<4x32xf32>
    %626 = arith.subf %514, %625 : vector<4x32xf32>
    %627 = arith.mulf %620, %626 : vector<4x32xf32>
    %628 = arith.addf %625, %627 : vector<4x32xf32>
    %cst_137 = arith.constant dense<0.000000e+00> : vector<4x16xf32>
    %629 = tpu.matmul %628, %12, %cst_137 {dimension_numbers = #tpu.dot_dimension_numbers<[1], [0], [0], [1], [0, 0, 1, 1], [], []>} : vector<4x32xf32>, vector<32x16xf32>, vector<4x16xf32> -> vector<4x16xf32>
    %630 = vector.broadcast %6 : vector<1x16xf32> to vector<4x16xf32>
    %631 = arith.addf %629, %630 : vector<4x16xf32>
    %cst_138 = arith.constant 0.000000e+00 : f32
    %632 = vector.broadcast %cst_138 : f32 to vector<4x16xf32>
    %633 = arith.maximumf %631, %632 : vector<4x16xf32>
    %634 = vector.broadcast %7 : vector<1x16xf32> to vector<4x16xf32>
    %635 = arith.mulf %633, %634 : vector<4x16xf32>
    %cst_139 = arith.constant dense<0.000000e+00> : vector<4xf32>
    %636 = vector.multi_reduction <add>, %635, %cst_139 [1] : vector<4x16xf32> to vector<4xf32>
    %637 = vector.shape_cast %636 : vector<4xf32> to vector<4x1xf32>
    %638 = vector.broadcast %9 : vector<1x1xf32> to vector<4x1xf32>
    %639 = arith.addf %637, %638 : vector<4x1xf32>
    %640 = math.tanh %639 : vector<4x1xf32>
    %641 = vector.broadcast %8 : vector<1x16xf32> to vector<4x16xf32>
    %642 = arith.mulf %633, %641 : vector<4x16xf32>
    %cst_140 = arith.constant dense<0.000000e+00> : vector<4xf32>
    %643 = vector.multi_reduction <add>, %642, %cst_140 [1] : vector<4x16xf32> to vector<4xf32>
    %644 = vector.shape_cast %643 : vector<4xf32> to vector<4x1xf32>
    %645 = vector.broadcast %10 : vector<1x1xf32> to vector<4x1xf32>
    %646 = arith.addf %644, %645 : vector<4x1xf32>
    %647 = math.tanh %646 : vector<4x1xf32>
    %648 = vector.extract_strided_slice %17 {offsets = [44, 0], sizes = [4, 32], strides = [1, 1]} : vector<64x32xf32> to vector<4x32xf32>
    %649 = vector.broadcast %583 : vector<4x1xf32> to vector<4x32xf32>
    %650 = vector.broadcast %4 : vector<1x32xf32> to vector<4x32xf32>
    %651 = arith.mulf %649, %650 : vector<4x32xf32>
    %652 = vector.broadcast %590 : vector<4x1xf32> to vector<4x32xf32>
    %653 = vector.broadcast %5 : vector<1x32xf32> to vector<4x32xf32>
    %654 = arith.mulf %652, %653 : vector<4x32xf32>
    %655 = arith.addf %651, %654 : vector<4x32xf32>
    %656 = arith.addf %655, %648 : vector<4x32xf32>
    %cst_141 = arith.constant 0.000000e+00 : f32
    %657 = vector.broadcast %cst_141 : f32 to vector<4x32xf32>
    %658 = arith.maximumf %656, %657 : vector<4x32xf32>
    %cst_142 = arith.constant dense<0.000000e+00> : vector<4x32xf32>
    %659 = tpu.matmul %658, %11, %cst_142 {dimension_numbers = #tpu.dot_dimension_numbers<[1], [0], [0], [1], [0, 0, 1, 1], [], []>} : vector<4x32xf32>, vector<32x32xf32>, vector<4x32xf32> -> vector<4x32xf32>
    %660 = vector.broadcast %3 : vector<1x32xf32> to vector<4x32xf32>
    %661 = arith.addf %659, %660 : vector<4x32xf32>
    %cst_143 = arith.constant 0.000000e+00 : f32
    %662 = vector.broadcast %cst_143 : f32 to vector<4x32xf32>
    %663 = arith.maximumf %661, %662 : vector<4x32xf32>
    %664 = tpu.concatenate %663, %571 in 1 : vector<4x32xf32>, vector<4x32xf32> -> vector<4x64xf32>
    %cst_144 = arith.constant dense<0.000000e+00> : vector<4x128xf32>
    %665 = tpu.matmul %664, %0, %cst_144 {dimension_numbers = #tpu.dot_dimension_numbers<[1], [0], [0], [1], [0, 0, 1, 1], [], []>} : vector<4x64xf32>, vector<64x128xf32>, vector<4x128xf32> -> vector<4x128xf32>
    %666 = vector.broadcast %1 : vector<1x128xf32> to vector<4x128xf32>
    %667 = arith.addf %665, %666 : vector<4x128xf32>
    %668 = vector.extract_strided_slice %667 {offsets = [0, 0], sizes = [4, 64], strides = [1, 1]} : vector<4x128xf32> to vector<4x64xf32>
    %cst_145 = arith.constant 5.000000e-01 : f32
    %669 = vector.broadcast %cst_145 : f32 to vector<4x64xf32>
    %670 = arith.mulf %669, %668 : vector<4x64xf32>
    %671 = math.tanh %670 : vector<4x64xf32>
    %cst_146 = arith.constant 5.000000e-01 : f32
    %672 = vector.broadcast %cst_146 : f32 to vector<4x64xf32>
    %673 = arith.mulf %672, %671 : vector<4x64xf32>
    %cst_147 = arith.constant 5.000000e-01 : f32
    %674 = vector.broadcast %cst_147 : f32 to vector<4x64xf32>
    %675 = arith.addf %673, %674 : vector<4x64xf32>
    %676 = vector.extract_strided_slice %675 {offsets = [0, 0], sizes = [4, 32], strides = [1, 1]} : vector<4x64xf32> to vector<4x32xf32>
    %677 = vector.extract_strided_slice %675 {offsets = [0, 32], sizes = [4, 32], strides = [1, 1]} : vector<4x64xf32> to vector<4x32xf32>
    %678 = vector.extract_strided_slice %667 {offsets = [0, 64], sizes = [4, 32], strides = [1, 1]} : vector<4x128xf32> to vector<4x32xf32>
    %679 = vector.extract_strided_slice %667 {offsets = [0, 96], sizes = [4, 32], strides = [1, 1]} : vector<4x128xf32> to vector<4x32xf32>
    %680 = arith.mulf %676, %679 : vector<4x32xf32>
    %681 = arith.addf %678, %680 : vector<4x32xf32>
    %682 = math.tanh %681 : vector<4x32xf32>
    %683 = arith.subf %571, %682 : vector<4x32xf32>
    %684 = arith.mulf %677, %683 : vector<4x32xf32>
    %685 = arith.addf %682, %684 : vector<4x32xf32>
    %cst_148 = arith.constant dense<0.000000e+00> : vector<4x16xf32>
    %686 = tpu.matmul %685, %12, %cst_148 {dimension_numbers = #tpu.dot_dimension_numbers<[1], [0], [0], [1], [0, 0, 1, 1], [], []>} : vector<4x32xf32>, vector<32x16xf32>, vector<4x16xf32> -> vector<4x16xf32>
    %687 = vector.broadcast %6 : vector<1x16xf32> to vector<4x16xf32>
    %688 = arith.addf %686, %687 : vector<4x16xf32>
    %cst_149 = arith.constant 0.000000e+00 : f32
    %689 = vector.broadcast %cst_149 : f32 to vector<4x16xf32>
    %690 = arith.maximumf %688, %689 : vector<4x16xf32>
    %691 = vector.broadcast %7 : vector<1x16xf32> to vector<4x16xf32>
    %692 = arith.mulf %690, %691 : vector<4x16xf32>
    %cst_150 = arith.constant dense<0.000000e+00> : vector<4xf32>
    %693 = vector.multi_reduction <add>, %692, %cst_150 [1] : vector<4x16xf32> to vector<4xf32>
    %694 = vector.shape_cast %693 : vector<4xf32> to vector<4x1xf32>
    %695 = vector.broadcast %9 : vector<1x1xf32> to vector<4x1xf32>
    %696 = arith.addf %694, %695 : vector<4x1xf32>
    %697 = math.tanh %696 : vector<4x1xf32>
    %698 = vector.broadcast %8 : vector<1x16xf32> to vector<4x16xf32>
    %699 = arith.mulf %690, %698 : vector<4x16xf32>
    %cst_151 = arith.constant dense<0.000000e+00> : vector<4xf32>
    %700 = vector.multi_reduction <add>, %699, %cst_151 [1] : vector<4x16xf32> to vector<4xf32>
    %701 = vector.shape_cast %700 : vector<4xf32> to vector<4x1xf32>
    %702 = vector.broadcast %10 : vector<1x1xf32> to vector<4x1xf32>
    %703 = arith.addf %701, %702 : vector<4x1xf32>
    %704 = math.tanh %703 : vector<4x1xf32>
    %705 = vector.extract_strided_slice %17 {offsets = [48, 0], sizes = [4, 32], strides = [1, 1]} : vector<64x32xf32> to vector<4x32xf32>
    %706 = vector.broadcast %640 : vector<4x1xf32> to vector<4x32xf32>
    %707 = vector.broadcast %4 : vector<1x32xf32> to vector<4x32xf32>
    %708 = arith.mulf %706, %707 : vector<4x32xf32>
    %709 = vector.broadcast %647 : vector<4x1xf32> to vector<4x32xf32>
    %710 = vector.broadcast %5 : vector<1x32xf32> to vector<4x32xf32>
    %711 = arith.mulf %709, %710 : vector<4x32xf32>
    %712 = arith.addf %708, %711 : vector<4x32xf32>
    %713 = arith.addf %712, %705 : vector<4x32xf32>
    %cst_152 = arith.constant 0.000000e+00 : f32
    %714 = vector.broadcast %cst_152 : f32 to vector<4x32xf32>
    %715 = arith.maximumf %713, %714 : vector<4x32xf32>
    %cst_153 = arith.constant dense<0.000000e+00> : vector<4x32xf32>
    %716 = tpu.matmul %715, %11, %cst_153 {dimension_numbers = #tpu.dot_dimension_numbers<[1], [0], [0], [1], [0, 0, 1, 1], [], []>} : vector<4x32xf32>, vector<32x32xf32>, vector<4x32xf32> -> vector<4x32xf32>
    %717 = vector.broadcast %3 : vector<1x32xf32> to vector<4x32xf32>
    %718 = arith.addf %716, %717 : vector<4x32xf32>
    %cst_154 = arith.constant 0.000000e+00 : f32
    %719 = vector.broadcast %cst_154 : f32 to vector<4x32xf32>
    %720 = arith.maximumf %718, %719 : vector<4x32xf32>
    %721 = tpu.concatenate %720, %628 in 1 : vector<4x32xf32>, vector<4x32xf32> -> vector<4x64xf32>
    %cst_155 = arith.constant dense<0.000000e+00> : vector<4x128xf32>
    %722 = tpu.matmul %721, %0, %cst_155 {dimension_numbers = #tpu.dot_dimension_numbers<[1], [0], [0], [1], [0, 0, 1, 1], [], []>} : vector<4x64xf32>, vector<64x128xf32>, vector<4x128xf32> -> vector<4x128xf32>
    %723 = vector.broadcast %1 : vector<1x128xf32> to vector<4x128xf32>
    %724 = arith.addf %722, %723 : vector<4x128xf32>
    %725 = vector.extract_strided_slice %724 {offsets = [0, 0], sizes = [4, 64], strides = [1, 1]} : vector<4x128xf32> to vector<4x64xf32>
    %cst_156 = arith.constant 5.000000e-01 : f32
    %726 = vector.broadcast %cst_156 : f32 to vector<4x64xf32>
    %727 = arith.mulf %726, %725 : vector<4x64xf32>
    %728 = math.tanh %727 : vector<4x64xf32>
    %cst_157 = arith.constant 5.000000e-01 : f32
    %729 = vector.broadcast %cst_157 : f32 to vector<4x64xf32>
    %730 = arith.mulf %729, %728 : vector<4x64xf32>
    %cst_158 = arith.constant 5.000000e-01 : f32
    %731 = vector.broadcast %cst_158 : f32 to vector<4x64xf32>
    %732 = arith.addf %730, %731 : vector<4x64xf32>
    %733 = vector.extract_strided_slice %732 {offsets = [0, 0], sizes = [4, 32], strides = [1, 1]} : vector<4x64xf32> to vector<4x32xf32>
    %734 = vector.extract_strided_slice %732 {offsets = [0, 32], sizes = [4, 32], strides = [1, 1]} : vector<4x64xf32> to vector<4x32xf32>
    %735 = vector.extract_strided_slice %724 {offsets = [0, 64], sizes = [4, 32], strides = [1, 1]} : vector<4x128xf32> to vector<4x32xf32>
    %736 = vector.extract_strided_slice %724 {offsets = [0, 96], sizes = [4, 32], strides = [1, 1]} : vector<4x128xf32> to vector<4x32xf32>
    %737 = arith.mulf %733, %736 : vector<4x32xf32>
    %738 = arith.addf %735, %737 : vector<4x32xf32>
    %739 = math.tanh %738 : vector<4x32xf32>
    %740 = arith.subf %628, %739 : vector<4x32xf32>
    %741 = arith.mulf %734, %740 : vector<4x32xf32>
    %742 = arith.addf %739, %741 : vector<4x32xf32>
    %cst_159 = arith.constant dense<0.000000e+00> : vector<4x16xf32>
    %743 = tpu.matmul %742, %12, %cst_159 {dimension_numbers = #tpu.dot_dimension_numbers<[1], [0], [0], [1], [0, 0, 1, 1], [], []>} : vector<4x32xf32>, vector<32x16xf32>, vector<4x16xf32> -> vector<4x16xf32>
    %744 = vector.broadcast %6 : vector<1x16xf32> to vector<4x16xf32>
    %745 = arith.addf %743, %744 : vector<4x16xf32>
    %cst_160 = arith.constant 0.000000e+00 : f32
    %746 = vector.broadcast %cst_160 : f32 to vector<4x16xf32>
    %747 = arith.maximumf %745, %746 : vector<4x16xf32>
    %748 = vector.broadcast %7 : vector<1x16xf32> to vector<4x16xf32>
    %749 = arith.mulf %747, %748 : vector<4x16xf32>
    %cst_161 = arith.constant dense<0.000000e+00> : vector<4xf32>
    %750 = vector.multi_reduction <add>, %749, %cst_161 [1] : vector<4x16xf32> to vector<4xf32>
    %751 = vector.shape_cast %750 : vector<4xf32> to vector<4x1xf32>
    %752 = vector.broadcast %9 : vector<1x1xf32> to vector<4x1xf32>
    %753 = arith.addf %751, %752 : vector<4x1xf32>
    %754 = math.tanh %753 : vector<4x1xf32>
    %755 = vector.broadcast %8 : vector<1x16xf32> to vector<4x16xf32>
    %756 = arith.mulf %747, %755 : vector<4x16xf32>
    %cst_162 = arith.constant dense<0.000000e+00> : vector<4xf32>
    %757 = vector.multi_reduction <add>, %756, %cst_162 [1] : vector<4x16xf32> to vector<4xf32>
    %758 = vector.shape_cast %757 : vector<4xf32> to vector<4x1xf32>
    %759 = vector.broadcast %10 : vector<1x1xf32> to vector<4x1xf32>
    %760 = arith.addf %758, %759 : vector<4x1xf32>
    %761 = math.tanh %760 : vector<4x1xf32>
    %762 = vector.extract_strided_slice %17 {offsets = [52, 0], sizes = [4, 32], strides = [1, 1]} : vector<64x32xf32> to vector<4x32xf32>
    %763 = vector.broadcast %697 : vector<4x1xf32> to vector<4x32xf32>
    %764 = vector.broadcast %4 : vector<1x32xf32> to vector<4x32xf32>
    %765 = arith.mulf %763, %764 : vector<4x32xf32>
    %766 = vector.broadcast %704 : vector<4x1xf32> to vector<4x32xf32>
    %767 = vector.broadcast %5 : vector<1x32xf32> to vector<4x32xf32>
    %768 = arith.mulf %766, %767 : vector<4x32xf32>
    %769 = arith.addf %765, %768 : vector<4x32xf32>
    %770 = arith.addf %769, %762 : vector<4x32xf32>
    %cst_163 = arith.constant 0.000000e+00 : f32
    %771 = vector.broadcast %cst_163 : f32 to vector<4x32xf32>
    %772 = arith.maximumf %770, %771 : vector<4x32xf32>
    %cst_164 = arith.constant dense<0.000000e+00> : vector<4x32xf32>
    %773 = tpu.matmul %772, %11, %cst_164 {dimension_numbers = #tpu.dot_dimension_numbers<[1], [0], [0], [1], [0, 0, 1, 1], [], []>} : vector<4x32xf32>, vector<32x32xf32>, vector<4x32xf32> -> vector<4x32xf32>
    %774 = vector.broadcast %3 : vector<1x32xf32> to vector<4x32xf32>
    %775 = arith.addf %773, %774 : vector<4x32xf32>
    %cst_165 = arith.constant 0.000000e+00 : f32
    %776 = vector.broadcast %cst_165 : f32 to vector<4x32xf32>
    %777 = arith.maximumf %775, %776 : vector<4x32xf32>
    %778 = tpu.concatenate %777, %685 in 1 : vector<4x32xf32>, vector<4x32xf32> -> vector<4x64xf32>
    %cst_166 = arith.constant dense<0.000000e+00> : vector<4x128xf32>
    %779 = tpu.matmul %778, %0, %cst_166 {dimension_numbers = #tpu.dot_dimension_numbers<[1], [0], [0], [1], [0, 0, 1, 1], [], []>} : vector<4x64xf32>, vector<64x128xf32>, vector<4x128xf32> -> vector<4x128xf32>
    %780 = vector.broadcast %1 : vector<1x128xf32> to vector<4x128xf32>
    %781 = arith.addf %779, %780 : vector<4x128xf32>
    %782 = vector.extract_strided_slice %781 {offsets = [0, 0], sizes = [4, 64], strides = [1, 1]} : vector<4x128xf32> to vector<4x64xf32>
    %cst_167 = arith.constant 5.000000e-01 : f32
    %783 = vector.broadcast %cst_167 : f32 to vector<4x64xf32>
    %784 = arith.mulf %783, %782 : vector<4x64xf32>
    %785 = math.tanh %784 : vector<4x64xf32>
    %cst_168 = arith.constant 5.000000e-01 : f32
    %786 = vector.broadcast %cst_168 : f32 to vector<4x64xf32>
    %787 = arith.mulf %786, %785 : vector<4x64xf32>
    %cst_169 = arith.constant 5.000000e-01 : f32
    %788 = vector.broadcast %cst_169 : f32 to vector<4x64xf32>
    %789 = arith.addf %787, %788 : vector<4x64xf32>
    %790 = vector.extract_strided_slice %789 {offsets = [0, 0], sizes = [4, 32], strides = [1, 1]} : vector<4x64xf32> to vector<4x32xf32>
    %791 = vector.extract_strided_slice %789 {offsets = [0, 32], sizes = [4, 32], strides = [1, 1]} : vector<4x64xf32> to vector<4x32xf32>
    %792 = vector.extract_strided_slice %781 {offsets = [0, 64], sizes = [4, 32], strides = [1, 1]} : vector<4x128xf32> to vector<4x32xf32>
    %793 = vector.extract_strided_slice %781 {offsets = [0, 96], sizes = [4, 32], strides = [1, 1]} : vector<4x128xf32> to vector<4x32xf32>
    %794 = arith.mulf %790, %793 : vector<4x32xf32>
    %795 = arith.addf %792, %794 : vector<4x32xf32>
    %796 = math.tanh %795 : vector<4x32xf32>
    %797 = arith.subf %685, %796 : vector<4x32xf32>
    %798 = arith.mulf %791, %797 : vector<4x32xf32>
    %799 = arith.addf %796, %798 : vector<4x32xf32>
    %cst_170 = arith.constant dense<0.000000e+00> : vector<4x16xf32>
    %800 = tpu.matmul %799, %12, %cst_170 {dimension_numbers = #tpu.dot_dimension_numbers<[1], [0], [0], [1], [0, 0, 1, 1], [], []>} : vector<4x32xf32>, vector<32x16xf32>, vector<4x16xf32> -> vector<4x16xf32>
    %801 = vector.broadcast %6 : vector<1x16xf32> to vector<4x16xf32>
    %802 = arith.addf %800, %801 : vector<4x16xf32>
    %cst_171 = arith.constant 0.000000e+00 : f32
    %803 = vector.broadcast %cst_171 : f32 to vector<4x16xf32>
    %804 = arith.maximumf %802, %803 : vector<4x16xf32>
    %805 = vector.broadcast %7 : vector<1x16xf32> to vector<4x16xf32>
    %806 = arith.mulf %804, %805 : vector<4x16xf32>
    %cst_172 = arith.constant dense<0.000000e+00> : vector<4xf32>
    %807 = vector.multi_reduction <add>, %806, %cst_172 [1] : vector<4x16xf32> to vector<4xf32>
    %808 = vector.shape_cast %807 : vector<4xf32> to vector<4x1xf32>
    %809 = vector.broadcast %9 : vector<1x1xf32> to vector<4x1xf32>
    %810 = arith.addf %808, %809 : vector<4x1xf32>
    %811 = math.tanh %810 : vector<4x1xf32>
    %812 = vector.broadcast %8 : vector<1x16xf32> to vector<4x16xf32>
    %813 = arith.mulf %804, %812 : vector<4x16xf32>
    %cst_173 = arith.constant dense<0.000000e+00> : vector<4xf32>
    %814 = vector.multi_reduction <add>, %813, %cst_173 [1] : vector<4x16xf32> to vector<4xf32>
    %815 = vector.shape_cast %814 : vector<4xf32> to vector<4x1xf32>
    %816 = vector.broadcast %10 : vector<1x1xf32> to vector<4x1xf32>
    %817 = arith.addf %815, %816 : vector<4x1xf32>
    %818 = math.tanh %817 : vector<4x1xf32>
    %819 = vector.extract_strided_slice %17 {offsets = [56, 0], sizes = [4, 32], strides = [1, 1]} : vector<64x32xf32> to vector<4x32xf32>
    %820 = vector.broadcast %754 : vector<4x1xf32> to vector<4x32xf32>
    %821 = vector.broadcast %4 : vector<1x32xf32> to vector<4x32xf32>
    %822 = arith.mulf %820, %821 : vector<4x32xf32>
    %823 = vector.broadcast %761 : vector<4x1xf32> to vector<4x32xf32>
    %824 = vector.broadcast %5 : vector<1x32xf32> to vector<4x32xf32>
    %825 = arith.mulf %823, %824 : vector<4x32xf32>
    %826 = arith.addf %822, %825 : vector<4x32xf32>
    %827 = arith.addf %826, %819 : vector<4x32xf32>
    %cst_174 = arith.constant 0.000000e+00 : f32
    %828 = vector.broadcast %cst_174 : f32 to vector<4x32xf32>
    %829 = arith.maximumf %827, %828 : vector<4x32xf32>
    %cst_175 = arith.constant dense<0.000000e+00> : vector<4x32xf32>
    %830 = tpu.matmul %829, %11, %cst_175 {dimension_numbers = #tpu.dot_dimension_numbers<[1], [0], [0], [1], [0, 0, 1, 1], [], []>} : vector<4x32xf32>, vector<32x32xf32>, vector<4x32xf32> -> vector<4x32xf32>
    %831 = vector.broadcast %3 : vector<1x32xf32> to vector<4x32xf32>
    %832 = arith.addf %830, %831 : vector<4x32xf32>
    %cst_176 = arith.constant 0.000000e+00 : f32
    %833 = vector.broadcast %cst_176 : f32 to vector<4x32xf32>
    %834 = arith.maximumf %832, %833 : vector<4x32xf32>
    %835 = tpu.concatenate %834, %742 in 1 : vector<4x32xf32>, vector<4x32xf32> -> vector<4x64xf32>
    %cst_177 = arith.constant dense<0.000000e+00> : vector<4x128xf32>
    %836 = tpu.matmul %835, %0, %cst_177 {dimension_numbers = #tpu.dot_dimension_numbers<[1], [0], [0], [1], [0, 0, 1, 1], [], []>} : vector<4x64xf32>, vector<64x128xf32>, vector<4x128xf32> -> vector<4x128xf32>
    %837 = vector.broadcast %1 : vector<1x128xf32> to vector<4x128xf32>
    %838 = arith.addf %836, %837 : vector<4x128xf32>
    %839 = vector.extract_strided_slice %838 {offsets = [0, 0], sizes = [4, 64], strides = [1, 1]} : vector<4x128xf32> to vector<4x64xf32>
    %cst_178 = arith.constant 5.000000e-01 : f32
    %840 = vector.broadcast %cst_178 : f32 to vector<4x64xf32>
    %841 = arith.mulf %840, %839 : vector<4x64xf32>
    %842 = math.tanh %841 : vector<4x64xf32>
    %cst_179 = arith.constant 5.000000e-01 : f32
    %843 = vector.broadcast %cst_179 : f32 to vector<4x64xf32>
    %844 = arith.mulf %843, %842 : vector<4x64xf32>
    %cst_180 = arith.constant 5.000000e-01 : f32
    %845 = vector.broadcast %cst_180 : f32 to vector<4x64xf32>
    %846 = arith.addf %844, %845 : vector<4x64xf32>
    %847 = vector.extract_strided_slice %846 {offsets = [0, 0], sizes = [4, 32], strides = [1, 1]} : vector<4x64xf32> to vector<4x32xf32>
    %848 = vector.extract_strided_slice %846 {offsets = [0, 32], sizes = [4, 32], strides = [1, 1]} : vector<4x64xf32> to vector<4x32xf32>
    %849 = vector.extract_strided_slice %838 {offsets = [0, 64], sizes = [4, 32], strides = [1, 1]} : vector<4x128xf32> to vector<4x32xf32>
    %850 = vector.extract_strided_slice %838 {offsets = [0, 96], sizes = [4, 32], strides = [1, 1]} : vector<4x128xf32> to vector<4x32xf32>
    %851 = arith.mulf %847, %850 : vector<4x32xf32>
    %852 = arith.addf %849, %851 : vector<4x32xf32>
    %853 = math.tanh %852 : vector<4x32xf32>
    %854 = arith.subf %742, %853 : vector<4x32xf32>
    %855 = arith.mulf %848, %854 : vector<4x32xf32>
    %856 = arith.addf %853, %855 : vector<4x32xf32>
    %cst_181 = arith.constant dense<0.000000e+00> : vector<4x16xf32>
    %857 = tpu.matmul %856, %12, %cst_181 {dimension_numbers = #tpu.dot_dimension_numbers<[1], [0], [0], [1], [0, 0, 1, 1], [], []>} : vector<4x32xf32>, vector<32x16xf32>, vector<4x16xf32> -> vector<4x16xf32>
    %858 = vector.broadcast %6 : vector<1x16xf32> to vector<4x16xf32>
    %859 = arith.addf %857, %858 : vector<4x16xf32>
    %cst_182 = arith.constant 0.000000e+00 : f32
    %860 = vector.broadcast %cst_182 : f32 to vector<4x16xf32>
    %861 = arith.maximumf %859, %860 : vector<4x16xf32>
    %862 = vector.broadcast %7 : vector<1x16xf32> to vector<4x16xf32>
    %863 = arith.mulf %861, %862 : vector<4x16xf32>
    %cst_183 = arith.constant dense<0.000000e+00> : vector<4xf32>
    %864 = vector.multi_reduction <add>, %863, %cst_183 [1] : vector<4x16xf32> to vector<4xf32>
    %865 = vector.shape_cast %864 : vector<4xf32> to vector<4x1xf32>
    %866 = vector.broadcast %9 : vector<1x1xf32> to vector<4x1xf32>
    %867 = arith.addf %865, %866 : vector<4x1xf32>
    %868 = math.tanh %867 : vector<4x1xf32>
    %869 = vector.broadcast %8 : vector<1x16xf32> to vector<4x16xf32>
    %870 = arith.mulf %861, %869 : vector<4x16xf32>
    %cst_184 = arith.constant dense<0.000000e+00> : vector<4xf32>
    %871 = vector.multi_reduction <add>, %870, %cst_184 [1] : vector<4x16xf32> to vector<4xf32>
    %872 = vector.shape_cast %871 : vector<4xf32> to vector<4x1xf32>
    %873 = vector.broadcast %10 : vector<1x1xf32> to vector<4x1xf32>
    %874 = arith.addf %872, %873 : vector<4x1xf32>
    %875 = math.tanh %874 : vector<4x1xf32>
    %876 = vector.extract_strided_slice %17 {offsets = [60, 0], sizes = [4, 32], strides = [1, 1]} : vector<64x32xf32> to vector<4x32xf32>
    %877 = vector.broadcast %811 : vector<4x1xf32> to vector<4x32xf32>
    %878 = vector.broadcast %4 : vector<1x32xf32> to vector<4x32xf32>
    %879 = arith.mulf %877, %878 : vector<4x32xf32>
    %880 = vector.broadcast %818 : vector<4x1xf32> to vector<4x32xf32>
    %881 = vector.broadcast %5 : vector<1x32xf32> to vector<4x32xf32>
    %882 = arith.mulf %880, %881 : vector<4x32xf32>
    %883 = arith.addf %879, %882 : vector<4x32xf32>
    %884 = arith.addf %883, %876 : vector<4x32xf32>
    %cst_185 = arith.constant 0.000000e+00 : f32
    %885 = vector.broadcast %cst_185 : f32 to vector<4x32xf32>
    %886 = arith.maximumf %884, %885 : vector<4x32xf32>
    %cst_186 = arith.constant dense<0.000000e+00> : vector<4x32xf32>
    %887 = tpu.matmul %886, %11, %cst_186 {dimension_numbers = #tpu.dot_dimension_numbers<[1], [0], [0], [1], [0, 0, 1, 1], [], []>} : vector<4x32xf32>, vector<32x32xf32>, vector<4x32xf32> -> vector<4x32xf32>
    %888 = vector.broadcast %3 : vector<1x32xf32> to vector<4x32xf32>
    %889 = arith.addf %887, %888 : vector<4x32xf32>
    %cst_187 = arith.constant 0.000000e+00 : f32
    %890 = vector.broadcast %cst_187 : f32 to vector<4x32xf32>
    %891 = arith.maximumf %889, %890 : vector<4x32xf32>
    %892 = tpu.concatenate %891, %799 in 1 : vector<4x32xf32>, vector<4x32xf32> -> vector<4x64xf32>
    %cst_188 = arith.constant dense<0.000000e+00> : vector<4x128xf32>
    %893 = tpu.matmul %892, %0, %cst_188 {dimension_numbers = #tpu.dot_dimension_numbers<[1], [0], [0], [1], [0, 0, 1, 1], [], []>} : vector<4x64xf32>, vector<64x128xf32>, vector<4x128xf32> -> vector<4x128xf32>
    %894 = vector.broadcast %1 : vector<1x128xf32> to vector<4x128xf32>
    %895 = arith.addf %893, %894 : vector<4x128xf32>
    %896 = vector.extract_strided_slice %895 {offsets = [0, 0], sizes = [4, 64], strides = [1, 1]} : vector<4x128xf32> to vector<4x64xf32>
    %cst_189 = arith.constant 5.000000e-01 : f32
    %897 = vector.broadcast %cst_189 : f32 to vector<4x64xf32>
    %898 = arith.mulf %897, %896 : vector<4x64xf32>
    %899 = math.tanh %898 : vector<4x64xf32>
    %cst_190 = arith.constant 5.000000e-01 : f32
    %900 = vector.broadcast %cst_190 : f32 to vector<4x64xf32>
    %901 = arith.mulf %900, %899 : vector<4x64xf32>
    %cst_191 = arith.constant 5.000000e-01 : f32
    %902 = vector.broadcast %cst_191 : f32 to vector<4x64xf32>
    %903 = arith.addf %901, %902 : vector<4x64xf32>
    %904 = vector.extract_strided_slice %903 {offsets = [0, 0], sizes = [4, 32], strides = [1, 1]} : vector<4x64xf32> to vector<4x32xf32>
    %905 = vector.extract_strided_slice %903 {offsets = [0, 32], sizes = [4, 32], strides = [1, 1]} : vector<4x64xf32> to vector<4x32xf32>
    %906 = vector.extract_strided_slice %895 {offsets = [0, 64], sizes = [4, 32], strides = [1, 1]} : vector<4x128xf32> to vector<4x32xf32>
    %907 = vector.extract_strided_slice %895 {offsets = [0, 96], sizes = [4, 32], strides = [1, 1]} : vector<4x128xf32> to vector<4x32xf32>
    %908 = arith.mulf %904, %907 : vector<4x32xf32>
    %909 = arith.addf %906, %908 : vector<4x32xf32>
    %910 = math.tanh %909 : vector<4x32xf32>
    %911 = arith.subf %799, %910 : vector<4x32xf32>
    %912 = arith.mulf %905, %911 : vector<4x32xf32>
    %913 = arith.addf %910, %912 : vector<4x32xf32>
    %cst_192 = arith.constant dense<0.000000e+00> : vector<4x16xf32>
    %914 = tpu.matmul %913, %12, %cst_192 {dimension_numbers = #tpu.dot_dimension_numbers<[1], [0], [0], [1], [0, 0, 1, 1], [], []>} : vector<4x32xf32>, vector<32x16xf32>, vector<4x16xf32> -> vector<4x16xf32>
    %915 = vector.broadcast %6 : vector<1x16xf32> to vector<4x16xf32>
    %916 = arith.addf %914, %915 : vector<4x16xf32>
    %cst_193 = arith.constant 0.000000e+00 : f32
    %917 = vector.broadcast %cst_193 : f32 to vector<4x16xf32>
    %918 = arith.maximumf %916, %917 : vector<4x16xf32>
    %919 = vector.broadcast %7 : vector<1x16xf32> to vector<4x16xf32>
    %920 = arith.mulf %918, %919 : vector<4x16xf32>
    %cst_194 = arith.constant dense<0.000000e+00> : vector<4xf32>
    %921 = vector.multi_reduction <add>, %920, %cst_194 [1] : vector<4x16xf32> to vector<4xf32>
    %922 = vector.shape_cast %921 : vector<4xf32> to vector<4x1xf32>
    %923 = vector.broadcast %9 : vector<1x1xf32> to vector<4x1xf32>
    %924 = arith.addf %922, %923 : vector<4x1xf32>
    %925 = math.tanh %924 : vector<4x1xf32>
    %926 = vector.broadcast %8 : vector<1x16xf32> to vector<4x16xf32>
    %927 = arith.mulf %918, %926 : vector<4x16xf32>
    %cst_195 = arith.constant dense<0.000000e+00> : vector<4xf32>
    %928 = vector.multi_reduction <add>, %927, %cst_195 [1] : vector<4x16xf32> to vector<4xf32>
    %929 = vector.shape_cast %928 : vector<4xf32> to vector<4x1xf32>
    %930 = vector.broadcast %10 : vector<1x1xf32> to vector<4x1xf32>
    %931 = arith.addf %929, %930 : vector<4x1xf32>
    %932 = math.tanh %931 : vector<4x1xf32>
    %933 = tpu.concatenate %70, %77, %184, %191, %298, %305, %412, %419, %526, %533, %640, %647, %754, %761, %868, %875 in 1 : vector<4x1xf32>, vector<4x1xf32>, vector<4x1xf32>, vector<4x1xf32>, vector<4x1xf32>, vector<4x1xf32>, vector<4x1xf32>, vector<4x1xf32>, vector<4x1xf32>, vector<4x1xf32>, vector<4x1xf32>, vector<4x1xf32>, vector<4x1xf32>, vector<4x1xf32>, vector<4x1xf32>, vector<4x1xf32> -> vector<4x16xf32>
    %c0_196 = arith.constant 0 : index
    %c0_197 = arith.constant 0 : index
    %934 = vector.load %arg2[%c0_196, %c0_197] : memref<8x16xf32, #tpu.memory_space<vmem>>, vector<4x16xf32>
    tpu.vector_store %arg2[%c0_196, %c0_197], %933 {strides = array<i32>} : memref<8x16xf32, #tpu.memory_space<vmem>>, vector<4x16xf32>,
    %935 = tpu.concatenate %127, %134, %241, %248, %355, %362, %469, %476, %583, %590, %697, %704, %811, %818, %925, %932 in 1 : vector<4x1xf32>, vector<4x1xf32>, vector<4x1xf32>, vector<4x1xf32>, vector<4x1xf32>, vector<4x1xf32>, vector<4x1xf32>, vector<4x1xf32>, vector<4x1xf32>, vector<4x1xf32>, vector<4x1xf32>, vector<4x1xf32>, vector<4x1xf32>, vector<4x1xf32>, vector<4x1xf32>, vector<4x1xf32> -> vector<4x16xf32>
    %c4 = arith.constant 4 : index
    %c0_198 = arith.constant 0 : index
    %936 = vector.load %arg2[%c4, %c0_198] : memref<8x16xf32, #tpu.memory_space<vmem>>, vector<4x16xf32>
    tpu.vector_store %arg2[%c4, %c0_198], %935 {strides = array<i32>} : memref<8x16xf32, #tpu.memory_space<vmem>>, vector<4x16xf32>,
    %c0_199 = arith.constant 0 : index
    %c0_200 = arith.constant 0 : index
    %937 = vector.load %arg3[%c0_199, %c0_200] : memref<8x32xf32, #tpu.memory_space<vmem>>, vector<4x32xf32>
    tpu.vector_store %arg3[%c0_199, %c0_200], %856 {strides = array<i32>} : memref<8x32xf32, #tpu.memory_space<vmem>>, vector<4x32xf32>,
    %c4_201 = arith.constant 4 : index
    %c0_202 = arith.constant 0 : index
    %938 = vector.load %arg3[%c4_201, %c0_202] : memref<8x32xf32, #tpu.memory_space<vmem>>, vector<4x32xf32>
    tpu.vector_store %arg3[%c4_201, %c0_202], %913 {strides = array<i32>} : memref<8x32xf32, #tpu.memory_space<vmem>>, vector<4x32xf32>,
    return
  }
}

</mosaic_0001>

<llo_original>
// kernel: lstm_decoder_forward.1
$region0: #{lstm_decoder_forward.1}
  #allocation0 [shape = 'u32[]', space=smem, size = 0x4, offset = 0x4, fixed_abs, tag = 'smem constant byte address 0x4 - core index']
  #allocation1 [shape = 'u32[144,128]{1,0:T(1,128)}', space=vmem, size = 0x12000, scoped, tag = 'internal scratch']
  %s0 = inlined_call_operand.vmem [shape: f32[64,6], index: 0, kind: input, shape index: {}]
  %s1 = inlined_call_operand.vmem [shape: f32[120,128], index: 1, kind: input, shape index: {}]
  %s2 = inlined_call_operand.vmem [shape: f32[8,16], index: 2, kind: output, shape index: {0}]
  %s3 = inlined_call_operand.hbm [shape: f32[8,32], index: 3, kind: output, shape index: {1}]
  %4 = xla_tuple %s2, %s3
  %s5 = sld [smem:[#allocation0]]
  $region26: #{lstm_decoder_forward.1} parent=0
    _
  %s7 = ssub.s32 1, %s5
  %s8 = scalar_select 0, %s7, %s5
  $region1: #{lstm_decoder_forward.1} parent=0
    #allocation2 [shape = 'u8[4096]{0}', space=vmem, size = 0x1000, scoped, tag = 'output window, operand 1, single buffered']
    #allocation3 [shape = 's32[1]{0}', space=sflag, size = 0x4, scoped, tag = 'scoped memory for lstm_decoder_forward.1']
    %9 = vsyncpa [#allocation3], 0
    // Predicated region
    $region2: #{lstm_decoder_forward.1} parent=1 // pred_check
      _
    $region3: #{lstm_decoder_forward.1} parent=1 // pred_check_branch
      %11 = sbr.rel (0) target = $region5
    $region4: #{lstm_decoder_forward.1} parent=1 // pred_region
      _
    $region5: #{lstm_decoder_forward.1} parent=1 // pred_fallthru
      _
    // Predicated region
    $region6: #{lstm_decoder_forward.1} parent=1 // pred_check
      _
    $region7: #{lstm_decoder_forward.1} parent=1 // pred_check_branch
      %13 = sbr.rel (0) target = $region9
    $region8: #{lstm_decoder_forward.1} parent=1 // pred_region
      _
    $region9: #{lstm_decoder_forward.1} parent=1 // pred_fallthru
      _
    %v14 = vld [vmem:[%s1] sm:$0xff]
    %v15 = vld [vmem:[%s1 + $0x8] sm:$0xff]
    %v16 = vld [vmem:[%s1 + $0x10] sm:$0xff]
    %v17 = vld [vmem:[%s1 + $0x18] sm:$0xff]
    %v18 = vld [vmem:[%s1 + $0x20] sm:$0xff]
    %v19 = vld [vmem:[%s1 + $0x28] sm:$0xff]
    %v20 = vld [vmem:[%s1 + $0x30] sm:$0xff]
    %v21 = vld [vmem:[%s1 + $0x38] sm:$0xff]
    %v22 = vld [vmem:[%s1 + $0x40] sm:$0x1]
    %v23 = vld [vmem:[%s1 + $0x41] sm:$0x1]
    %v24 = vld [vmem:[%s1 + $0x42] sm:$0x1]
    %v25 = vld [vmem:[%s1 + $0x43] sm:$0x1]
    %v26 = vld [vmem:[%s1 + $0x44] sm:$0x1]
    %v27 = vld [vmem:[%s1 + $0x45] sm:$0x1]
    %v28 = vld [vmem:[%s1 + $0x46] sm:$0x1]
    %v29 = vld [vmem:[%s1 + $0x47] sm:$0x1]
    %v30 = vld [vmem:[%s1 + $0x48] sm:$0x1]
    %v31 = vld [vmem:[%s1 + $0x50] sm:$0xff]
    %v32 = vld [vmem:[%s1 + $0x58] sm:$0xff]
    %v33 = vld [vmem:[%s1 + $0x60] sm:$0xff]
    %v34 = vld [vmem:[%s1 + $0x68] sm:$0xff]
    %v35 = vld [vmem:[%s1 + $0x70] sm:$0x3f]
    %v36 = vld [vmem:[%s0] sm:$0xff]
    %v37 = vld [vmem:[%s0 + $0x8] sm:$0xff]
    %v38 = vld [vmem:[%s0 + $0x10] sm:$0xff]
    %v39 = vld [vmem:[%s0 + $0x18] sm:$0xff]
    %v40 = vld [vmem:[%s0 + $0x20] sm:$0xff]
    %v41 = vld [vmem:[%s0 + $0x28] sm:$0xff]
    %v42 = vld [vmem:[%s0 + $0x30] sm:$0xff]
    %v43 = vld [vmem:[%s0 + $0x38] sm:$0xff]
    %v44 = vlaneseq
    %v45 = vshrl.u32 %v44, 7
    %v46 = vsub.s32 0, %v45
    %v47 = vrot.slane %v23, %v46
    %vm48 = vcmask 48128
    %v50 = vsel %vm48, %v36, 0
    %v53 = vsel %vm48, %v37, 0
    %v56 = vsel %vm48, %v38, 0
    %v59 = vsel %vm48, %v39, 0
    %v62 = vsel %vm48, %v40, 0
    %v65 = vsel %vm48, %v41, 0
    %v68 = vsel %vm48, %v42, 0
    %v71 = vsel %vm48, %v43, 0
    %vm73 = vcmask 1045504
    %v75 = vsel %vm73, %v35, 0
    %77 = vmatprep.subr.mxu0 0.0
    %78 = vmatpush1.msra.mxu0 %v75
    %79 = vmatprep.subr.mxu0 0.0
    %80 = vmatpush1.msra.mxu0 0.0
    %81 = vmatprep.subr.mxu0 0.0
    %82 = vmatpush1.msra.mxu0 0.0
    %83 = vmatprep.subr.mxu0 0.0
    %84 = vmatpush1.msra.mxu0 0.0
    %85 = vmatprep.subr.mxu0 0.0
    %86 = vmatpush1.msra.mxu0 0.0
    %87 = vmatprep.subr.mxu0 0.0
    %88 = vmatpush1.msra.mxu0 0.0
    %89 = vmatprep.subr.mxu0 0.0
    %90 = vmatpush1.msra.mxu0 0.0
    %91 = vmatprep.subr.mxu0 0.0
    %92 = vmatpush1.msra.mxu0 0.0
    %93 = vmatprep.subr.mxu0 0.0
    %94 = vmatpush1.msra.mxu0 0.0
    %95 = vmatprep.subr.mxu0 0.0
    %96 = vmatpush1.msra.mxu0 0.0
    %97 = vmatprep.subr.mxu0 0.0
    %98 = vmatpush1.msra.mxu0 0.0
    %99 = vmatprep.subr.mxu0 0.0
    %100 = vmatpush1.msra.mxu0 0.0
    %101 = vmatprep.subr.mxu0 0.0
    %102 = vmatpush1.msra.mxu0 0.0
    %103 = vmatprep.subr.mxu0 0.0
    %104 = vmatpush1.msra.mxu0 0.0
    %105 = vmatprep.subr.mxu0 0.0
    %106 = vmatpush1.msra.mxu0 0.0
    %107 = vmatprep.subr.mxu0 0.0
    %108 = vmatpush1.msra.mxu0 0.0
    %109 = vmatprep.subr.mxu0 0.0
    %110 = vmatpush1.msra.mxu0 0.0
    %111 = vmatprep.subr.mxu0 0.0
    %112 = vmatpush1.msra.mxu0 0.0
    %113 = vmatprep.subr.mxu0 0.0
    %114 = vmatpush1.msra.mxu0 0.0
    %115 = vmatprep.subr.mxu0 0.0
    %116 = vmatpush1.msra.mxu0 0.0
    %117 = vmatprep.subr.mxu0 0.0
    %118 = vmatpush1.msra.mxu0 0.0
    %119 = vmatprep.subr.mxu0 0.0
    %120 = vmatpush1.msra.mxu0 0.0
    %121 = vmatprep.subr.mxu0 0.0
    %122 = vmatpush1.msra.mxu0 0.0
    %123 = vmatprep.subr.mxu0 0.0
    %124 = vmatpush1.msra.mxu0 0.0
    %125 = vmatprep.subr.mxu0 0.0
    %126 = vmatpush1.msra.mxu0 0.0
    %127 = vmatprep.subr.mxu0 0.0
    %128 = vmatpush1.msra.mxu0 0.0
    %129 = vmatprep.subr.mxu0 0.0
    %130 = vmatpush1.msra.mxu0 0.0
    %131 = vmatprep.subr.mxu0 0.0
    %132 = vmatpush1.msra.mxu0 0.0
    %133 = vmatprep.subr.mxu0 0.0
    %134 = vmatpush1.msra.mxu0 0.0
    %135 = vmatprep.subr.mxu0 0.0
    %136 = vmatpush1.msra.mxu0 0.0
    %137 = vmatprep.subr.mxu0 0.0
    %138 = vmatpush1.msra.mxu0 0.0
    %139 = vmatprep.subr.mxu0 0.0
    %140 = vmatpush1.msra.mxu0 0.0
    %141 = vmatprep.mubr.f32.mxu0 0.0
    %142 = vmatmul.mubr.f32.gmra.mrb[0].mxu0 %v50
    %v143 = vpop.f32.mrb[0].mxu0
    %v144 = vadd.f32 %v47, %v143
    %v145 = vpop.f32.mrb[0].mxu0
    %146 = vmatprep.mubr.f32.mxu0 0.0
    %147 = vmatmul.mubr.f32.gmra.mrb[0].mxu0 %v53
    %v148 = vpop.f32.mrb[0].mxu0
    %v149 = vadd.f32 %v47, %v148
    %v150 = vpop.f32.mrb[0].mxu0
    %151 = vmatprep.mubr.f32.mxu0 0.0
    %152 = vmatmul.mubr.f32.gmra.mrb[0].mxu0 %v56
    %v153 = vpop.f32.mrb[0].mxu0
    %v154 = vadd.f32 %v47, %v153
    %v155 = vpop.f32.mrb[0].mxu0
    %156 = vmatprep.mubr.f32.mxu0 0.0
    %157 = vmatmul.mubr.f32.gmra.mrb[0].mxu0 %v59
    %v158 = vpop.f32.mrb[0].mxu0
    %v159 = vadd.f32 %v47, %v158
    %v160 = vpop.f32.mrb[0].mxu0
    %161 = vmatprep.mubr.f32.mxu0 0.0
    %162 = vmatmul.mubr.f32.gmra.mrb[0].mxu0 %v62
    %v163 = vpop.f32.mrb[0].mxu0
    %v164 = vadd.f32 %v47, %v163
    %v165 = vpop.f32.mrb[0].mxu0
    %166 = vmatprep.mubr.f32.mxu0 0.0
    %167 = vmatmul.mubr.f32.gmra.mrb[0].mxu0 %v65
    %v168 = vpop.f32.mrb[0].mxu0
    %v169 = vadd.f32 %v47, %v168
    %v170 = vpop.f32.mrb[0].mxu0
    %171 = vmatprep.mubr.f32.mxu0 0.0
    %172 = vmatmul.mubr.f32.gmra.mrb[0].mxu0 %v68
    %v173 = vpop.f32.mrb[0].mxu0
    %v174 = vadd.f32 %v47, %v173
    %v175 = vpop.f32.mrb[0].mxu0
    %176 = vmatprep.mubr.f32.mxu0 0.0
    %177 = vmatmul.mubr.f32.gmra.mrb[0].mxu0 %v71
    %v178 = vpop.f32.mrb[0].mxu0
    %v179 = vadd.f32 %v47, %v178
    %v180 = vpop.f32.mrb[0].mxu0
    %181 = vdwg.mxu0
    %v182 = vlaneseq
    %v183 = vshrl.u32 %v182, 7
    %v184 = vsub.s32 0, %v183
    %v185 = vrot.slane %v25, %v184
    %v186 = vmul.f32 %v185, -2.0
    %v187 = vlaneseq
    %v188 = vshrl.u32 %v187, 7
    %v189 = vsub.s32 0, %v188
    %v190 = vrot.slane %v26, %v189
    %v191 = vmul.f32 %v190, -2.0
    %v192 = vadd.f32 %v186, %v191
    %v193 = vadd.f32 %v192, %v144
    %v194 = vmax.f32 %v193, 0.0
    %v195 = vlaneseq
    %v196 = vshrl.u32 %v195, 7
    %v197 = vsub.s32 0, %v196
    %v198 = vrot.slane %v24, %v197
    %vm199 = vcmask 261120
    %v201 = vsel %vm199, %v194, 0
    %203 = vmatprep.subr.mxu0 0.0
    %204 = vmatpush1.msra.mxu0 %v31
    %205 = vmatprep.subr.mxu0 0.0
    %206 = vmatpush1.msra.mxu0 %v32
    %207 = vmatprep.subr.mxu0 0.0
    %208 = vmatpush1.msra.mxu0 %v33
    %209 = vmatprep.subr.mxu0 0.0
    %210 = vmatpush1.msra.mxu0 %v34
    %211 = vmatprep.subr.mxu0 0.0
    %212 = vmatpush1.msra.mxu0 0.0
    %213 = vmatprep.subr.mxu0 0.0
    %214 = vmatpush1.msra.mxu0 0.0
    %215 = vmatprep.subr.mxu0 0.0
    %216 = vmatpush1.msra.mxu0 0.0
    %217 = vmatprep.subr.mxu0 0.0
    %218 = vmatpush1.msra.mxu0 0.0
    %219 = vmatprep.subr.mxu0 0.0
    %220 = vmatpush1.msra.mxu0 0.0
    %221 = vmatprep.subr.mxu0 0.0
    %222 = vmatpush1.msra.mxu0 0.0
    %223 = vmatprep.subr.mxu0 0.0
    %224 = vmatpush1.msra.mxu0 0.0
    %225 = vmatprep.subr.mxu0 0.0
    %226 = vmatpush1.msra.mxu0 0.0
    %227 = vmatprep.subr.mxu0 0.0
    %228 = vmatpush1.msra.mxu0 0.0
    %229 = vmatprep.subr.mxu0 0.0
    %230 = vmatpush1.msra.mxu0 0.0
    %231 = vmatprep.subr.mxu0 0.0
    %232 = vmatpush1.msra.mxu0 0.0
    %233 = vmatprep.subr.mxu0 0.0
    %234 = vmatpush1.msra.mxu0 0.0
    %235 = vmatprep.subr.mxu0 0.0
    %236 = vmatpush1.msra.mxu0 0.0
    %237 = vmatprep.subr.mxu0 0.0
    %238 = vmatpush1.msra.mxu0 0.0
    %239 = vmatprep.subr.mxu0 0.0
    %240 = vmatpush1.msra.mxu0 0.0
    %241 = vmatprep.subr.mxu0 0.0
    %242 = vmatpush1.msra.mxu0 0.0
    %243 = vmatprep.subr.mxu0 0.0
    %244 = vmatpush1.msra.mxu0 0.0
    %245 = vmatprep.subr.mxu0 0.0
    %246 = vmatpush1.msra.mxu0 0.0
    %247 = vmatprep.subr.mxu0 0.0
    %248 = vmatpush1.msra.mxu0 0.0
    %249 = vmatprep.subr.mxu0 0.0
    %250 = vmatpush1.msra.mxu0 0.0
    %251 = vmatprep.subr.mxu0 0.0
    %252 = vmatpush1.msra.mxu0 0.0
    %253 = vmatprep.subr.mxu0 0.0
    %254 = vmatpush1.msra.mxu0 0.0
    %255 = vmatprep.subr.mxu0 0.0
    %256 = vmatpush1.msra.mxu0 0.0
    %257 = vmatprep.subr.mxu0 0.0
    %258 = vmatpush1.msra.mxu0 0.0
    %259 = vmatprep.subr.mxu0 0.0
    %260 = vmatpush1.msra.mxu0 0.0
    %261 = vmatprep.subr.mxu0 0.0
    %262 = vmatpush1.msra.mxu0 0.0
    %263 = vmatprep.subr.mxu0 0.0
    %264 = vmatpush1.msra.mxu0 0.0
    %265 = vmatprep.subr.mxu0 0.0
    %266 = vmatpush1.msra.mxu0 0.0
    %267 = vmatprep.mubr.f32.mxu0 0.0
    %268 = vmatmul.mubr.f32.gmra.mrb[0].mxu0 %v201
    %v269 = vpop.f32.mrb[0].mxu0
    %v270 = vadd.f32 %v198, %v269
    %v271 = vpop.f32.mrb[0].mxu0
    %272 = vdwg.mxu0
    %v273 = vmax.f32 %v270, 0.0
    %v274 = vsel %vm199, %v273, 0.0
    %v275 = vlaneseq
    %v276 = vshrl.u32 %v275, 7
    %v277 = vsub.s32 0, %v276
    %v278 = vrot.slane %v22, %v277
    %vm279 = vcmask 523264
    %v281 = vsel %vm279, %v274, 0
    %283 = vmatprep.subr.mxu0 0.0
    %284 = vmatpush1.msra.mxu0 %v14
    %285 = vmatprep.subr.mxu0 0.0
    %286 = vmatpush1.msra.mxu0 %v15
    %287 = vmatprep.subr.mxu0 0.0
    %288 = vmatpush1.msra.mxu0 %v16
    %289 = vmatprep.subr.mxu0 0.0
    %290 = vmatpush1.msra.mxu0 %v17
    %291 = vmatprep.subr.mxu0 0.0
    %292 = vmatpush1.msra.mxu0 %v18
    %293 = vmatprep.subr.mxu0 0.0
    %294 = vmatpush1.msra.mxu0 %v19
    %295 = vmatprep.subr.mxu0 0.0
    %296 = vmatpush1.msra.mxu0 %v20
    %297 = vmatprep.subr.mxu0 0.0
    %298 = vmatpush1.msra.mxu0 %v21
    %299 = vmatprep.subr.mxu0 0.0
    %300 = vmatpush1.msra.mxu0 0.0
    %301 = vmatprep.subr.mxu0 0.0
    %302 = vmatpush1.msra.mxu0 0.0
    %303 = vmatprep.subr.mxu0 0.0
    %304 = vmatpush1.msra.mxu0 0.0
    %305 = vmatprep.subr.mxu0 0.0
    %306 = vmatpush1.msra.mxu0 0.0
    %307 = vmatprep.subr.mxu0 0.0
    %308 = vmatpush1.msra.mxu0 0.0
    %309 = vmatprep.subr.mxu0 0.0
    %310 = vmatpush1.msra.mxu0 0.0
    %311 = vmatprep.subr.mxu0 0.0
    %312 = vmatpush1.msra.mxu0 0.0
    %313 = vmatprep.subr.mxu0 0.0
    %314 = vmatpush1.msra.mxu0 0.0
    %315 = vmatprep.subr.mxu0 0.0
    %316 = vmatpush1.msra.mxu0 0.0
    %317 = vmatprep.subr.mxu0 0.0
    %318 = vmatpush1.msra.mxu0 0.0
    %319 = vmatprep.subr.mxu0 0.0
    %320 = vmatpush1.msra.mxu0 0.0
    %321 = vmatprep.subr.mxu0 0.0
    %322 = vmatpush1.msra.mxu0 0.0
    %323 = vmatprep.subr.mxu0 0.0
    %324 = vmatpush1.msra.mxu0 0.0
    %325 = vmatprep.subr.mxu0 0.0
    %326 = vmatpush1.msra.mxu0 0.0
    %327 = vmatprep.subr.mxu0 0.0
    %328 = vmatpush1.msra.mxu0 0.0
    %329 = vmatprep.subr.mxu0 0.0
    %330 = vmatpush1.msra.mxu0 0.0
    %331 = vmatprep.subr.mxu0 0.0
    %332 = vmatpush1.msra.mxu0 0.0
    %333 = vmatprep.subr.mxu0 0.0
    %334 = vmatpush1.msra.mxu0 0.0
    %335 = vmatprep.subr.mxu0 0.0
    %336 = vmatpush1.msra.mxu0 0.0
    %337 = vmatprep.subr.mxu0 0.0
    %338 = vmatpush1.msra.mxu0 0.0
    %339 = vmatprep.subr.mxu0 0.0
    %340 = vmatpush1.msra.mxu0 0.0
    %341 = vmatprep.subr.mxu0 0.0
    %342 = vmatpush1.msra.mxu0 0.0
    %343 = vmatprep.subr.mxu0 0.0
    %344 = vmatpush1.msra.mxu0 0.0
    %345 = vmatprep.subr.mxu0 0.0
    %346 = vmatpush1.msra.mxu0 0.0
    %347 = vmatprep.mubr.f32.mxu0 0.0
    %348 = vmatmul.mubr.f32.gmra.mrb[0].mxu0 %v281
    %v349 = vpop.f32.mrb[0].mxu0
    %v350 = vadd.f32 %v278, %v349
    %v351 = vpop.f32.mrb[0].mxu0
    %352 = vdwg.mxu0
    %v353 = vmul.f32 %v350, 0.5
    %v354 = vtanh.pop %v353
    %v355 = vmul.f32 %v354, 0.5
    %v356 = vadd.f32 %v355, 0.5
    %358 = vrot.lane.b32.xlu0 %v350, 32
    %v359 = vpop.permute.xlu0 %358
    %v361 = vmul.f32 %v356, %v359
    %363 = vrot.lane.b32.xlu0 %v361, 64
    %v364 = vpop.permute.xlu0 %363
    %v366 = vadd.f32 %v350, %v364
    %v367 = vtanh.pop %v366
    %v368 = vsub.f32 0.0, %v367
    %370 = vrot.lane.b32.xlu0 %v368, 96
    %v371 = vpop.permute.xlu0 %370
    %v373 = vmul.f32 %v356, %v371
    %375 = vrot.lane.b32.xlu0 %v373, 32
    %v376 = vpop.permute.xlu0 %375
    %v378 = vadd.f32 %v367, %v376
    %v379 = vlaneseq
    %v380 = vshrl.u32 %v379, 7
    %v381 = vsub.s32 0, %v380
    %v382 = vrot.slane %v27, %v381
    %384 = vrot.lane.b32.xlu0 %v378, 64
    %v385 = vpop.permute.xlu0 %384
    %390 = vrot.lane.b32.xlu0 %v31, 64
    %v391 = vpop.permute.xlu0 %390
    %392 = vrot.lane.b32.xlu0 %v32, 64
    %v393 = vpop.permute.xlu0 %392
    %394 = vrot.lane.b32.xlu0 %v33, 64
    %v395 = vpop.permute.xlu0 %394
    %396 = vrot.lane.b32.xlu0 %v34, 64
    %v397 = vpop.permute.xlu0 %396
    %v402 = vsel %vm199, %v385, 0
    %404 = vmatprep.subr.mxu0 0.0
    %405 = vmatpush1.msra.mxu0 %v391
    %406 = vmatprep.subr.mxu0 0.0
    %407 = vmatpush1.msra.mxu0 %v393
    %408 = vmatprep.subr.mxu0 0.0
    %409 = vmatpush1.msra.mxu0 %v395
    %410 = vmatprep.subr.mxu0 0.0
    %411 = vmatpush1.msra.mxu0 %v397
    %412 = vmatprep.subr.mxu0 0.0
    %413 = vmatpush1.msra.mxu0 0.0
    %414 = vmatprep.subr.mxu0 0.0
    %415 = vmatpush1.msra.mxu0 0.0
    %416 = vmatprep.subr.mxu0 0.0
    %417 = vmatpush1.msra.mxu0 0.0
    %418 = vmatprep.subr.mxu0 0.0
    %419 = vmatpush1.msra.mxu0 0.0
    %420 = vmatprep.subr.mxu0 0.0
    %421 = vmatpush1.msra.mxu0 0.0
    %422 = vmatprep.subr.mxu0 0.0
    %423 = vmatpush1.msra.mxu0 0.0
    %424 = vmatprep.subr.mxu0 0.0
    %425 = vmatpush1.msra.mxu0 0.0
    %426 = vmatprep.subr.mxu0 0.0
    %427 = vmatpush1.msra.mxu0 0.0
    %428 = vmatprep.subr.mxu0 0.0
    %429 = vmatpush1.msra.mxu0 0.0
    %430 = vmatprep.subr.mxu0 0.0
    %431 = vmatpush1.msra.mxu0 0.0
    %432 = vmatprep.subr.mxu0 0.0
    %433 = vmatpush1.msra.mxu0 0.0
    %434 = vmatprep.subr.mxu0 0.0
    %435 = vmatpush1.msra.mxu0 0.0
    %436 = vmatprep.subr.mxu0 0.0
    %437 = vmatpush1.msra.mxu0 0.0
    %438 = vmatprep.subr.mxu0 0.0
    %439 = vmatpush1.msra.mxu0 0.0
    %440 = vmatprep.subr.mxu0 0.0
    %441 = vmatpush1.msra.mxu0 0.0
    %442 = vmatprep.subr.mxu0 0.0
    %443 = vmatpush1.msra.mxu0 0.0
    %444 = vmatprep.subr.mxu0 0.0
    %445 = vmatpush1.msra.mxu0 0.0
    %446 = vmatprep.subr.mxu0 0.0
    %447 = vmatpush1.msra.mxu0 0.0
    %448 = vmatprep.subr.mxu0 0.0
    %449 = vmatpush1.msra.mxu0 0.0
    %450 = vmatprep.subr.mxu0 0.0
    %451 = vmatpush1.msra.mxu0 0.0
    %452 = vmatprep.subr.mxu0 0.0
    %453 = vmatpush1.msra.mxu0 0.0
    %454 = vmatprep.subr.mxu0 0.0
    %455 = vmatpush1.msra.mxu0 0.0
    %456 = vmatprep.subr.mxu0 0.0
    %457 = vmatpush1.msra.mxu0 0.0
    %458 = vmatprep.subr.mxu0 0.0
    %459 = vmatpush1.msra.mxu0 0.0
    %460 = vmatprep.subr.mxu0 0.0
    %461 = vmatpush1.msra.mxu0 0.0
    %462 = vmatprep.subr.mxu0 0.0
    %463 = vmatpush1.msra.mxu0 0.0
    %464 = vmatprep.subr.mxu0 0.0
    %465 = vmatpush1.msra.mxu0 0.0
    %466 = vmatprep.subr.mxu0 0.0
    %467 = vmatpush1.msra.mxu0 0.0
    %468 = vmatprep.mubr.f32.mxu0 0.0
    %469 = vmatmul.mubr.f32.gmra.mrb[0].mxu0 %v402
    %v470 = vpop.f32.mrb[0].mxu0
    %v471 = vadd.f32 %v382, %v470
    %v472 = vpop.f32.mrb[0].mxu0
    %473 = vdwg.mxu0
    %v474 = vmax.f32 %v471, 0.0
    %v475 = vlaneseq
    %v476 = vshrl.u32 %v475, 7
    %v477 = vsub.s32 0, %v476
    %v478 = vrot.slane %v28, %v477
    %v479 = vmul.f32 %v474, %v478
    %vm480 = vcmask 125952
    %v481 = vsel %vm480, %v479, 0.0
    %482 = vadd.xlane.f32.xlu0 %v481
    %v483 = vpop.xlane.xlu0 %482
    %v484 = vlaneseq
    %v485 = vshrl.u32 %v484, 7
    %v486 = vsub.s32 0, %v485
    %v487 = vrot.slane %v30, %v486
    %v488 = vadd.f32 %v483, %v487
    %v489 = vtanh.pop %v488
    %v490 = vlaneseq
    %v491 = vshrl.u32 %v490, 7
    %v492 = vsub.s32 0, %v491
    %v493 = vrot.slane %v29, %v492
    %v494 = vmul.f32 %v474, %v493
    %v495 = vsel %vm480, %v494, 0.0
    %496 = vadd.xlane.f32.xlu0 %v495
    %v497 = vpop.xlane.xlu0 %496
    %v498 = vadd.f32 %v497, %v487
    %v499 = vtanh.pop %v498
    %v500 = vrot.slane %v194, 4
    %v501 = vsel %vm199, %v500, 0
    %503 = vmatprep.subr.mxu0 0.0
    %504 = vmatpush1.msra.mxu0 %v31
    %505 = vmatprep.subr.mxu0 0.0
    %506 = vmatpush1.msra.mxu0 %v32
    %507 = vmatprep.subr.mxu0 0.0
    %508 = vmatpush1.msra.mxu0 %v33
    %509 = vmatprep.subr.mxu0 0.0
    %510 = vmatpush1.msra.mxu0 %v34
    %511 = vmatprep.subr.mxu0 0.0
    %512 = vmatpush1.msra.mxu0 0.0
    %513 = vmatprep.subr.mxu0 0.0
    %514 = vmatpush1.msra.mxu0 0.0
    %515 = vmatprep.subr.mxu0 0.0
    %516 = vmatpush1.msra.mxu0 0.0
    %517 = vmatprep.subr.mxu0 0.0
    %518 = vmatpush1.msra.mxu0 0.0
    %519 = vmatprep.subr.mxu0 0.0
    %520 = vmatpush1.msra.mxu0 0.0
    %521 = vmatprep.subr.mxu0 0.0
    %522 = vmatpush1.msra.mxu0 0.0
    %523 = vmatprep.subr.mxu0 0.0
    %524 = vmatpush1.msra.mxu0 0.0
    %525 = vmatprep.subr.mxu0 0.0
    %526 = vmatpush1.msra.mxu0 0.0
    %527 = vmatprep.subr.mxu0 0.0
    %528 = vmatpush1.msra.mxu0 0.0
    %529 = vmatprep.subr.mxu0 0.0
    %530 = vmatpush1.msra.mxu0 0.0
    %531 = vmatprep.subr.mxu0 0.0
    %532 = vmatpush1.msra.mxu0 0.0
    %533 = vmatprep.subr.mxu0 0.0
    %534 = vmatpush1.msra.mxu0 0.0
    %535 = vmatprep.subr.mxu0 0.0
    %536 = vmatpush1.msra.mxu0 0.0
    %537 = vmatprep.subr.mxu0 0.0
    %538 = vmatpush1.msra.mxu0 0.0
    %539 = vmatprep.subr.mxu0 0.0
    %540 = vmatpush1.msra.mxu0 0.0
    %541 = vmatprep.subr.mxu0 0.0
    %542 = vmatpush1.msra.mxu0 0.0
    %543 = vmatprep.subr.mxu0 0.0
    %544 = vmatpush1.msra.mxu0 0.0
    %545 = vmatprep.subr.mxu0 0.0
    %546 = vmatpush1.msra.mxu0 0.0
    %547 = vmatprep.subr.mxu0 0.0
    %548 = vmatpush1.msra.mxu0 0.0
    %549 = vmatprep.subr.mxu0 0.0
    %550 = vmatpush1.msra.mxu0 0.0
    %551 = vmatprep.subr.mxu0 0.0
    %552 = vmatpush1.msra.mxu0 0.0
    %553 = vmatprep.subr.mxu0 0.0
    %554 = vmatpush1.msra.mxu0 0.0
    %555 = vmatprep.subr.mxu0 0.0
    %556 = vmatpush1.msra.mxu0 0.0
    %557 = vmatprep.subr.mxu0 0.0
    %558 = vmatpush1.msra.mxu0 0.0
    %559 = vmatprep.subr.mxu0 0.0
    %560 = vmatpush1.msra.mxu0 0.0
    %561 = vmatprep.subr.mxu0 0.0
    %562 = vmatpush1.msra.mxu0 0.0
    %563 = vmatprep.subr.mxu0 0.0
    %564 = vmatpush1.msra.mxu0 0.0
    %565 = vmatprep.subr.mxu0 0.0
    %566 = vmatpush1.msra.mxu0 0.0
    %567 = vmatprep.mubr.f32.mxu0 0.0
    %568 = vmatmul.mubr.f32.gmra.mrb[0].mxu0 %v501
    %v569 = vpop.f32.mrb[0].mxu0
    %v570 = vadd.f32 %v198, %v569
    %v571 = vpop.f32.mrb[0].mxu0
    %572 = vdwg.mxu0
    %v573 = vmax.f32 %v570, 0.0
    %v574 = vsel %vm199, %v573, 0.0
    %v576 = vsel %vm279, %v574, 0
    %578 = vmatprep.subr.mxu0 0.0
    %579 = vmatpush1.msra.mxu0 %v14
    %580 = vmatprep.subr.mxu0 0.0
    %581 = vmatpush1.msra.mxu0 %v15
    %582 = vmatprep.subr.mxu0 0.0
    %583 = vmatpush1.msra.mxu0 %v16
    %584 = vmatprep.subr.mxu0 0.0
    %585 = vmatpush1.msra.mxu0 %v17
    %586 = vmatprep.subr.mxu0 0.0
    %587 = vmatpush1.msra.mxu0 %v18
    %588 = vmatprep.subr.mxu0 0.0
    %589 = vmatpush1.msra.mxu0 %v19
    %590 = vmatprep.subr.mxu0 0.0
    %591 = vmatpush1.msra.mxu0 %v20
    %592 = vmatprep.subr.mxu0 0.0
    %593 = vmatpush1.msra.mxu0 %v21
    %594 = vmatprep.subr.mxu0 0.0
    %595 = vmatpush1.msra.mxu0 0.0
    %596 = vmatprep.subr.mxu0 0.0
    %597 = vmatpush1.msra.mxu0 0.0
    %598 = vmatprep.subr.mxu0 0.0
    %599 = vmatpush1.msra.mxu0 0.0
    %600 = vmatprep.subr.mxu0 0.0
    %601 = vmatpush1.msra.mxu0 0.0
    %602 = vmatprep.subr.mxu0 0.0
    %603 = vmatpush1.msra.mxu0 0.0
    %604 = vmatprep.subr.mxu0 0.0
    %605 = vmatpush1.msra.mxu0 0.0
    %606 = vmatprep.subr.mxu0 0.0
    %607 = vmatpush1.msra.mxu0 0.0
    %608 = vmatprep.subr.mxu0 0.0
    %609 = vmatpush1.msra.mxu0 0.0
    %610 = vmatprep.subr.mxu0 0.0
    %611 = vmatpush1.msra.mxu0 0.0
    %612 = vmatprep.subr.mxu0 0.0
    %613 = vmatpush1.msra.mxu0 0.0
    %614 = vmatprep.subr.mxu0 0.0
    %615 = vmatpush1.msra.mxu0 0.0
    %616 = vmatprep.subr.mxu0 0.0
    %617 = vmatpush1.msra.mxu0 0.0
    %618 = vmatprep.subr.mxu0 0.0
    %619 = vmatpush1.msra.mxu0 0.0
    %620 = vmatprep.subr.mxu0 0.0
    %621 = vmatpush1.msra.mxu0 0.0
    %622 = vmatprep.subr.mxu0 0.0
    %623 = vmatpush1.msra.mxu0 0.0
    %624 = vmatprep.subr.mxu0 0.0
    %625 = vmatpush1.msra.mxu0 0.0
    %626 = vmatprep.subr.mxu0 0.0
    %627 = vmatpush1.msra.mxu0 0.0
    %628 = vmatprep.subr.mxu0 0.0
    %629 = vmatpush1.msra.mxu0 0.0
    %630 = vmatprep.subr.mxu0 0.0
    %631 = vmatpush1.msra.mxu0 0.0
    %632 = vmatprep.subr.mxu0 0.0
    %633 = vmatpush1.msra.mxu0 0.0
    %634 = vmatprep.subr.mxu0 0.0
    %635 = vmatpush1.msra.mxu0 0.0
    %636 = vmatprep.subr.mxu0 0.0
    %637 = vmatpush1.msra.mxu0 0.0
    %638 = vmatprep.subr.mxu0 0.0
    %639 = vmatpush1.msra.mxu0 0.0
    %640 = vmatprep.subr.mxu0 0.0
    %641 = vmatpush1.msra.mxu0 0.0
    %642 = vmatprep.mubr.f32.mxu0 0.0
    %643 = vmatmul.mubr.f32.gmra.mrb[0].mxu0 %v576
    %v644 = vpop.f32.mrb[0].mxu0
    %v645 = vadd.f32 %v278, %v644
    %v646 = vpop.f32.mrb[0].mxu0
    %647 = vdwg.mxu0
    %v648 = vmul.f32 %v645, 0.5
    %v649 = vtanh.pop %v648
    %v650 = vmul.f32 %v649, 0.5
    %v651 = vadd.f32 %v650, 0.5
    %653 = vrot.lane.b32.xlu0 %v645, 32
    %v654 = vpop.permute.xlu0 %653
    %v656 = vmul.f32 %v651, %v654
    %658 = vrot.lane.b32.xlu0 %v656, 64
    %v659 = vpop.permute.xlu0 %658
    %v661 = vadd.f32 %v645, %v659
    %v662 = vtanh.pop %v661
    %v663 = vsub.f32 0.0, %v662
    %665 = vrot.lane.b32.xlu0 %v663, 96
    %v666 = vpop.permute.xlu0 %665
    %v668 = vmul.f32 %v651, %v666
    %670 = vrot.lane.b32.xlu0 %v668, 32
    %v671 = vpop.permute.xlu0 %670
    %v673 = vadd.f32 %v662, %v671
    %675 = vrot.lane.b32.xlu0 %v673, 64
    %v676 = vpop.permute.xlu0 %675
    %v677 = vsel %vm199, %v676, 0
    %679 = vmatprep.subr.mxu0 0.0
    %680 = vmatpush1.msra.mxu0 %v391
    %681 = vmatprep.subr.mxu0 0.0
    %682 = vmatpush1.msra.mxu0 %v393
    %683 = vmatprep.subr.mxu0 0.0
    %684 = vmatpush1.msra.mxu0 %v395
    %685 = vmatprep.subr.mxu0 0.0
    %686 = vmatpush1.msra.mxu0 %v397
    %687 = vmatprep.subr.mxu0 0.0
    %688 = vmatpush1.msra.mxu0 0.0
    %689 = vmatprep.subr.mxu0 0.0
    %690 = vmatpush1.msra.mxu0 0.0
    %691 = vmatprep.subr.mxu0 0.0
    %692 = vmatpush1.msra.mxu0 0.0
    %693 = vmatprep.subr.mxu0 0.0
    %694 = vmatpush1.msra.mxu0 0.0
    %695 = vmatprep.subr.mxu0 0.0
    %696 = vmatpush1.msra.mxu0 0.0
    %697 = vmatprep.subr.mxu0 0.0
    %698 = vmatpush1.msra.mxu0 0.0
    %699 = vmatprep.subr.mxu0 0.0
    %700 = vmatpush1.msra.mxu0 0.0
    %701 = vmatprep.subr.mxu0 0.0
    %702 = vmatpush1.msra.mxu0 0.0
    %703 = vmatprep.subr.mxu0 0.0
    %704 = vmatpush1.msra.mxu0 0.0
    %705 = vmatprep.subr.mxu0 0.0
    %706 = vmatpush1.msra.mxu0 0.0
    %707 = vmatprep.subr.mxu0 0.0
    %708 = vmatpush1.msra.mxu0 0.0
    %709 = vmatprep.subr.mxu0 0.0
    %710 = vmatpush1.msra.mxu0 0.0
    %711 = vmatprep.subr.mxu0 0.0
    %712 = vmatpush1.msra.mxu0 0.0
    %713 = vmatprep.subr.mxu0 0.0
    %714 = vmatpush1.msra.mxu0 0.0
    %715 = vmatprep.subr.mxu0 0.0
    %716 = vmatpush1.msra.mxu0 0.0
    %717 = vmatprep.subr.mxu0 0.0
    %718 = vmatpush1.msra.mxu0 0.0
    %719 = vmatprep.subr.mxu0 0.0
    %720 = vmatpush1.msra.mxu0 0.0
    %721 = vmatprep.subr.mxu0 0.0
    %722 = vmatpush1.msra.mxu0 0.0
    %723 = vmatprep.subr.mxu0 0.0
    %724 = vmatpush1.msra.mxu0 0.0
    %725 = vmatprep.subr.mxu0 0.0
    %726 = vmatpush1.msra.mxu0 0.0
    %727 = vmatprep.subr.mxu0 0.0
    %728 = vmatpush1.msra.mxu0 0.0
    %729 = vmatprep.subr.mxu0 0.0
    %730 = vmatpush1.msra.mxu0 0.0
    %731 = vmatprep.subr.mxu0 0.0
    %732 = vmatpush1.msra.mxu0 0.0
    %733 = vmatprep.subr.mxu0 0.0
    %734 = vmatpush1.msra.mxu0 0.0
    %735 = vmatprep.subr.mxu0 0.0
    %736 = vmatpush1.msra.mxu0 0.0
    %737 = vmatprep.subr.mxu0 0.0
    %738 = vmatpush1.msra.mxu0 0.0
    %739 = vmatprep.subr.mxu0 0.0
    %740 = vmatpush1.msra.mxu0 0.0
    %741 = vmatprep.subr.mxu0 0.0
    %742 = vmatpush1.msra.mxu0 0.0
    %743 = vmatprep.mubr.f32.mxu0 0.0
    %744 = vmatmul.mubr.f32.gmra.mrb[0].mxu0 %v677
    %v745 = vpop.f32.mrb[0].mxu0
    %v746 = vadd.f32 %v382, %v745
    %v747 = vpop.f32.mrb[0].mxu0
    %748 = vdwg.mxu0
    %v749 = vmax.f32 %v746, 0.0
    %v750 = vmul.f32 %v749, %v478
    %v751 = vsel %vm480, %v750, 0.0
    %752 = vadd.xlane.f32.xlu0 %v751
    %v753 = vpop.xlane.xlu0 %752
    %v754 = vadd.f32 %v753, %v487
    %v755 = vtanh.pop %v754
    %v756 = vmul.f32 %v749, %v493
    %v757 = vsel %vm480, %v756, 0.0
    %758 = vadd.xlane.f32.xlu0 %v757
    %v759 = vpop.xlane.xlu0 %758
    %v760 = vadd.f32 %v759, %v487
    %v761 = vtanh.pop %v760
    %763 = vset.pattern.permute.xlu0 0
    %764 = vperm.xlu0 %763, %v489
    %v765 = vpop.permute.xlu0 %764
    %v767 = vmul.f32 %v765, %v185
    %769 = vset.pattern.permute.xlu0 1
    %770 = vperm.xlu0 %769, %v499
    %v771 = vpop.permute.xlu0 %770
    %v773 = vmul.f32 %v771, %v190
    %v774 = vadd.f32 %v767, %v773
    %v775 = vadd.f32 %v774, %v149
    %v776 = vmax.f32 %v775, 0.0
    %v778 = vsel %vm199, %v776, 0
    %780 = vmatprep.subr.mxu0 0.0
    %781 = vmatpush1.msra.mxu0 %v31
    %782 = vmatprep.subr.mxu0 0.0
    %783 = vmatpush1.msra.mxu0 %v32
    %784 = vmatprep.subr.mxu0 0.0
    %785 = vmatpush1.msra.mxu0 %v33
    %786 = vmatprep.subr.mxu0 0.0
    %787 = vmatpush1.msra.mxu0 %v34
    %788 = vmatprep.subr.mxu0 0.0
    %789 = vmatpush1.msra.mxu0 0.0
    %790 = vmatprep.subr.mxu0 0.0
    %791 = vmatpush1.msra.mxu0 0.0
    %792 = vmatprep.subr.mxu0 0.0
    %793 = vmatpush1.msra.mxu0 0.0
    %794 = vmatprep.subr.mxu0 0.0
    %795 = vmatpush1.msra.mxu0 0.0
    %796 = vmatprep.subr.mxu0 0.0
    %797 = vmatpush1.msra.mxu0 0.0
    %798 = vmatprep.subr.mxu0 0.0
    %799 = vmatpush1.msra.mxu0 0.0
    %800 = vmatprep.subr.mxu0 0.0
    %801 = vmatpush1.msra.mxu0 0.0
    %802 = vmatprep.subr.mxu0 0.0
    %803 = vmatpush1.msra.mxu0 0.0
    %804 = vmatprep.subr.mxu0 0.0
    %805 = vmatpush1.msra.mxu0 0.0
    %806 = vmatprep.subr.mxu0 0.0
    %807 = vmatpush1.msra.mxu0 0.0
    %808 = vmatprep.subr.mxu0 0.0
    %809 = vmatpush1.msra.mxu0 0.0
    %810 = vmatprep.subr.mxu0 0.0
    %811 = vmatpush1.msra.mxu0 0.0
    %812 = vmatprep.subr.mxu0 0.0
    %813 = vmatpush1.msra.mxu0 0.0
    %814 = vmatprep.subr.mxu0 0.0
    %815 = vmatpush1.msra.mxu0 0.0
    %816 = vmatprep.subr.mxu0 0.0
    %817 = vmatpush1.msra.mxu0 0.0
    %818 = vmatprep.subr.mxu0 0.0
    %819 = vmatpush1.msra.mxu0 0.0
    %820 = vmatprep.subr.mxu0 0.0
    %821 = vmatpush1.msra.mxu0 0.0
    %822 = vmatprep.subr.mxu0 0.0
    %823 = vmatpush1.msra.mxu0 0.0
    %824 = vmatprep.subr.mxu0 0.0
    %825 = vmatpush1.msra.mxu0 0.0
    %826 = vmatprep.subr.mxu0 0.0
    %827 = vmatpush1.msra.mxu0 0.0
    %828 = vmatprep.subr.mxu0 0.0
    %829 = vmatpush1.msra.mxu0 0.0
    %830 = vmatprep.subr.mxu0 0.0
    %831 = vmatpush1.msra.mxu0 0.0
    %832 = vmatprep.subr.mxu0 0.0
    %833 = vmatpush1.msra.mxu0 0.0
    %834 = vmatprep.subr.mxu0 0.0
    %835 = vmatpush1.msra.mxu0 0.0
    %836 = vmatprep.subr.mxu0 0.0
    %837 = vmatpush1.msra.mxu0 0.0
    %838 = vmatprep.subr.mxu0 0.0
    %839 = vmatpush1.msra.mxu0 0.0
    %840 = vmatprep.subr.mxu0 0.0
    %841 = vmatpush1.msra.mxu0 0.0
    %842 = vmatprep.subr.mxu0 0.0
    %843 = vmatpush1.msra.mxu0 0.0
    %844 = vmatprep.mubr.f32.mxu0 0.0
    %845 = vmatmul.mubr.f32.gmra.mrb[0].mxu0 %v778
    %v846 = vpop.f32.mrb[0].mxu0
    %v847 = vadd.f32 %v198, %v846
    %v848 = vpop.f32.mrb[0].mxu0
    %849 = vdwg.mxu0
    %v850 = vmax.f32 %v847, 0.0
    %851 = vrot.lane.b32.xlu0 %v378, 96
    %v852 = vpop.permute.xlu0 %851
    %v854 = vsel %vm199, %v850, %v852
    %v856 = vsel %vm279, %v854, 0
    %858 = vmatprep.subr.mxu0 0.0
    %859 = vmatpush1.msra.mxu0 %v14
    %860 = vmatprep.subr.mxu0 0.0
    %861 = vmatpush1.msra.mxu0 %v15
    %862 = vmatprep.subr.mxu0 0.0
    %863 = vmatpush1.msra.mxu0 %v16
    %864 = vmatprep.subr.mxu0 0.0
    %865 = vmatpush1.msra.mxu0 %v17
    %866 = vmatprep.subr.mxu0 0.0
    %867 = vmatpush1.msra.mxu0 %v18
    %868 = vmatprep.subr.mxu0 0.0
    %869 = vmatpush1.msra.mxu0 %v19
    %870 = vmatprep.subr.mxu0 0.0
    %871 = vmatpush1.msra.mxu0 %v20
    %872 = vmatprep.subr.mxu0 0.0
    %873 = vmatpush1.msra.mxu0 %v21
    %874 = vmatprep.subr.mxu0 0.0
    %875 = vmatpush1.msra.mxu0 0.0
    %876 = vmatprep.subr.mxu0 0.0
    %877 = vmatpush1.msra.mxu0 0.0
    %878 = vmatprep.subr.mxu0 0.0
    %879 = vmatpush1.msra.mxu0 0.0
    %880 = vmatprep.subr.mxu0 0.0
    %881 = vmatpush1.msra.mxu0 0.0
    %882 = vmatprep.subr.mxu0 0.0
    %883 = vmatpush1.msra.mxu0 0.0
    %884 = vmatprep.subr.mxu0 0.0
    %885 = vmatpush1.msra.mxu0 0.0
    %886 = vmatprep.subr.mxu0 0.0
    %887 = vmatpush1.msra.mxu0 0.0
    %888 = vmatprep.subr.mxu0 0.0
    %889 = vmatpush1.msra.mxu0 0.0
    %890 = vmatprep.subr.mxu0 0.0
    %891 = vmatpush1.msra.mxu0 0.0
    %892 = vmatprep.subr.mxu0 0.0
    %893 = vmatpush1.msra.mxu0 0.0
    %894 = vmatprep.subr.mxu0 0.0
    %895 = vmatpush1.msra.mxu0 0.0
    %896 = vmatprep.subr.mxu0 0.0
    %897 = vmatpush1.msra.mxu0 0.0
    %898 = vmatprep.subr.mxu0 0.0
    %899 = vmatpush1.msra.mxu0 0.0
    %900 = vmatprep.subr.mxu0 0.0
    %901 = vmatpush1.msra.mxu0 0.0
    %902 = vmatprep.subr.mxu0 0.0
    %903 = vmatpush1.msra.mxu0 0.0
    %904 = vmatprep.subr.mxu0 0.0
    %905 = vmatpush1.msra.mxu0 0.0
    %906 = vmatprep.subr.mxu0 0.0
    %907 = vmatpush1.msra.mxu0 0.0
    %908 = vmatprep.subr.mxu0 0.0
    %909 = vmatpush1.msra.mxu0 0.0
    %910 = vmatprep.subr.mxu0 0.0
    %911 = vmatpush1.msra.mxu0 0.0
    %912 = vmatprep.subr.mxu0 0.0
    %913 = vmatpush1.msra.mxu0 0.0
    %914 = vmatprep.subr.mxu0 0.0
    %915 = vmatpush1.msra.mxu0 0.0
    %916 = vmatprep.subr.mxu0 0.0
    %917 = vmatpush1.msra.mxu0 0.0
    %918 = vmatprep.subr.mxu0 0.0
    %919 = vmatpush1.msra.mxu0 0.0
    %920 = vmatprep.subr.mxu0 0.0
    %921 = vmatpush1.msra.mxu0 0.0
    %922 = vmatprep.mubr.f32.mxu0 0.0
    %923 = vmatmul.mubr.f32.gmra.mrb[0].mxu0 %v856
    %v924 = vpop.f32.mrb[0].mxu0
    %v925 = vadd.f32 %v278, %v924
    %v926 = vpop.f32.mrb[0].mxu0
    %927 = vdwg.mxu0
    %v928 = vmul.f32 %v925, 0.5
    %v929 = vtanh.pop %v928
    %v930 = vmul.f32 %v929, 0.5
    %v931 = vadd.f32 %v930, 0.5
    %933 = vrot.lane.b32.xlu0 %v925, 32
    %v934 = vpop.permute.xlu0 %933
    %v936 = vmul.f32 %v931, %v934
    %938 = vrot.lane.b32.xlu0 %v936, 64
    %v939 = vpop.permute.xlu0 %938
    %v941 = vadd.f32 %v925, %v939
    %v942 = vtanh.pop %v941
    %v943 = vsub.f32 %v378, %v942
    %945 = vrot.lane.b32.xlu0 %v943, 96
    %v946 = vpop.permute.xlu0 %945
    %v948 = vmul.f32 %v931, %v946
    %950 = vrot.lane.b32.xlu0 %v948, 32
    %v951 = vpop.permute.xlu0 %950
    %v953 = vadd.f32 %v942, %v951
    %955 = vrot.lane.b32.xlu0 %v953, 64
    %v956 = vpop.permute.xlu0 %955
    %v957 = vsel %vm199, %v956, 0
    %959 = vmatprep.subr.mxu0 0.0
    %960 = vmatpush1.msra.mxu0 %v391
    %961 = vmatprep.subr.mxu0 0.0
    %962 = vmatpush1.msra.mxu0 %v393
    %963 = vmatprep.subr.mxu0 0.0
    %964 = vmatpush1.msra.mxu0 %v395
    %965 = vmatprep.subr.mxu0 0.0
    %966 = vmatpush1.msra.mxu0 %v397
    %967 = vmatprep.subr.mxu0 0.0
    %968 = vmatpush1.msra.mxu0 0.0
    %969 = vmatprep.subr.mxu0 0.0
    %970 = vmatpush1.msra.mxu0 0.0
    %971 = vmatprep.subr.mxu0 0.0
    %972 = vmatpush1.msra.mxu0 0.0
    %973 = vmatprep.subr.mxu0 0.0
    %974 = vmatpush1.msra.mxu0 0.0
    %975 = vmatprep.subr.mxu0 0.0
    %976 = vmatpush1.msra.mxu0 0.0
    %977 = vmatprep.subr.mxu0 0.0
    %978 = vmatpush1.msra.mxu0 0.0
    %979 = vmatprep.subr.mxu0 0.0
    %980 = vmatpush1.msra.mxu0 0.0
    %981 = vmatprep.subr.mxu0 0.0
    %982 = vmatpush1.msra.mxu0 0.0
    %983 = vmatprep.subr.mxu0 0.0
    %984 = vmatpush1.msra.mxu0 0.0
    %985 = vmatprep.subr.mxu0 0.0
    %986 = vmatpush1.msra.mxu0 0.0
    %987 = vmatprep.subr.mxu0 0.0
    %988 = vmatpush1.msra.mxu0 0.0
    %989 = vmatprep.subr.mxu0 0.0
    %990 = vmatpush1.msra.mxu0 0.0
    %991 = vmatprep.subr.mxu0 0.0
    %992 = vmatpush1.msra.mxu0 0.0
    %993 = vmatprep.subr.mxu0 0.0
    %994 = vmatpush1.msra.mxu0 0.0
    %995 = vmatprep.subr.mxu0 0.0
    %996 = vmatpush1.msra.mxu0 0.0
    %997 = vmatprep.subr.mxu0 0.0
    %998 = vmatpush1.msra.mxu0 0.0
    %999 = vmatprep.subr.mxu0 0.0
    %1000 = vmatpush1.msra.mxu0 0.0
    %1001 = vmatprep.subr.mxu0 0.0
    %1002 = vmatpush1.msra.mxu0 0.0
    %1003 = vmatprep.subr.mxu0 0.0
    %1004 = vmatpush1.msra.mxu0 0.0
    %1005 = vmatprep.subr.mxu0 0.0
    %1006 = vmatpush1.msra.mxu0 0.0
    %1007 = vmatprep.subr.mxu0 0.0
    %1008 = vmatpush1.msra.mxu0 0.0
    %1009 = vmatprep.subr.mxu0 0.0
    %1010 = vmatpush1.msra.mxu0 0.0
    %1011 = vmatprep.subr.mxu0 0.0
    %1012 = vmatpush1.msra.mxu0 0.0
    %1013 = vmatprep.subr.mxu0 0.0
    %1014 = vmatpush1.msra.mxu0 0.0
    %1015 = vmatprep.subr.mxu0 0.0
    %1016 = vmatpush1.msra.mxu0 0.0
    %1017 = vmatprep.subr.mxu0 0.0
    %1018 = vmatpush1.msra.mxu0 0.0
    %1019 = vmatprep.subr.mxu0 0.0
    %1020 = vmatpush1.msra.mxu0 0.0
    %1021 = vmatprep.subr.mxu0 0.0
    %1022 = vmatpush1.msra.mxu0 0.0
    %1023 = vmatprep.mubr.f32.mxu0 0.0
    %1024 = vmatmul.mubr.f32.gmra.mrb[0].mxu0 %v957
    %v1025 = vpop.f32.mrb[0].mxu0
    %v1026 = vadd.f32 %v382, %v1025
    %v1027 = vpop.f32.mrb[0].mxu0
    %1028 = vdwg.mxu0
    %v1029 = vmax.f32 %v1026, 0.0
    %v1030 = vmul.f32 %v1029, %v478
    %v1031 = vsel %vm480, %v1030, 0.0
    %1032 = vadd.xlane.f32.xlu0 %v1031
    %v1033 = vpop.xlane.xlu0 %1032
    %v1034 = vadd.f32 %v1033, %v487
    %v1035 = vtanh.pop %v1034
    %v1036 = vmul.f32 %v1029, %v493
    %v1037 = vsel %vm480, %v1036, 0.0
    %1038 = vadd.xlane.f32.xlu0 %v1037
    %v1039 = vpop.xlane.xlu0 %1038
    %v1040 = vadd.f32 %v1039, %v487
    %v1041 = vtanh.pop %v1040
    %1043 = vset.pattern.permute.xlu0 0
    %1044 = vperm.xlu0 %1043, %v755
    %v1045 = vpop.permute.xlu0 %1044
    %v1047 = vmul.f32 %v1045, %v185
    %1049 = vset.pattern.permute.xlu0 1
    %1050 = vperm.xlu0 %1049, %v761
    %v1051 = vpop.permute.xlu0 %1050
    %v1053 = vmul.f32 %v1051, %v190
    %v1054 = vadd.f32 %v1047, %v1053
    %v1056 = vrot.slane %v149, 4
    %v1058 = vadd.f32 %v1054, %v1056
    %v1059 = vmax.f32 %v1058, 0.0
    %v1061 = vsel %vm199, %v1059, 0
    %1063 = vmatprep.subr.mxu0 0.0
    %1064 = vmatpush1.msra.mxu0 %v31
    %1065 = vmatprep.subr.mxu0 0.0
    %1066 = vmatpush1.msra.mxu0 %v32
    %1067 = vmatprep.subr.mxu0 0.0
    %1068 = vmatpush1.msra.mxu0 %v33
    %1069 = vmatprep.subr.mxu0 0.0
    %1070 = vmatpush1.msra.mxu0 %v34
    %1071 = vmatprep.subr.mxu0 0.0
    %1072 = vmatpush1.msra.mxu0 0.0
    %1073 = vmatprep.subr.mxu0 0.0
    %1074 = vmatpush1.msra.mxu0 0.0
    %1075 = vmatprep.subr.mxu0 0.0
    %1076 = vmatpush1.msra.mxu0 0.0
    %1077 = vmatprep.subr.mxu0 0.0
    %1078 = vmatpush1.msra.mxu0 0.0
    %1079 = vmatprep.subr.mxu0 0.0
    %1080 = vmatpush1.msra.mxu0 0.0
    %1081 = vmatprep.subr.mxu0 0.0
    %1082 = vmatpush1.msra.mxu0 0.0
    %1083 = vmatprep.subr.mxu0 0.0
    %1084 = vmatpush1.msra.mxu0 0.0
    %1085 = vmatprep.subr.mxu0 0.0
    %1086 = vmatpush1.msra.mxu0 0.0
    %1087 = vmatprep.subr.mxu0 0.0
    %1088 = vmatpush1.msra.mxu0 0.0
    %1089 = vmatprep.subr.mxu0 0.0
    %1090 = vmatpush1.msra.mxu0 0.0
    %1091 = vmatprep.subr.mxu0 0.0
    %1092 = vmatpush1.msra.mxu0 0.0
    %1093 = vmatprep.subr.mxu0 0.0
    %1094 = vmatpush1.msra.mxu0 0.0
    %1095 = vmatprep.subr.mxu0 0.0
    %1096 = vmatpush1.msra.mxu0 0.0
    %1097 = vmatprep.subr.mxu0 0.0
    %1098 = vmatpush1.msra.mxu0 0.0
    %1099 = vmatprep.subr.mxu0 0.0
    %1100 = vmatpush1.msra.mxu0 0.0
    %1101 = vmatprep.subr.mxu0 0.0
    %1102 = vmatpush1.msra.mxu0 0.0
    %1103 = vmatprep.subr.mxu0 0.0
    %1104 = vmatpush1.msra.mxu0 0.0
    %1105 = vmatprep.subr.mxu0 0.0
    %1106 = vmatpush1.msra.mxu0 0.0
    %1107 = vmatprep.subr.mxu0 0.0
    %1108 = vmatpush1.msra.mxu0 0.0
    %1109 = vmatprep.subr.mxu0 0.0
    %1110 = vmatpush1.msra.mxu0 0.0
    %1111 = vmatprep.subr.mxu0 0.0
    %1112 = vmatpush1.msra.mxu0 0.0
    %1113 = vmatprep.subr.mxu0 0.0
    %1114 = vmatpush1.msra.mxu0 0.0
    %1115 = vmatprep.subr.mxu0 0.0
    %1116 = vmatpush1.msra.mxu0 0.0
    %1117 = vmatprep.subr.mxu0 0.0
    %1118 = vmatpush1.msra.mxu0 0.0
    %1119 = vmatprep.subr.mxu0 0.0
    %1120 = vmatpush1.msra.mxu0 0.0
    %1121 = vmatprep.subr.mxu0 0.0
    %1122 = vmatpush1.msra.mxu0 0.0
    %1123 = vmatprep.subr.mxu0 0.0
    %1124 = vmatpush1.msra.mxu0 0.0
    %1125 = vmatprep.subr.mxu0 0.0
    %1126 = vmatpush1.msra.mxu0 0.0
    %1127 = vmatprep.mubr.f32.mxu0 0.0
    %1128 = vmatmul.mubr.f32.gmra.mrb[0].mxu0 %v1061
    %v1129 = vpop.f32.mrb[0].mxu0
    %v1130 = vadd.f32 %v198, %v1129
    %v1131 = vpop.f32.mrb[0].mxu0
    %1132 = vdwg.mxu0
    %v1133 = vmax.f32 %v1130, 0.0
    %1134 = vrot.lane.b32.xlu0 %v673, 96
    %v1135 = vpop.permute.xlu0 %1134
    %v1137 = vsel %vm199, %v1133, %v1135
    %v1139 = vsel %vm279, %v1137, 0
    %1141 = vmatprep.subr.mxu0 0.0
    %1142 = vmatpush1.msra.mxu0 %v14
    %1143 = vmatprep.subr.mxu0 0.0
    %1144 = vmatpush1.msra.mxu0 %v15
    %1145 = vmatprep.subr.mxu0 0.0
    %1146 = vmatpush1.msra.mxu0 %v16
    %1147 = vmatprep.subr.mxu0 0.0
    %1148 = vmatpush1.msra.mxu0 %v17
    %1149 = vmatprep.subr.mxu0 0.0
    %1150 = vmatpush1.msra.mxu0 %v18
    %1151 = vmatprep.subr.mxu0 0.0
    %1152 = vmatpush1.msra.mxu0 %v19
    %1153 = vmatprep.subr.mxu0 0.0
    %1154 = vmatpush1.msra.mxu0 %v20
    %1155 = vmatprep.subr.mxu0 0.0
    %1156 = vmatpush1.msra.mxu0 %v21
    %1157 = vmatprep.subr.mxu0 0.0
    %1158 = vmatpush1.msra.mxu0 0.0
    %1159 = vmatprep.subr.mxu0 0.0
    %1160 = vmatpush1.msra.mxu0 0.0
    %1161 = vmatprep.subr.mxu0 0.0
    %1162 = vmatpush1.msra.mxu0 0.0
    %1163 = vmatprep.subr.mxu0 0.0
    %1164 = vmatpush1.msra.mxu0 0.0
    %1165 = vmatprep.subr.mxu0 0.0
    %1166 = vmatpush1.msra.mxu0 0.0
    %1167 = vmatprep.subr.mxu0 0.0
    %1168 = vmatpush1.msra.mxu0 0.0
    %1169 = vmatprep.subr.mxu0 0.0
    %1170 = vmatpush1.msra.mxu0 0.0
    %1171 = vmatprep.subr.mxu0 0.0
    %1172 = vmatpush1.msra.mxu0 0.0
    %1173 = vmatprep.subr.mxu0 0.0
    %1174 = vmatpush1.msra.mxu0 0.0
    %1175 = vmatprep.subr.mxu0 0.0
    %1176 = vmatpush1.msra.mxu0 0.0
    %1177 = vmatprep.subr.mxu0 0.0
    %1178 = vmatpush1.msra.mxu0 0.0
    %1179 = vmatprep.subr.mxu0 0.0
    %1180 = vmatpush1.msra.mxu0 0.0
    %1181 = vmatprep.subr.mxu0 0.0
    %1182 = vmatpush1.msra.mxu0 0.0
    %1183 = vmatprep.subr.mxu0 0.0
    %1184 = vmatpush1.msra.mxu0 0.0
    %1185 = vmatprep.subr.mxu0 0.0
    %1186 = vmatpush1.msra.mxu0 0.0
    %1187 = vmatprep.subr.mxu0 0.0
    %1188 = vmatpush1.msra.mxu0 0.0
    %1189 = vmatprep.subr.mxu0 0.0
    %1190 = vmatpush1.msra.mxu0 0.0
    %1191 = vmatprep.subr.mxu0 0.0
    %1192 = vmatpush1.msra.mxu0 0.0
    %1193 = vmatprep.subr.mxu0 0.0
    %1194 = vmatpush1.msra.mxu0 0.0
    %1195 = vmatprep.subr.mxu0 0.0
    %1196 = vmatpush1.msra.mxu0 0.0
    %1197 = vmatprep.subr.mxu0 0.0
    %1198 = vmatpush1.msra.mxu0 0.0
    %1199 = vmatprep.subr.mxu0 0.0
    %1200 = vmatpush1.msra.mxu0 0.0
    %1201 = vmatprep.subr.mxu0 0.0
    %1202 = vmatpush1.msra.mxu0 0.0
    %1203 = vmatprep.subr.mxu0 0.0
    %1204 = vmatpush1.msra.mxu0 0.0
    %1205 = vmatprep.mubr.f32.mxu0 0.0
    %1206 = vmatmul.mubr.f32.gmra.mrb[0].mxu0 %v1139
    %v1207 = vpop.f32.mrb[0].mxu0
    %v1208 = vadd.f32 %v278, %v1207
    %v1209 = vpop.f32.mrb[0].mxu0
    %1210 = vdwg.mxu0
    %v1211 = vmul.f32 %v1208, 0.5
    %v1212 = vtanh.pop %v1211
    %v1213 = vmul.f32 %v1212, 0.5
    %v1214 = vadd.f32 %v1213, 0.5
    %1216 = vrot.lane.b32.xlu0 %v1208, 32
    %v1217 = vpop.permute.xlu0 %1216
    %v1219 = vmul.f32 %v1214, %v1217
    %1221 = vrot.lane.b32.xlu0 %v1219, 64
    %v1222 = vpop.permute.xlu0 %1221
    %v1224 = vadd.f32 %v1208, %v1222
    %v1225 = vtanh.pop %v1224
    %v1226 = vsub.f32 %v673, %v1225
    %1228 = vrot.lane.b32.xlu0 %v1226, 96
    %v1229 = vpop.permute.xlu0 %1228
    %v1231 = vmul.f32 %v1214, %v1229
    %1233 = vrot.lane.b32.xlu0 %v1231, 32
    %v1234 = vpop.permute.xlu0 %1233
    %v1236 = vadd.f32 %v1225, %v1234
    %1238 = vrot.lane.b32.xlu0 %v1236, 64
    %v1239 = vpop.permute.xlu0 %1238
    %v1240 = vsel %vm199, %v1239, 0
    %1242 = vmatprep.subr.mxu0 0.0
    %1243 = vmatpush1.msra.mxu0 %v391
    %1244 = vmatprep.subr.mxu0 0.0
    %1245 = vmatpush1.msra.mxu0 %v393
    %1246 = vmatprep.subr.mxu0 0.0
    %1247 = vmatpush1.msra.mxu0 %v395
    %1248 = vmatprep.subr.mxu0 0.0
    %1249 = vmatpush1.msra.mxu0 %v397
    %1250 = vmatprep.subr.mxu0 0.0
    %1251 = vmatpush1.msra.mxu0 0.0
    %1252 = vmatprep.subr.mxu0 0.0
    %1253 = vmatpush1.msra.mxu0 0.0
    %1254 = vmatprep.subr.mxu0 0.0
    %1255 = vmatpush1.msra.mxu0 0.0
    %1256 = vmatprep.subr.mxu0 0.0
    %1257 = vmatpush1.msra.mxu0 0.0
    %1258 = vmatprep.subr.mxu0 0.0
    %1259 = vmatpush1.msra.mxu0 0.0
    %1260 = vmatprep.subr.mxu0 0.0
    %1261 = vmatpush1.msra.mxu0 0.0
    %1262 = vmatprep.subr.mxu0 0.0
    %1263 = vmatpush1.msra.mxu0 0.0
    %1264 = vmatprep.subr.mxu0 0.0
    %1265 = vmatpush1.msra.mxu0 0.0
    %1266 = vmatprep.subr.mxu0 0.0
    %1267 = vmatpush1.msra.mxu0 0.0
    %1268 = vmatprep.subr.mxu0 0.0
    %1269 = vmatpush1.msra.mxu0 0.0
    %1270 = vmatprep.subr.mxu0 0.0
    %1271 = vmatpush1.msra.mxu0 0.0
    %1272 = vmatprep.subr.mxu0 0.0
    %1273 = vmatpush1.msra.mxu0 0.0
    %1274 = vmatprep.subr.mxu0 0.0
    %1275 = vmatpush1.msra.mxu0 0.0
    %1276 = vmatprep.subr.mxu0 0.0
    %1277 = vmatpush1.msra.mxu0 0.0
    %1278 = vmatprep.subr.mxu0 0.0
    %1279 = vmatpush1.msra.mxu0 0.0
    %1280 = vmatprep.subr.mxu0 0.0
    %1281 = vmatpush1.msra.mxu0 0.0
    %1282 = vmatprep.subr.mxu0 0.0
    %1283 = vmatpush1.msra.mxu0 0.0
    %1284 = vmatprep.subr.mxu0 0.0
    %1285 = vmatpush1.msra.mxu0 0.0
    %1286 = vmatprep.subr.mxu0 0.0
    %1287 = vmatpush1.msra.mxu0 0.0
    %1288 = vmatprep.subr.mxu0 0.0
    %1289 = vmatpush1.msra.mxu0 0.0
    %1290 = vmatprep.subr.mxu0 0.0
    %1291 = vmatpush1.msra.mxu0 0.0
    %1292 = vmatprep.subr.mxu0 0.0
    %1293 = vmatpush1.msra.mxu0 0.0
    %1294 = vmatprep.subr.mxu0 0.0
    %1295 = vmatpush1.msra.mxu0 0.0
    %1296 = vmatprep.subr.mxu0 0.0
    %1297 = vmatpush1.msra.mxu0 0.0
    %1298 = vmatprep.subr.mxu0 0.0
    %1299 = vmatpush1.msra.mxu0 0.0
    %1300 = vmatprep.subr.mxu0 0.0
    %1301 = vmatpush1.msra.mxu0 0.0
    %1302 = vmatprep.subr.mxu0 0.0
    %1303 = vmatpush1.msra.mxu0 0.0
    %1304 = vmatprep.subr.mxu0 0.0
    %1305 = vmatpush1.msra.mxu0 0.0
    %1306 = vmatprep.mubr.f32.mxu0 0.0
    %1307 = vmatmul.mubr.f32.gmra.mrb[0].mxu0 %v1240
    %v1308 = vpop.f32.mrb[0].mxu0
    %v1309 = vadd.f32 %v382, %v1308
    %v1310 = vpop.f32.mrb[0].mxu0
    %1311 = vdwg.mxu0
    %v1312 = vmax.f32 %v1309, 0.0
    %v1313 = vmul.f32 %v1312, %v478
    %v1314 = vsel %vm480, %v1313, 0.0
    %1315 = vadd.xlane.f32.xlu0 %v1314
    %v1316 = vpop.xlane.xlu0 %1315
    %v1317 = vadd.f32 %v1316, %v487
    %v1318 = vtanh.pop %v1317
    %v1319 = vmul.f32 %v1312, %v493
    %v1320 = vsel %vm480, %v1319, 0.0
    %1321 = vadd.xlane.f32.xlu0 %v1320
    %v1322 = vpop.xlane.xlu0 %1321
    %v1323 = vadd.f32 %v1322, %v487
    %v1324 = vtanh.pop %v1323
    %1326 = vset.pattern.permute.xlu0 0
    %1327 = vperm.xlu0 %1326, %v1035
    %v1328 = vpop.permute.xlu0 %1327
    %v1330 = vmul.f32 %v1328, %v185
    %1332 = vset.pattern.permute.xlu0 1
    %1333 = vperm.xlu0 %1332, %v1041
    %v1334 = vpop.permute.xlu0 %1333
    %v1336 = vmul.f32 %v1334, %v190
    %v1337 = vadd.f32 %v1330, %v1336
    %v1338 = vadd.f32 %v1337, %v154
    %v1339 = vmax.f32 %v1338, 0.0
    %v1341 = vsel %vm199, %v1339, 0
    %1343 = vmatprep.subr.mxu0 0.0
    %1344 = vmatpush1.msra.mxu0 %v31
    %1345 = vmatprep.subr.mxu0 0.0
    %1346 = vmatpush1.msra.mxu0 %v32
    %1347 = vmatprep.subr.mxu0 0.0
    %1348 = vmatpush1.msra.mxu0 %v33
    %1349 = vmatprep.subr.mxu0 0.0
    %1350 = vmatpush1.msra.mxu0 %v34
    %1351 = vmatprep.subr.mxu0 0.0
    %1352 = vmatpush1.msra.mxu0 0.0
    %1353 = vmatprep.subr.mxu0 0.0
    %1354 = vmatpush1.msra.mxu0 0.0
    %1355 = vmatprep.subr.mxu0 0.0
    %1356 = vmatpush1.msra.mxu0 0.0
    %1357 = vmatprep.subr.mxu0 0.0
    %1358 = vmatpush1.msra.mxu0 0.0
    %1359 = vmatprep.subr.mxu0 0.0
    %1360 = vmatpush1.msra.mxu0 0.0
    %1361 = vmatprep.subr.mxu0 0.0
    %1362 = vmatpush1.msra.mxu0 0.0
    %1363 = vmatprep.subr.mxu0 0.0
    %1364 = vmatpush1.msra.mxu0 0.0
    %1365 = vmatprep.subr.mxu0 0.0
    %1366 = vmatpush1.msra.mxu0 0.0
    %1367 = vmatprep.subr.mxu0 0.0
    %1368 = vmatpush1.msra.mxu0 0.0
    %1369 = vmatprep.subr.mxu0 0.0
    %1370 = vmatpush1.msra.mxu0 0.0
    %1371 = vmatprep.subr.mxu0 0.0
    %1372 = vmatpush1.msra.mxu0 0.0
    %1373 = vmatprep.subr.mxu0 0.0
    %1374 = vmatpush1.msra.mxu0 0.0
    %1375 = vmatprep.subr.mxu0 0.0
    %1376 = vmatpush1.msra.mxu0 0.0
    %1377 = vmatprep.subr.mxu0 0.0
    %1378 = vmatpush1.msra.mxu0 0.0
    %1379 = vmatprep.subr.mxu0 0.0
    %1380 = vmatpush1.msra.mxu0 0.0
    %1381 = vmatprep.subr.mxu0 0.0
    %1382 = vmatpush1.msra.mxu0 0.0
    %1383 = vmatprep.subr.mxu0 0.0
    %1384 = vmatpush1.msra.mxu0 0.0
    %1385 = vmatprep.subr.mxu0 0.0
    %1386 = vmatpush1.msra.mxu0 0.0
    %1387 = vmatprep.subr.mxu0 0.0
    %1388 = vmatpush1.msra.mxu0 0.0
    %1389 = vmatprep.subr.mxu0 0.0
    %1390 = vmatpush1.msra.mxu0 0.0
    %1391 = vmatprep.subr.mxu0 0.0
    %1392 = vmatpush1.msra.mxu0 0.0
    %1393 = vmatprep.subr.mxu0 0.0
    %1394 = vmatpush1.msra.mxu0 0.0
    %1395 = vmatprep.subr.mxu0 0.0
    %1396 = vmatpush1.msra.mxu0 0.0
    %1397 = vmatprep.subr.mxu0 0.0
    %1398 = vmatpush1.msra.mxu0 0.0
    %1399 = vmatprep.subr.mxu0 0.0
    %1400 = vmatpush1.msra.mxu0 0.0
    %1401 = vmatprep.subr.mxu0 0.0
    %1402 = vmatpush1.msra.mxu0 0.0
    %1403 = vmatprep.subr.mxu0 0.0
    %1404 = vmatpush1.msra.mxu0 0.0
    %1405 = vmatprep.subr.mxu0 0.0
    %1406 = vmatpush1.msra.mxu0 0.0
    %1407 = vmatprep.mubr.f32.mxu0 0.0
    %1408 = vmatmul.mubr.f32.gmra.mrb[0].mxu0 %v1341
    %v1409 = vpop.f32.mrb[0].mxu0
    %v1410 = vadd.f32 %v198, %v1409
    %v1411 = vpop.f32.mrb[0].mxu0
    %1412 = vdwg.mxu0
    %v1413 = vmax.f32 %v1410, 0.0
    %1414 = vrot.lane.b32.xlu0 %v953, 96
    %v1415 = vpop.permute.xlu0 %1414
    %v1417 = vsel %vm199, %v1413, %v1415
    %v1419 = vsel %vm279, %v1417, 0
    %1421 = vmatprep.subr.mxu0 0.0
    %1422 = vmatpush1.msra.mxu0 %v14
    %1423 = vmatprep.subr.mxu0 0.0
    %1424 = vmatpush1.msra.mxu0 %v15
    %1425 = vmatprep.subr.mxu0 0.0
    %1426 = vmatpush1.msra.mxu0 %v16
    %1427 = vmatprep.subr.mxu0 0.0
    %1428 = vmatpush1.msra.mxu0 %v17
    %1429 = vmatprep.subr.mxu0 0.0
    %1430 = vmatpush1.msra.mxu0 %v18
    %1431 = vmatprep.subr.mxu0 0.0
    %1432 = vmatpush1.msra.mxu0 %v19
    %1433 = vmatprep.subr.mxu0 0.0
    %1434 = vmatpush1.msra.mxu0 %v20
    %1435 = vmatprep.subr.mxu0 0.0
    %1436 = vmatpush1.msra.mxu0 %v21
    %1437 = vmatprep.subr.mxu0 0.0
    %1438 = vmatpush1.msra.mxu0 0.0
    %1439 = vmatprep.subr.mxu0 0.0
    %1440 = vmatpush1.msra.mxu0 0.0
    %1441 = vmatprep.subr.mxu0 0.0
    %1442 = vmatpush1.msra.mxu0 0.0
    %1443 = vmatprep.subr.mxu0 0.0
    %1444 = vmatpush1.msra.mxu0 0.0
    %1445 = vmatprep.subr.mxu0 0.0
    %1446 = vmatpush1.msra.mxu0 0.0
    %1447 = vmatprep.subr.mxu0 0.0
    %1448 = vmatpush1.msra.mxu0 0.0
    %1449 = vmatprep.subr.mxu0 0.0
    %1450 = vmatpush1.msra.mxu0 0.0
    %1451 = vmatprep.subr.mxu0 0.0
    %1452 = vmatpush1.msra.mxu0 0.0
    %1453 = vmatprep.subr.mxu0 0.0
    %1454 = vmatpush1.msra.mxu0 0.0
    %1455 = vmatprep.subr.mxu0 0.0
    %1456 = vmatpush1.msra.mxu0 0.0
    %1457 = vmatprep.subr.mxu0 0.0
    %1458 = vmatpush1.msra.mxu0 0.0
    %1459 = vmatprep.subr.mxu0 0.0
    %1460 = vmatpush1.msra.mxu0 0.0
    %1461 = vmatprep.subr.mxu0 0.0
    %1462 = vmatpush1.msra.mxu0 0.0
    %1463 = vmatprep.subr.mxu0 0.0
    %1464 = vmatpush1.msra.mxu0 0.0
    %1465 = vmatprep.subr.mxu0 0.0
    %1466 = vmatpush1.msra.mxu0 0.0
    %1467 = vmatprep.subr.mxu0 0.0
    %1468 = vmatpush1.msra.mxu0 0.0
    %1469 = vmatprep.subr.mxu0 0.0
    %1470 = vmatpush1.msra.mxu0 0.0
    %1471 = vmatprep.subr.mxu0 0.0
    %1472 = vmatpush1.msra.mxu0 0.0
    %1473 = vmatprep.subr.mxu0 0.0
    %1474 = vmatpush1.msra.mxu0 0.0
    %1475 = vmatprep.subr.mxu0 0.0
    %1476 = vmatpush1.msra.mxu0 0.0
    %1477 = vmatprep.subr.mxu0 0.0
    %1478 = vmatpush1.msra.mxu0 0.0
    %1479 = vmatprep.subr.mxu0 0.0
    %1480 = vmatpush1.msra.mxu0 0.0
    %1481 = vmatprep.subr.mxu0 0.0
    %1482 = vmatpush1.msra.mxu0 0.0
    %1483 = vmatprep.subr.mxu0 0.0
    %1484 = vmatpush1.msra.mxu0 0.0
    %1485 = vmatprep.mubr.f32.mxu0 0.0
    %1486 = vmatmul.mubr.f32.gmra.mrb[0].mxu0 %v1419
    %v1487 = vpop.f32.mrb[0].mxu0
    %v1488 = vadd.f32 %v278, %v1487
    %v1489 = vpop.f32.mrb[0].mxu0
    %1490 = vdwg.mxu0
    %v1491 = vmul.f32 %v1488, 0.5
    %v1492 = vtanh.pop %v1491
    %v1493 = vmul.f32 %v1492, 0.5
    %v1494 = vadd.f32 %v1493, 0.5
    %1496 = vrot.lane.b32.xlu0 %v1488, 32
    %v1497 = vpop.permute.xlu0 %1496
    %v1499 = vmul.f32 %v1494, %v1497
    %1501 = vrot.lane.b32.xlu0 %v1499, 64
    %v1502 = vpop.permute.xlu0 %1501
    %v1504 = vadd.f32 %v1488, %v1502
    %v1505 = vtanh.pop %v1504
    %v1506 = vsub.f32 %v953, %v1505
    %1508 = vrot.lane.b32.xlu0 %v1506, 96
    %v1509 = vpop.permute.xlu0 %1508
    %v1511 = vmul.f32 %v1494, %v1509
    %1513 = vrot.lane.b32.xlu0 %v1511, 32
    %v1514 = vpop.permute.xlu0 %1513
    %v1516 = vadd.f32 %v1505, %v1514
    %1518 = vrot.lane.b32.xlu0 %v1516, 64
    %v1519 = vpop.permute.xlu0 %1518
    %v1520 = vsel %vm199, %v1519, 0
    %1522 = vmatprep.subr.mxu0 0.0
    %1523 = vmatpush1.msra.mxu0 %v391
    %1524 = vmatprep.subr.mxu0 0.0
    %1525 = vmatpush1.msra.mxu0 %v393
    %1526 = vmatprep.subr.mxu0 0.0
    %1527 = vmatpush1.msra.mxu0 %v395
    %1528 = vmatprep.subr.mxu0 0.0
    %1529 = vmatpush1.msra.mxu0 %v397
    %1530 = vmatprep.subr.mxu0 0.0
    %1531 = vmatpush1.msra.mxu0 0.0
    %1532 = vmatprep.subr.mxu0 0.0
    %1533 = vmatpush1.msra.mxu0 0.0
    %1534 = vmatprep.subr.mxu0 0.0
    %1535 = vmatpush1.msra.mxu0 0.0
    %1536 = vmatprep.subr.mxu0 0.0
    %1537 = vmatpush1.msra.mxu0 0.0
    %1538 = vmatprep.subr.mxu0 0.0
    %1539 = vmatpush1.msra.mxu0 0.0
    %1540 = vmatprep.subr.mxu0 0.0
    %1541 = vmatpush1.msra.mxu0 0.0
    %1542 = vmatprep.subr.mxu0 0.0
    %1543 = vmatpush1.msra.mxu0 0.0
    %1544 = vmatprep.subr.mxu0 0.0
    %1545 = vmatpush1.msra.mxu0 0.0
    %1546 = vmatprep.subr.mxu0 0.0
    %1547 = vmatpush1.msra.mxu0 0.0
    %1548 = vmatprep.subr.mxu0 0.0
    %1549 = vmatpush1.msra.mxu0 0.0
    %1550 = vmatprep.subr.mxu0 0.0
    %1551 = vmatpush1.msra.mxu0 0.0
    %1552 = vmatprep.subr.mxu0 0.0
    %1553 = vmatpush1.msra.mxu0 0.0
    %1554 = vmatprep.subr.mxu0 0.0
    %1555 = vmatpush1.msra.mxu0 0.0
    %1556 = vmatprep.subr.mxu0 0.0
    %1557 = vmatpush1.msra.mxu0 0.0
    %1558 = vmatprep.subr.mxu0 0.0
    %1559 = vmatpush1.msra.mxu0 0.0
    %1560 = vmatprep.subr.mxu0 0.0
    %1561 = vmatpush1.msra.mxu0 0.0
    %1562 = vmatprep.subr.mxu0 0.0
    %1563 = vmatpush1.msra.mxu0 0.0
    %1564 = vmatprep.subr.mxu0 0.0
    %1565 = vmatpush1.msra.mxu0 0.0
    %1566 = vmatprep.subr.mxu0 0.0
    %1567 = vmatpush1.msra.mxu0 0.0
    %1568 = vmatprep.subr.mxu0 0.0
    %1569 = vmatpush1.msra.mxu0 0.0
    %1570 = vmatprep.subr.mxu0 0.0
    %1571 = vmatpush1.msra.mxu0 0.0
    %1572 = vmatprep.subr.mxu0 0.0
    %1573 = vmatpush1.msra.mxu0 0.0
    %1574 = vmatprep.subr.mxu0 0.0
    %1575 = vmatpush1.msra.mxu0 0.0
    %1576 = vmatprep.subr.mxu0 0.0
    %1577 = vmatpush1.msra.mxu0 0.0
    %1578 = vmatprep.subr.mxu0 0.0
    %1579 = vmatpush1.msra.mxu0 0.0
    %1580 = vmatprep.subr.mxu0 0.0
    %1581 = vmatpush1.msra.mxu0 0.0
    %1582 = vmatprep.subr.mxu0 0.0
    %1583 = vmatpush1.msra.mxu0 0.0
    %1584 = vmatprep.subr.mxu0 0.0
    %1585 = vmatpush1.msra.mxu0 0.0
    %1586 = vmatprep.mubr.f32.mxu0 0.0
    %1587 = vmatmul.mubr.f32.gmra.mrb[0].mxu0 %v1520
    %v1588 = vpop.f32.mrb[0].mxu0
    %v1589 = vadd.f32 %v382, %v1588
    %v1590 = vpop.f32.mrb[0].mxu0
    %1591 = vdwg.mxu0
    %v1592 = vmax.f32 %v1589, 0.0
    %v1593 = vmul.f32 %v1592, %v478
    %v1594 = vsel %vm480, %v1593, 0.0
    %1595 = vadd.xlane.f32.xlu0 %v1594
    %v1596 = vpop.xlane.xlu0 %1595
    %v1597 = vadd.f32 %v1596, %v487
    %v1598 = vtanh.pop %v1597
    %v1599 = vmul.f32 %v1592, %v493
    %v1600 = vsel %vm480, %v1599, 0.0
    %1601 = vadd.xlane.f32.xlu0 %v1600
    %v1602 = vpop.xlane.xlu0 %1601
    %v1603 = vadd.f32 %v1602, %v487
    %v1604 = vtanh.pop %v1603
    %1606 = vset.pattern.permute.xlu0 0
    %1607 = vperm.xlu0 %1606, %v1318
    %v1608 = vpop.permute.xlu0 %1607
    %v1610 = vmul.f32 %v1608, %v185
    %1612 = vset.pattern.permute.xlu0 1
    %1613 = vperm.xlu0 %1612, %v1324
    %v1614 = vpop.permute.xlu0 %1613
    %v1616 = vmul.f32 %v1614, %v190
    %v1617 = vadd.f32 %v1610, %v1616
    %v1619 = vrot.slane %v154, 4
    %v1621 = vadd.f32 %v1617, %v1619
    %v1622 = vmax.f32 %v1621, 0.0
    %v1624 = vsel %vm199, %v1622, 0
    %1626 = vmatprep.subr.mxu0 0.0
    %1627 = vmatpush1.msra.mxu0 %v31
    %1628 = vmatprep.subr.mxu0 0.0
    %1629 = vmatpush1.msra.mxu0 %v32
    %1630 = vmatprep.subr.mxu0 0.0
    %1631 = vmatpush1.msra.mxu0 %v33
    %1632 = vmatprep.subr.mxu0 0.0
    %1633 = vmatpush1.msra.mxu0 %v34
    %1634 = vmatprep.subr.mxu0 0.0
    %1635 = vmatpush1.msra.mxu0 0.0
    %1636 = vmatprep.subr.mxu0 0.0
    %1637 = vmatpush1.msra.mxu0 0.0
    %1638 = vmatprep.subr.mxu0 0.0
    %1639 = vmatpush1.msra.mxu0 0.0
    %1640 = vmatprep.subr.mxu0 0.0
    %1641 = vmatpush1.msra.mxu0 0.0
    %1642 = vmatprep.subr.mxu0 0.0
    %1643 = vmatpush1.msra.mxu0 0.0
    %1644 = vmatprep.subr.mxu0 0.0
    %1645 = vmatpush1.msra.mxu0 0.0
    %1646 = vmatprep.subr.mxu0 0.0
    %1647 = vmatpush1.msra.mxu0 0.0
    %1648 = vmatprep.subr.mxu0 0.0
    %1649 = vmatpush1.msra.mxu0 0.0
    %1650 = vmatprep.subr.mxu0 0.0
    %1651 = vmatpush1.msra.mxu0 0.0
    %1652 = vmatprep.subr.mxu0 0.0
    %1653 = vmatpush1.msra.mxu0 0.0
    %1654 = vmatprep.subr.mxu0 0.0
    %1655 = vmatpush1.msra.mxu0 0.0
    %1656 = vmatprep.subr.mxu0 0.0
    %1657 = vmatpush1.msra.mxu0 0.0
    %1658 = vmatprep.subr.mxu0 0.0
    %1659 = vmatpush1.msra.mxu0 0.0
    %1660 = vmatprep.subr.mxu0 0.0
    %1661 = vmatpush1.msra.mxu0 0.0
    %1662 = vmatprep.subr.mxu0 0.0
    %1663 = vmatpush1.msra.mxu0 0.0
    %1664 = vmatprep.subr.mxu0 0.0
    %1665 = vmatpush1.msra.mxu0 0.0
    %1666 = vmatprep.subr.mxu0 0.0
    %1667 = vmatpush1.msra.mxu0 0.0
    %1668 = vmatprep.subr.mxu0 0.0
    %1669 = vmatpush1.msra.mxu0 0.0
    %1670 = vmatprep.subr.mxu0 0.0
    %1671 = vmatpush1.msra.mxu0 0.0
    %1672 = vmatprep.subr.mxu0 0.0
    %1673 = vmatpush1.msra.mxu0 0.0
    %1674 = vmatprep.subr.mxu0 0.0
    %1675 = vmatpush1.msra.mxu0 0.0
    %1676 = vmatprep.subr.mxu0 0.0
    %1677 = vmatpush1.msra.mxu0 0.0
    %1678 = vmatprep.subr.mxu0 0.0
    %1679 = vmatpush1.msra.mxu0 0.0
    %1680 = vmatprep.subr.mxu0 0.0
    %1681 = vmatpush1.msra.mxu0 0.0
    %1682 = vmatprep.subr.mxu0 0.0
    %1683 = vmatpush1.msra.mxu0 0.0
    %1684 = vmatprep.subr.mxu0 0.0
    %1685 = vmatpush1.msra.mxu0 0.0
    %1686 = vmatprep.subr.mxu0 0.0
    %1687 = vmatpush1.msra.mxu0 0.0
    %1688 = vmatprep.subr.mxu0 0.0
    %1689 = vmatpush1.msra.mxu0 0.0
    %1690 = vmatprep.mubr.f32.mxu0 0.0
    %1691 = vmatmul.mubr.f32.gmra.mrb[0].mxu0 %v1624
    %v1692 = vpop.f32.mrb[0].mxu0
    %v1693 = vadd.f32 %v198, %v1692
    %v1694 = vpop.f32.mrb[0].mxu0
    %1695 = vdwg.mxu0
    %v1696 = vmax.f32 %v1693, 0.0
    %1697 = vrot.lane.b32.xlu0 %v1236, 96
    %v1698 = vpop.permute.xlu0 %1697
    %v1700 = vsel %vm199, %v1696, %v1698
    %v1702 = vsel %vm279, %v1700, 0
    %1704 = vmatprep.subr.mxu0 0.0
    %1705 = vmatpush1.msra.mxu0 %v14
    %1706 = vmatprep.subr.mxu0 0.0
    %1707 = vmatpush1.msra.mxu0 %v15
    %1708 = vmatprep.subr.mxu0 0.0
    %1709 = vmatpush1.msra.mxu0 %v16
    %1710 = vmatprep.subr.mxu0 0.0
    %1711 = vmatpush1.msra.mxu0 %v17
    %1712 = vmatprep.subr.mxu0 0.0
    %1713 = vmatpush1.msra.mxu0 %v18
    %1714 = vmatprep.subr.mxu0 0.0
    %1715 = vmatpush1.msra.mxu0 %v19
    %1716 = vmatprep.subr.mxu0 0.0
    %1717 = vmatpush1.msra.mxu0 %v20
    %1718 = vmatprep.subr.mxu0 0.0
    %1719 = vmatpush1.msra.mxu0 %v21
    %1720 = vmatprep.subr.mxu0 0.0
    %1721 = vmatpush1.msra.mxu0 0.0
    %1722 = vmatprep.subr.mxu0 0.0
    %1723 = vmatpush1.msra.mxu0 0.0
    %1724 = vmatprep.subr.mxu0 0.0
    %1725 = vmatpush1.msra.mxu0 0.0
    %1726 = vmatprep.subr.mxu0 0.0
    %1727 = vmatpush1.msra.mxu0 0.0
    %1728 = vmatprep.subr.mxu0 0.0
    %1729 = vmatpush1.msra.mxu0 0.0
    %1730 = vmatprep.subr.mxu0 0.0
    %1731 = vmatpush1.msra.mxu0 0.0
    %1732 = vmatprep.subr.mxu0 0.0
    %1733 = vmatpush1.msra.mxu0 0.0
    %1734 = vmatprep.subr.mxu0 0.0
    %1735 = vmatpush1.msra.mxu0 0.0
    %1736 = vmatprep.subr.mxu0 0.0
    %1737 = vmatpush1.msra.mxu0 0.0
    %1738 = vmatprep.subr.mxu0 0.0
    %1739 = vmatpush1.msra.mxu0 0.0
    %1740 = vmatprep.subr.mxu0 0.0
    %1741 = vmatpush1.msra.mxu0 0.0
    %1742 = vmatprep.subr.mxu0 0.0
    %1743 = vmatpush1.msra.mxu0 0.0
    %1744 = vmatprep.subr.mxu0 0.0
    %1745 = vmatpush1.msra.mxu0 0.0
    %1746 = vmatprep.subr.mxu0 0.0
    %1747 = vmatpush1.msra.mxu0 0.0
    %1748 = vmatprep.subr.mxu0 0.0
    %1749 = vmatpush1.msra.mxu0 0.0
    %1750 = vmatprep.subr.mxu0 0.0
    %1751 = vmatpush1.msra.mxu0 0.0
    %1752 = vmatprep.subr.mxu0 0.0
    %1753 = vmatpush1.msra.mxu0 0.0
    %1754 = vmatprep.subr.mxu0 0.0
    %1755 = vmatpush1.msra.mxu0 0.0
    %1756 = vmatprep.subr.mxu0 0.0
    %1757 = vmatpush1.msra.mxu0 0.0
    %1758 = vmatprep.subr.mxu0 0.0
    %1759 = vmatpush1.msra.mxu0 0.0
    %1760 = vmatprep.subr.mxu0 0.0
    %1761 = vmatpush1.msra.mxu0 0.0
    %1762 = vmatprep.subr.mxu0 0.0
    %1763 = vmatpush1.msra.mxu0 0.0
    %1764 = vmatprep.subr.mxu0 0.0
    %1765 = vmatpush1.msra.mxu0 0.0
    %1766 = vmatprep.subr.mxu0 0.0
    %1767 = vmatpush1.msra.mxu0 0.0
    %1768 = vmatprep.mubr.f32.mxu0 0.0
    %1769 = vmatmul.mubr.f32.gmra.mrb[0].mxu0 %v1702
    %v1770 = vpop.f32.mrb[0].mxu0
    %v1771 = vadd.f32 %v278, %v1770
    %v1772 = vpop.f32.mrb[0].mxu0
    %1773 = vdwg.mxu0
    %v1774 = vmul.f32 %v1771, 0.5
    %v1775 = vtanh.pop %v1774
    %v1776 = vmul.f32 %v1775, 0.5
    %v1777 = vadd.f32 %v1776, 0.5
    %1779 = vrot.lane.b32.xlu0 %v1771, 32
    %v1780 = vpop.permute.xlu0 %1779
    %v1782 = vmul.f32 %v1777, %v1780
    %1784 = vrot.lane.b32.xlu0 %v1782, 64
    %v1785 = vpop.permute.xlu0 %1784
    %v1787 = vadd.f32 %v1771, %v1785
    %v1788 = vtanh.pop %v1787
    %v1789 = vsub.f32 %v1236, %v1788
    %1791 = vrot.lane.b32.xlu0 %v1789, 96
    %v1792 = vpop.permute.xlu0 %1791
    %v1794 = vmul.f32 %v1777, %v1792
    %1796 = vrot.lane.b32.xlu0 %v1794, 32
    %v1797 = vpop.permute.xlu0 %1796
    %v1799 = vadd.f32 %v1788, %v1797
    %1801 = vrot.lane.b32.xlu0 %v1799, 64
    %v1802 = vpop.permute.xlu0 %1801
    %v1803 = vsel %vm199, %v1802, 0
    %1805 = vmatprep.subr.mxu0 0.0
    %1806 = vmatpush1.msra.mxu0 %v391
    %1807 = vmatprep.subr.mxu0 0.0
    %1808 = vmatpush1.msra.mxu0 %v393
    %1809 = vmatprep.subr.mxu0 0.0
    %1810 = vmatpush1.msra.mxu0 %v395
    %1811 = vmatprep.subr.mxu0 0.0
    %1812 = vmatpush1.msra.mxu0 %v397
    %1813 = vmatprep.subr.mxu0 0.0
    %1814 = vmatpush1.msra.mxu0 0.0
    %1815 = vmatprep.subr.mxu0 0.0
    %1816 = vmatpush1.msra.mxu0 0.0
    %1817 = vmatprep.subr.mxu0 0.0
    %1818 = vmatpush1.msra.mxu0 0.0
    %1819 = vmatprep.subr.mxu0 0.0
    %1820 = vmatpush1.msra.mxu0 0.0
    %1821 = vmatprep.subr.mxu0 0.0
    %1822 = vmatpush1.msra.mxu0 0.0
    %1823 = vmatprep.subr.mxu0 0.0
    %1824 = vmatpush1.msra.mxu0 0.0
    %1825 = vmatprep.subr.mxu0 0.0
    %1826 = vmatpush1.msra.mxu0 0.0
    %1827 = vmatprep.subr.mxu0 0.0
    %1828 = vmatpush1.msra.mxu0 0.0
    %1829 = vmatprep.subr.mxu0 0.0
    %1830 = vmatpush1.msra.mxu0 0.0
    %1831 = vmatprep.subr.mxu0 0.0
    %1832 = vmatpush1.msra.mxu0 0.0
    %1833 = vmatprep.subr.mxu0 0.0
    %1834 = vmatpush1.msra.mxu0 0.0
    %1835 = vmatprep.subr.mxu0 0.0
    %1836 = vmatpush1.msra.mxu0 0.0
    %1837 = vmatprep.subr.mxu0 0.0
    %1838 = vmatpush1.msra.mxu0 0.0
    %1839 = vmatprep.subr.mxu0 0.0
    %1840 = vmatpush1.msra.mxu0 0.0
    %1841 = vmatprep.subr.mxu0 0.0
    %1842 = vmatpush1.msra.mxu0 0.0
    %1843 = vmatprep.subr.mxu0 0.0
    %1844 = vmatpush1.msra.mxu0 0.0
    %1845 = vmatprep.subr.mxu0 0.0
    %1846 = vmatpush1.msra.mxu0 0.0
    %1847 = vmatprep.subr.mxu0 0.0
    %1848 = vmatpush1.msra.mxu0 0.0
    %1849 = vmatprep.subr.mxu0 0.0
    %1850 = vmatpush1.msra.mxu0 0.0
    %1851 = vmatprep.subr.mxu0 0.0
    %1852 = vmatpush1.msra.mxu0 0.0
    %1853 = vmatprep.subr.mxu0 0.0
    %1854 = vmatpush1.msra.mxu0 0.0
    %1855 = vmatprep.subr.mxu0 0.0
    %1856 = vmatpush1.msra.mxu0 0.0
    %1857 = vmatprep.subr.mxu0 0.0
    %1858 = vmatpush1.msra.mxu0 0.0
    %1859 = vmatprep.subr.mxu0 0.0
    %1860 = vmatpush1.msra.mxu0 0.0
    %1861 = vmatprep.subr.mxu0 0.0
    %1862 = vmatpush1.msra.mxu0 0.0
    %1863 = vmatprep.subr.mxu0 0.0
    %1864 = vmatpush1.msra.mxu0 0.0
    %1865 = vmatprep.subr.mxu0 0.0
    %1866 = vmatpush1.msra.mxu0 0.0
    %1867 = vmatprep.subr.mxu0 0.0
    %1868 = vmatpush1.msra.mxu0 0.0
    %1869 = vmatprep.mubr.f32.mxu0 0.0
    %1870 = vmatmul.mubr.f32.gmra.mrb[0].mxu0 %v1803
    %v1871 = vpop.f32.mrb[0].mxu0
    %v1872 = vadd.f32 %v382, %v1871
    %v1873 = vpop.f32.mrb[0].mxu0
    %1874 = vdwg.mxu0
    %v1875 = vmax.f32 %v1872, 0.0
    %v1876 = vmul.f32 %v1875, %v478
    %v1877 = vsel %vm480, %v1876, 0.0
    %1878 = vadd.xlane.f32.xlu0 %v1877
    %v1879 = vpop.xlane.xlu0 %1878
    %v1880 = vadd.f32 %v1879, %v487
    %v1881 = vtanh.pop %v1880
    %v1882 = vmul.f32 %v1875, %v493
    %v1883 = vsel %vm480, %v1882, 0.0
    %1884 = vadd.xlane.f32.xlu0 %v1883
    %v1885 = vpop.xlane.xlu0 %1884
    %v1886 = vadd.f32 %v1885, %v487
    %v1887 = vtanh.pop %v1886
    %1889 = vset.pattern.permute.xlu0 0
    %1890 = vperm.xlu0 %1889, %v1598
    %v1891 = vpop.permute.xlu0 %1890
    %v1893 = vmul.f32 %v1891, %v185
    %1895 = vset.pattern.permute.xlu0 1
    %1896 = vperm.xlu0 %1895, %v1604
    %v1897 = vpop.permute.xlu0 %1896
    %v1899 = vmul.f32 %v1897, %v190
    %v1900 = vadd.f32 %v1893, %v1899
    %v1901 = vadd.f32 %v1900, %v159
    %v1902 = vmax.f32 %v1901, 0.0
    %v1904 = vsel %vm199, %v1902, 0
    %1906 = vmatprep.subr.mxu0 0.0
    %1907 = vmatpush1.msra.mxu0 %v31
    %1908 = vmatprep.subr.mxu0 0.0
    %1909 = vmatpush1.msra.mxu0 %v32
    %1910 = vmatprep.subr.mxu0 0.0
    %1911 = vmatpush1.msra.mxu0 %v33
    %1912 = vmatprep.subr.mxu0 0.0
    %1913 = vmatpush1.msra.mxu0 %v34
    %1914 = vmatprep.subr.mxu0 0.0
    %1915 = vmatpush1.msra.mxu0 0.0
    %1916 = vmatprep.subr.mxu0 0.0
    %1917 = vmatpush1.msra.mxu0 0.0
    %1918 = vmatprep.subr.mxu0 0.0
    %1919 = vmatpush1.msra.mxu0 0.0
    %1920 = vmatprep.subr.mxu0 0.0
    %1921 = vmatpush1.msra.mxu0 0.0
    %1922 = vmatprep.subr.mxu0 0.0
    %1923 = vmatpush1.msra.mxu0 0.0
    %1924 = vmatprep.subr.mxu0 0.0
    %1925 = vmatpush1.msra.mxu0 0.0
    %1926 = vmatprep.subr.mxu0 0.0
    %1927 = vmatpush1.msra.mxu0 0.0
    %1928 = vmatprep.subr.mxu0 0.0
    %1929 = vmatpush1.msra.mxu0 0.0
    %1930 = vmatprep.subr.mxu0 0.0
    %1931 = vmatpush1.msra.mxu0 0.0
    %1932 = vmatprep.subr.mxu0 0.0
    %1933 = vmatpush1.msra.mxu0 0.0
    %1934 = vmatprep.subr.mxu0 0.0
    %1935 = vmatpush1.msra.mxu0 0.0
    %1936 = vmatprep.subr.mxu0 0.0
    %1937 = vmatpush1.msra.mxu0 0.0
    %1938 = vmatprep.subr.mxu0 0.0
    %1939 = vmatpush1.msra.mxu0 0.0
    %1940 = vmatprep.subr.mxu0 0.0
    %1941 = vmatpush1.msra.mxu0 0.0
    %1942 = vmatprep.subr.mxu0 0.0
    %1943 = vmatpush1.msra.mxu0 0.0
    %1944 = vmatprep.subr.mxu0 0.0
    %1945 = vmatpush1.msra.mxu0 0.0
    %1946 = vmatprep.subr.mxu0 0.0
    %1947 = vmatpush1.msra.mxu0 0.0
    %1948 = vmatprep.subr.mxu0 0.0
    %1949 = vmatpush1.msra.mxu0 0.0
    %1950 = vmatprep.subr.mxu0 0.0
    %1951 = vmatpush1.msra.mxu0 0.0
    %1952 = vmatprep.subr.mxu0 0.0
    %1953 = vmatpush1.msra.mxu0 0.0
    %1954 = vmatprep.subr.mxu0 0.0
    %1955 = vmatpush1.msra.mxu0 0.0
    %1956 = vmatprep.subr.mxu0 0.0
    %1957 = vmatpush1.msra.mxu0 0.0
    %1958 = vmatprep.subr.mxu0 0.0
    %1959 = vmatpush1.msra.mxu0 0.0
    %1960 = vmatprep.subr.mxu0 0.0
    %1961 = vmatpush1.msra.mxu0 0.0
    %1962 = vmatprep.subr.mxu0 0.0
    %1963 = vmatpush1.msra.mxu0 0.0
    %1964 = vmatprep.subr.mxu0 0.0
    %1965 = vmatpush1.msra.mxu0 0.0
    %1966 = vmatprep.subr.mxu0 0.0
    %1967 = vmatpush1.msra.mxu0 0.0
    %1968 = vmatprep.subr.mxu0 0.0
    %1969 = vmatpush1.msra.mxu0 0.0
    %1970 = vmatprep.mubr.f32.mxu0 0.0
    %1971 = vmatmul.mubr.f32.gmra.mrb[0].mxu0 %v1904
    %v1972 = vpop.f32.mrb[0].mxu0
    %v1973 = vadd.f32 %v198, %v1972
    %v1974 = vpop.f32.mrb[0].mxu0
    %1975 = vdwg.mxu0
    %v1976 = vmax.f32 %v1973, 0.0
    %1977 = vrot.lane.b32.xlu0 %v1516, 96
    %v1978 = vpop.permute.xlu0 %1977
    %v1980 = vsel %vm199, %v1976, %v1978
    %v1982 = vsel %vm279, %v1980, 0
    %1984 = vmatprep.subr.mxu0 0.0
    %1985 = vmatpush1.msra.mxu0 %v14
    %1986 = vmatprep.subr.mxu0 0.0
    %1987 = vmatpush1.msra.mxu0 %v15
    %1988 = vmatprep.subr.mxu0 0.0
    %1989 = vmatpush1.msra.mxu0 %v16
    %1990 = vmatprep.subr.mxu0 0.0
    %1991 = vmatpush1.msra.mxu0 %v17
    %1992 = vmatprep.subr.mxu0 0.0
    %1993 = vmatpush1.msra.mxu0 %v18
    %1994 = vmatprep.subr.mxu0 0.0
    %1995 = vmatpush1.msra.mxu0 %v19
    %1996 = vmatprep.subr.mxu0 0.0
    %1997 = vmatpush1.msra.mxu0 %v20
    %1998 = vmatprep.subr.mxu0 0.0
    %1999 = vmatpush1.msra.mxu0 %v21
    %2000 = vmatprep.subr.mxu0 0.0
    %2001 = vmatpush1.msra.mxu0 0.0
    %2002 = vmatprep.subr.mxu0 0.0
    %2003 = vmatpush1.msra.mxu0 0.0
    %2004 = vmatprep.subr.mxu0 0.0
    %2005 = vmatpush1.msra.mxu0 0.0
    %2006 = vmatprep.subr.mxu0 0.0
    %2007 = vmatpush1.msra.mxu0 0.0
    %2008 = vmatprep.subr.mxu0 0.0
    %2009 = vmatpush1.msra.mxu0 0.0
    %2010 = vmatprep.subr.mxu0 0.0
    %2011 = vmatpush1.msra.mxu0 0.0
    %2012 = vmatprep.subr.mxu0 0.0
    %2013 = vmatpush1.msra.mxu0 0.0
    %2014 = vmatprep.subr.mxu0 0.0
    %2015 = vmatpush1.msra.mxu0 0.0
    %2016 = vmatprep.subr.mxu0 0.0
    %2017 = vmatpush1.msra.mxu0 0.0
    %2018 = vmatprep.subr.mxu0 0.0
    %2019 = vmatpush1.msra.mxu0 0.0
    %2020 = vmatprep.subr.mxu0 0.0
    %2021 = vmatpush1.msra.mxu0 0.0
    %2022 = vmatprep.subr.mxu0 0.0
    %2023 = vmatpush1.msra.mxu0 0.0
    %2024 = vmatprep.subr.mxu0 0.0
    %2025 = vmatpush1.msra.mxu0 0.0
    %2026 = vmatprep.subr.mxu0 0.0
    %2027 = vmatpush1.msra.mxu0 0.0
    %2028 = vmatprep.subr.mxu0 0.0
    %2029 = vmatpush1.msra.mxu0 0.0
    %2030 = vmatprep.subr.mxu0 0.0
    %2031 = vmatpush1.msra.mxu0 0.0
    %2032 = vmatprep.subr.mxu0 0.0
    %2033 = vmatpush1.msra.mxu0 0.0
    %2034 = vmatprep.subr.mxu0 0.0
    %2035 = vmatpush1.msra.mxu0 0.0
    %2036 = vmatprep.subr.mxu0 0.0
    %2037 = vmatpush1.msra.mxu0 0.0
    %2038 = vmatprep.subr.mxu0 0.0
    %2039 = vmatpush1.msra.mxu0 0.0
    %2040 = vmatprep.subr.mxu0 0.0
    %2041 = vmatpush1.msra.mxu0 0.0
    %2042 = vmatprep.subr.mxu0 0.0
    %2043 = vmatpush1.msra.mxu0 0.0
    %2044 = vmatprep.subr.mxu0 0.0
    %2045 = vmatpush1.msra.mxu0 0.0
    %2046 = vmatprep.subr.mxu0 0.0
    %2047 = vmatpush1.msra.mxu0 0.0
    %2048 = vmatprep.mubr.f32.mxu0 0.0
    %2049 = vmatmul.mubr.f32.gmra.mrb[0].mxu0 %v1982
    %v2050 = vpop.f32.mrb[0].mxu0
    %v2051 = vadd.f32 %v278, %v2050
    %v2052 = vpop.f32.mrb[0].mxu0
    %2053 = vdwg.mxu0
    %v2054 = vmul.f32 %v2051, 0.5
    %v2055 = vtanh.pop %v2054
    %v2056 = vmul.f32 %v2055, 0.5
    %v2057 = vadd.f32 %v2056, 0.5
    %2059 = vrot.lane.b32.xlu0 %v2051, 32
    %v2060 = vpop.permute.xlu0 %2059
    %v2062 = vmul.f32 %v2057, %v2060
    %2064 = vrot.lane.b32.xlu0 %v2062, 64
    %v2065 = vpop.permute.xlu0 %2064
    %v2067 = vadd.f32 %v2051, %v2065
    %v2068 = vtanh.pop %v2067
    %v2069 = vsub.f32 %v1516, %v2068
    %2071 = vrot.lane.b32.xlu0 %v2069, 96
    %v2072 = vpop.permute.xlu0 %2071
    %v2074 = vmul.f32 %v2057, %v2072
    %2076 = vrot.lane.b32.xlu0 %v2074, 32
    %v2077 = vpop.permute.xlu0 %2076
    %v2079 = vadd.f32 %v2068, %v2077
    %2081 = vrot.lane.b32.xlu0 %v2079, 64
    %v2082 = vpop.permute.xlu0 %2081
    %v2083 = vsel %vm199, %v2082, 0
    %2085 = vmatprep.subr.mxu0 0.0
    %2086 = vmatpush1.msra.mxu0 %v391
    %2087 = vmatprep.subr.mxu0 0.0
    %2088 = vmatpush1.msra.mxu0 %v393
    %2089 = vmatprep.subr.mxu0 0.0
    %2090 = vmatpush1.msra.mxu0 %v395
    %2091 = vmatprep.subr.mxu0 0.0
    %2092 = vmatpush1.msra.mxu0 %v397
    %2093 = vmatprep.subr.mxu0 0.0
    %2094 = vmatpush1.msra.mxu0 0.0
    %2095 = vmatprep.subr.mxu0 0.0
    %2096 = vmatpush1.msra.mxu0 0.0
    %2097 = vmatprep.subr.mxu0 0.0
    %2098 = vmatpush1.msra.mxu0 0.0
    %2099 = vmatprep.subr.mxu0 0.0
    %2100 = vmatpush1.msra.mxu0 0.0
    %2101 = vmatprep.subr.mxu0 0.0
    %2102 = vmatpush1.msra.mxu0 0.0
    %2103 = vmatprep.subr.mxu0 0.0
    %2104 = vmatpush1.msra.mxu0 0.0
    %2105 = vmatprep.subr.mxu0 0.0
    %2106 = vmatpush1.msra.mxu0 0.0
    %2107 = vmatprep.subr.mxu0 0.0
    %2108 = vmatpush1.msra.mxu0 0.0
    %2109 = vmatprep.subr.mxu0 0.0
    %2110 = vmatpush1.msra.mxu0 0.0
    %2111 = vmatprep.subr.mxu0 0.0
    %2112 = vmatpush1.msra.mxu0 0.0
    %2113 = vmatprep.subr.mxu0 0.0
    %2114 = vmatpush1.msra.mxu0 0.0
    %2115 = vmatprep.subr.mxu0 0.0
    %2116 = vmatpush1.msra.mxu0 0.0
    %2117 = vmatprep.subr.mxu0 0.0
    %2118 = vmatpush1.msra.mxu0 0.0
    %2119 = vmatprep.subr.mxu0 0.0
    %2120 = vmatpush1.msra.mxu0 0.0
    %2121 = vmatprep.subr.mxu0 0.0
    %2122 = vmatpush1.msra.mxu0 0.0
    %2123 = vmatprep.subr.mxu0 0.0
    %2124 = vmatpush1.msra.mxu0 0.0
    %2125 = vmatprep.subr.mxu0 0.0
    %2126 = vmatpush1.msra.mxu0 0.0
    %2127 = vmatprep.subr.mxu0 0.0
    %2128 = vmatpush1.msra.mxu0 0.0
    %2129 = vmatprep.subr.mxu0 0.0
    %2130 = vmatpush1.msra.mxu0 0.0
    %2131 = vmatprep.subr.mxu0 0.0
    %2132 = vmatpush1.msra.mxu0 0.0
    %2133 = vmatprep.subr.mxu0 0.0
    %2134 = vmatpush1.msra.mxu0 0.0
    %2135 = vmatprep.subr.mxu0 0.0
    %2136 = vmatpush1.msra.mxu0 0.0
    %2137 = vmatprep.subr.mxu0 0.0
    %2138 = vmatpush1.msra.mxu0 0.0
    %2139 = vmatprep.subr.mxu0 0.0
    %2140 = vmatpush1.msra.mxu0 0.0
    %2141 = vmatprep.subr.mxu0 0.0
    %2142 = vmatpush1.msra.mxu0 0.0
    %2143 = vmatprep.subr.mxu0 0.0
    %2144 = vmatpush1.msra.mxu0 0.0
    %2145 = vmatprep.subr.mxu0 0.0
    %2146 = vmatpush1.msra.mxu0 0.0
    %2147 = vmatprep.subr.mxu0 0.0
    %2148 = vmatpush1.msra.mxu0 0.0
    %2149 = vmatprep.mubr.f32.mxu0 0.0
    %2150 = vmatmul.mubr.f32.gmra.mrb[0].mxu0 %v2083
    %v2151 = vpop.f32.mrb[0].mxu0
    %v2152 = vadd.f32 %v382, %v2151
    %v2153 = vpop.f32.mrb[0].mxu0
    %2154 = vdwg.mxu0
    %v2155 = vmax.f32 %v2152, 0.0
    %v2156 = vmul.f32 %v2155, %v478
    %v2157 = vsel %vm480, %v2156, 0.0
    %2158 = vadd.xlane.f32.xlu0 %v2157
    %v2159 = vpop.xlane.xlu0 %2158
    %v2160 = vadd.f32 %v2159, %v487
    %v2161 = vtanh.pop %v2160
    %v2162 = vmul.f32 %v2155, %v493
    %v2163 = vsel %vm480, %v2162, 0.0
    %2164 = vadd.xlane.f32.xlu0 %v2163
    %v2165 = vpop.xlane.xlu0 %2164
    %v2166 = vadd.f32 %v2165, %v487
    %v2167 = vtanh.pop %v2166
    %2169 = vset.pattern.permute.xlu0 0
    %2170 = vperm.xlu0 %2169, %v1881
    %v2171 = vpop.permute.xlu0 %2170
    %v2173 = vmul.f32 %v2171, %v185
    %2175 = vset.pattern.permute.xlu0 1
    %2176 = vperm.xlu0 %2175, %v1887
    %v2177 = vpop.permute.xlu0 %2176
    %v2179 = vmul.f32 %v2177, %v190
    %v2180 = vadd.f32 %v2173, %v2179
    %v2182 = vrot.slane %v159, 4
    %v2184 = vadd.f32 %v2180, %v2182
    %v2185 = vmax.f32 %v2184, 0.0
    %v2187 = vsel %vm199, %v2185, 0
    %2189 = vmatprep.subr.mxu0 0.0
    %2190 = vmatpush1.msra.mxu0 %v31
    %2191 = vmatprep.subr.mxu0 0.0
    %2192 = vmatpush1.msra.mxu0 %v32
    %2193 = vmatprep.subr.mxu0 0.0
    %2194 = vmatpush1.msra.mxu0 %v33
    %2195 = vmatprep.subr.mxu0 0.0
    %2196 = vmatpush1.msra.mxu0 %v34
    %2197 = vmatprep.subr.mxu0 0.0
    %2198 = vmatpush1.msra.mxu0 0.0
    %2199 = vmatprep.subr.mxu0 0.0
    %2200 = vmatpush1.msra.mxu0 0.0
    %2201 = vmatprep.subr.mxu0 0.0
    %2202 = vmatpush1.msra.mxu0 0.0
    %2203 = vmatprep.subr.mxu0 0.0
    %2204 = vmatpush1.msra.mxu0 0.0
    %2205 = vmatprep.subr.mxu0 0.0
    %2206 = vmatpush1.msra.mxu0 0.0
    %2207 = vmatprep.subr.mxu0 0.0
    %2208 = vmatpush1.msra.mxu0 0.0
    %2209 = vmatprep.subr.mxu0 0.0
    %2210 = vmatpush1.msra.mxu0 0.0
    %2211 = vmatprep.subr.mxu0 0.0
    %2212 = vmatpush1.msra.mxu0 0.0
    %2213 = vmatprep.subr.mxu0 0.0
    %2214 = vmatpush1.msra.mxu0 0.0
    %2215 = vmatprep.subr.mxu0 0.0
    %2216 = vmatpush1.msra.mxu0 0.0
    %2217 = vmatprep.subr.mxu0 0.0
    %2218 = vmatpush1.msra.mxu0 0.0
    %2219 = vmatprep.subr.mxu0 0.0
    %2220 = vmatpush1.msra.mxu0 0.0
    %2221 = vmatprep.subr.mxu0 0.0
    %2222 = vmatpush1.msra.mxu0 0.0
    %2223 = vmatprep.subr.mxu0 0.0
    %2224 = vmatpush1.msra.mxu0 0.0
    %2225 = vmatprep.subr.mxu0 0.0
    %2226 = vmatpush1.msra.mxu0 0.0
    %2227 = vmatprep.subr.mxu0 0.0
    %2228 = vmatpush1.msra.mxu0 0.0
    %2229 = vmatprep.subr.mxu0 0.0
    %2230 = vmatpush1.msra.mxu0 0.0
    %2231 = vmatprep.subr.mxu0 0.0
    %2232 = vmatpush1.msra.mxu0 0.0
    %2233 = vmatprep.subr.mxu0 0.0
    %2234 = vmatpush1.msra.mxu0 0.0
    %2235 = vmatprep.subr.mxu0 0.0
    %2236 = vmatpush1.msra.mxu0 0.0
    %2237 = vmatprep.subr.mxu0 0.0
    %2238 = vmatpush1.msra.mxu0 0.0
    %2239 = vmatprep.subr.mxu0 0.0
    %2240 = vmatpush1.msra.mxu0 0.0
    %2241 = vmatprep.subr.mxu0 0.0
    %2242 = vmatpush1.msra.mxu0 0.0
    %2243 = vmatprep.subr.mxu0 0.0
    %2244 = vmatpush1.msra.mxu0 0.0
    %2245 = vmatprep.subr.mxu0 0.0
    %2246 = vmatpush1.msra.mxu0 0.0
    %2247 = vmatprep.subr.mxu0 0.0
    %2248 = vmatpush1.msra.mxu0 0.0
    %2249 = vmatprep.subr.mxu0 0.0
    %2250 = vmatpush1.msra.mxu0 0.0
    %2251 = vmatprep.subr.mxu0 0.0
    %2252 = vmatpush1.msra.mxu0 0.0
    %2253 = vmatprep.mubr.f32.mxu0 0.0
    %2254 = vmatmul.mubr.f32.gmra.mrb[0].mxu0 %v2187
    %v2255 = vpop.f32.mrb[0].mxu0
    %v2256 = vadd.f32 %v198, %v2255
    %v2257 = vpop.f32.mrb[0].mxu0
    %2258 = vdwg.mxu0
    %v2259 = vmax.f32 %v2256, 0.0
    %2260 = vrot.lane.b32.xlu0 %v1799, 96
    %v2261 = vpop.permute.xlu0 %2260
    %v2263 = vsel %vm199, %v2259, %v2261
    %v2265 = vsel %vm279, %v2263, 0
    %2267 = vmatprep.subr.mxu0 0.0
    %2268 = vmatpush1.msra.mxu0 %v14
    %2269 = vmatprep.subr.mxu0 0.0
    %2270 = vmatpush1.msra.mxu0 %v15
    %2271 = vmatprep.subr.mxu0 0.0
    %2272 = vmatpush1.msra.mxu0 %v16
    %2273 = vmatprep.subr.mxu0 0.0
    %2274 = vmatpush1.msra.mxu0 %v17
    %2275 = vmatprep.subr.mxu0 0.0
    %2276 = vmatpush1.msra.mxu0 %v18
    %2277 = vmatprep.subr.mxu0 0.0
    %2278 = vmatpush1.msra.mxu0 %v19
    %2279 = vmatprep.subr.mxu0 0.0
    %2280 = vmatpush1.msra.mxu0 %v20
    %2281 = vmatprep.subr.mxu0 0.0
    %2282 = vmatpush1.msra.mxu0 %v21
    %2283 = vmatprep.subr.mxu0 0.0
    %2284 = vmatpush1.msra.mxu0 0.0
    %2285 = vmatprep.subr.mxu0 0.0
    %2286 = vmatpush1.msra.mxu0 0.0
    %2287 = vmatprep.subr.mxu0 0.0
    %2288 = vmatpush1.msra.mxu0 0.0
    %2289 = vmatprep.subr.mxu0 0.0
    %2290 = vmatpush1.msra.mxu0 0.0
    %2291 = vmatprep.subr.mxu0 0.0
    %2292 = vmatpush1.msra.mxu0 0.0
    %2293 = vmatprep.subr.mxu0 0.0
    %2294 = vmatpush1.msra.mxu0 0.0
    %2295 = vmatprep.subr.mxu0 0.0
    %2296 = vmatpush1.msra.mxu0 0.0
    %2297 = vmatprep.subr.mxu0 0.0
    %2298 = vmatpush1.msra.mxu0 0.0
    %2299 = vmatprep.subr.mxu0 0.0
    %2300 = vmatpush1.msra.mxu0 0.0
    %2301 = vmatprep.subr.mxu0 0.0
    %2302 = vmatpush1.msra.mxu0 0.0
    %2303 = vmatprep.subr.mxu0 0.0
    %2304 = vmatpush1.msra.mxu0 0.0
    %2305 = vmatprep.subr.mxu0 0.0
    %2306 = vmatpush1.msra.mxu0 0.0
    %2307 = vmatprep.subr.mxu0 0.0
    %2308 = vmatpush1.msra.mxu0 0.0
    %2309 = vmatprep.subr.mxu0 0.0
    %2310 = vmatpush1.msra.mxu0 0.0
    %2311 = vmatprep.subr.mxu0 0.0
    %2312 = vmatpush1.msra.mxu0 0.0
    %2313 = vmatprep.subr.mxu0 0.0
    %2314 = vmatpush1.msra.mxu0 0.0
    %2315 = vmatprep.subr.mxu0 0.0
    %2316 = vmatpush1.msra.mxu0 0.0
    %2317 = vmatprep.subr.mxu0 0.0
    %2318 = vmatpush1.msra.mxu0 0.0
    %2319 = vmatprep.subr.mxu0 0.0
    %2320 = vmatpush1.msra.mxu0 0.0
    %2321 = vmatprep.subr.mxu0 0.0
    %2322 = vmatpush1.msra.mxu0 0.0
    %2323 = vmatprep.subr.mxu0 0.0
    %2324 = vmatpush1.msra.mxu0 0.0
    %2325 = vmatprep.subr.mxu0 0.0
    %2326 = vmatpush1.msra.mxu0 0.0
    %2327 = vmatprep.subr.mxu0 0.0
    %2328 = vmatpush1.msra.mxu0 0.0
    %2329 = vmatprep.subr.mxu0 0.0
    %2330 = vmatpush1.msra.mxu0 0.0
    %2331 = vmatprep.mubr.f32.mxu0 0.0
    %2332 = vmatmul.mubr.f32.gmra.mrb[0].mxu0 %v2265
    %v2333 = vpop.f32.mrb[0].mxu0
    %v2334 = vadd.f32 %v278, %v2333
    %v2335 = vpop.f32.mrb[0].mxu0
    %2336 = vdwg.mxu0
    %v2337 = vmul.f32 %v2334, 0.5
    %v2338 = vtanh.pop %v2337
    %v2339 = vmul.f32 %v2338, 0.5
    %v2340 = vadd.f32 %v2339, 0.5
    %2342 = vrot.lane.b32.xlu0 %v2334, 32
    %v2343 = vpop.permute.xlu0 %2342
    %v2345 = vmul.f32 %v2340, %v2343
    %2347 = vrot.lane.b32.xlu0 %v2345, 64
    %v2348 = vpop.permute.xlu0 %2347
    %v2350 = vadd.f32 %v2334, %v2348
    %v2351 = vtanh.pop %v2350
    %v2352 = vsub.f32 %v1799, %v2351
    %2354 = vrot.lane.b32.xlu0 %v2352, 96
    %v2355 = vpop.permute.xlu0 %2354
    %v2357 = vmul.f32 %v2340, %v2355
    %2359 = vrot.lane.b32.xlu0 %v2357, 32
    %v2360 = vpop.permute.xlu0 %2359
    %v2362 = vadd.f32 %v2351, %v2360
    %2364 = vrot.lane.b32.xlu0 %v2362, 64
    %v2365 = vpop.permute.xlu0 %2364
    %v2366 = vsel %vm199, %v2365, 0
    %2368 = vmatprep.subr.mxu0 0.0
    %2369 = vmatpush1.msra.mxu0 %v391
    %2370 = vmatprep.subr.mxu0 0.0
    %2371 = vmatpush1.msra.mxu0 %v393
    %2372 = vmatprep.subr.mxu0 0.0
    %2373 = vmatpush1.msra.mxu0 %v395
    %2374 = vmatprep.subr.mxu0 0.0
    %2375 = vmatpush1.msra.mxu0 %v397
    %2376 = vmatprep.subr.mxu0 0.0
    %2377 = vmatpush1.msra.mxu0 0.0
    %2378 = vmatprep.subr.mxu0 0.0
    %2379 = vmatpush1.msra.mxu0 0.0
    %2380 = vmatprep.subr.mxu0 0.0
    %2381 = vmatpush1.msra.mxu0 0.0
    %2382 = vmatprep.subr.mxu0 0.0
    %2383 = vmatpush1.msra.mxu0 0.0
    %2384 = vmatprep.subr.mxu0 0.0
    %2385 = vmatpush1.msra.mxu0 0.0
    %2386 = vmatprep.subr.mxu0 0.0
    %2387 = vmatpush1.msra.mxu0 0.0
    %2388 = vmatprep.subr.mxu0 0.0
    %2389 = vmatpush1.msra.mxu0 0.0
    %2390 = vmatprep.subr.mxu0 0.0
    %2391 = vmatpush1.msra.mxu0 0.0
    %2392 = vmatprep.subr.mxu0 0.0
    %2393 = vmatpush1.msra.mxu0 0.0
    %2394 = vmatprep.subr.mxu0 0.0
    %2395 = vmatpush1.msra.mxu0 0.0
    %2396 = vmatprep.subr.mxu0 0.0
    %2397 = vmatpush1.msra.mxu0 0.0
    %2398 = vmatprep.subr.mxu0 0.0
    %2399 = vmatpush1.msra.mxu0 0.0
    %2400 = vmatprep.subr.mxu0 0.0
    %2401 = vmatpush1.msra.mxu0 0.0
    %2402 = vmatprep.subr.mxu0 0.0
    %2403 = vmatpush1.msra.mxu0 0.0
    %2404 = vmatprep.subr.mxu0 0.0
    %2405 = vmatpush1.msra.mxu0 0.0
    %2406 = vmatprep.subr.mxu0 0.0
    %2407 = vmatpush1.msra.mxu0 0.0
    %2408 = vmatprep.subr.mxu0 0.0
    %2409 = vmatpush1.msra.mxu0 0.0
    %2410 = vmatprep.subr.mxu0 0.0
    %2411 = vmatpush1.msra.mxu0 0.0
    %2412 = vmatprep.subr.mxu0 0.0
    %2413 = vmatpush1.msra.mxu0 0.0
    %2414 = vmatprep.subr.mxu0 0.0
    %2415 = vmatpush1.msra.mxu0 0.0
    %2416 = vmatprep.subr.mxu0 0.0
    %2417 = vmatpush1.msra.mxu0 0.0
    %2418 = vmatprep.subr.mxu0 0.0
    %2419 = vmatpush1.msra.mxu0 0.0
    %2420 = vmatprep.subr.mxu0 0.0
    %2421 = vmatpush1.msra.mxu0 0.0
    %2422 = vmatprep.subr.mxu0 0.0
    %2423 = vmatpush1.msra.mxu0 0.0
    %2424 = vmatprep.subr.mxu0 0.0
    %2425 = vmatpush1.msra.mxu0 0.0
    %2426 = vmatprep.subr.mxu0 0.0
    %2427 = vmatpush1.msra.mxu0 0.0
    %2428 = vmatprep.subr.mxu0 0.0
    %2429 = vmatpush1.msra.mxu0 0.0
    %2430 = vmatprep.subr.mxu0 0.0
    %2431 = vmatpush1.msra.mxu0 0.0
    %2432 = vmatprep.mubr.f32.mxu0 0.0
    %2433 = vmatmul.mubr.f32.gmra.mrb[0].mxu0 %v2366
    %v2434 = vpop.f32.mrb[0].mxu0
    %v2435 = vadd.f32 %v382, %v2434
    %v2436 = vpop.f32.mrb[0].mxu0
    %2437 = vdwg.mxu0
    %v2438 = vmax.f32 %v2435, 0.0
    %v2439 = vmul.f32 %v2438, %v478
    %v2440 = vsel %vm480, %v2439, 0.0
    %2441 = vadd.xlane.f32.xlu0 %v2440
    %v2442 = vpop.xlane.xlu0 %2441
    %v2443 = vadd.f32 %v2442, %v487
    %v2444 = vtanh.pop %v2443
    %v2445 = vmul.f32 %v2438, %v493
    %v2446 = vsel %vm480, %v2445, 0.0
    %2447 = vadd.xlane.f32.xlu0 %v2446
    %v2448 = vpop.xlane.xlu0 %2447
    %v2449 = vadd.f32 %v2448, %v487
    %v2450 = vtanh.pop %v2449
    %2452 = vset.pattern.permute.xlu0 0
    %2453 = vperm.xlu0 %2452, %v2161
    %v2454 = vpop.permute.xlu0 %2453
    %v2456 = vmul.f32 %v2454, %v185
    %2458 = vset.pattern.permute.xlu0 1
    %2459 = vperm.xlu0 %2458, %v2167
    %v2460 = vpop.permute.xlu0 %2459
    %v2462 = vmul.f32 %v2460, %v190
    %v2463 = vadd.f32 %v2456, %v2462
    %v2464 = vadd.f32 %v2463, %v164
    %v2465 = vmax.f32 %v2464, 0.0
    %v2467 = vsel %vm199, %v2465, 0
    %2469 = vmatprep.subr.mxu0 0.0
    %2470 = vmatpush1.msra.mxu0 %v31
    %2471 = vmatprep.subr.mxu0 0.0
    %2472 = vmatpush1.msra.mxu0 %v32
    %2473 = vmatprep.subr.mxu0 0.0
    %2474 = vmatpush1.msra.mxu0 %v33
    %2475 = vmatprep.subr.mxu0 0.0
    %2476 = vmatpush1.msra.mxu0 %v34
    %2477 = vmatprep.subr.mxu0 0.0
    %2478 = vmatpush1.msra.mxu0 0.0
    %2479 = vmatprep.subr.mxu0 0.0
    %2480 = vmatpush1.msra.mxu0 0.0
    %2481 = vmatprep.subr.mxu0 0.0
    %2482 = vmatpush1.msra.mxu0 0.0
    %2483 = vmatprep.subr.mxu0 0.0
    %2484 = vmatpush1.msra.mxu0 0.0
    %2485 = vmatprep.subr.mxu0 0.0
    %2486 = vmatpush1.msra.mxu0 0.0
    %2487 = vmatprep.subr.mxu0 0.0
    %2488 = vmatpush1.msra.mxu0 0.0
    %2489 = vmatprep.subr.mxu0 0.0
    %2490 = vmatpush1.msra.mxu0 0.0
    %2491 = vmatprep.subr.mxu0 0.0
    %2492 = vmatpush1.msra.mxu0 0.0
    %2493 = vmatprep.subr.mxu0 0.0
    %2494 = vmatpush1.msra.mxu0 0.0
    %2495 = vmatprep.subr.mxu0 0.0
    %2496 = vmatpush1.msra.mxu0 0.0
    %2497 = vmatprep.subr.mxu0 0.0
    %2498 = vmatpush1.msra.mxu0 0.0
    %2499 = vmatprep.subr.mxu0 0.0
    %2500 = vmatpush1.msra.mxu0 0.0
    %2501 = vmatprep.subr.mxu0 0.0
    %2502 = vmatpush1.msra.mxu0 0.0
    %2503 = vmatprep.subr.mxu0 0.0
    %2504 = vmatpush1.msra.mxu0 0.0
    %2505 = vmatprep.subr.mxu0 0.0
    %2506 = vmatpush1.msra.mxu0 0.0
    %2507 = vmatprep.subr.mxu0 0.0
    %2508 = vmatpush1.msra.mxu0 0.0
    %2509 = vmatprep.subr.mxu0 0.0
    %2510 = vmatpush1.msra.mxu0 0.0
    %2511 = vmatprep.subr.mxu0 0.0
    %2512 = vmatpush1.msra.mxu0 0.0
    %2513 = vmatprep.subr.mxu0 0.0
    %2514 = vmatpush1.msra.mxu0 0.0
    %2515 = vmatprep.subr.mxu0 0.0
    %2516 = vmatpush1.msra.mxu0 0.0
    %2517 = vmatprep.subr.mxu0 0.0
    %2518 = vmatpush1.msra.mxu0 0.0
    %2519 = vmatprep.subr.mxu0 0.0
    %2520 = vmatpush1.msra.mxu0 0.0
    %2521 = vmatprep.subr.mxu0 0.0
    %2522 = vmatpush1.msra.mxu0 0.0
    %2523 = vmatprep.subr.mxu0 0.0
    %2524 = vmatpush1.msra.mxu0 0.0
    %2525 = vmatprep.subr.mxu0 0.0
    %2526 = vmatpush1.msra.mxu0 0.0
    %2527 = vmatprep.subr.mxu0 0.0
    %2528 = vmatpush1.msra.mxu0 0.0
    %2529 = vmatprep.subr.mxu0 0.0
    %2530 = vmatpush1.msra.mxu0 0.0
    %2531 = vmatprep.subr.mxu0 0.0
    %2532 = vmatpush1.msra.mxu0 0.0
    %2533 = vmatprep.mubr.f32.mxu0 0.0
    %2534 = vmatmul.mubr.f32.gmra.mrb[0].mxu0 %v2467
    %v2535 = vpop.f32.mrb[0].mxu0
    %v2536 = vadd.f32 %v198, %v2535
    %v2537 = vpop.f32.mrb[0].mxu0
    %2538 = vdwg.mxu0
    %v2539 = vmax.f32 %v2536, 0.0
    %2540 = vrot.lane.b32.xlu0 %v2079, 96
    %v2541 = vpop.permute.xlu0 %2540
    %v2543 = vsel %vm199, %v2539, %v2541
    %v2545 = vsel %vm279, %v2543, 0
    %2547 = vmatprep.subr.mxu0 0.0
    %2548 = vmatpush1.msra.mxu0 %v14
    %2549 = vmatprep.subr.mxu0 0.0
    %2550 = vmatpush1.msra.mxu0 %v15
    %2551 = vmatprep.subr.mxu0 0.0
    %2552 = vmatpush1.msra.mxu0 %v16
    %2553 = vmatprep.subr.mxu0 0.0
    %2554 = vmatpush1.msra.mxu0 %v17
    %2555 = vmatprep.subr.mxu0 0.0
    %2556 = vmatpush1.msra.mxu0 %v18
    %2557 = vmatprep.subr.mxu0 0.0
    %2558 = vmatpush1.msra.mxu0 %v19
    %2559 = vmatprep.subr.mxu0 0.0
    %2560 = vmatpush1.msra.mxu0 %v20
    %2561 = vmatprep.subr.mxu0 0.0
    %2562 = vmatpush1.msra.mxu0 %v21
    %2563 = vmatprep.subr.mxu0 0.0
    %2564 = vmatpush1.msra.mxu0 0.0
    %2565 = vmatprep.subr.mxu0 0.0
    %2566 = vmatpush1.msra.mxu0 0.0
    %2567 = vmatprep.subr.mxu0 0.0
    %2568 = vmatpush1.msra.mxu0 0.0
    %2569 = vmatprep.subr.mxu0 0.0
    %2570 = vmatpush1.msra.mxu0 0.0
    %2571 = vmatprep.subr.mxu0 0.0
    %2572 = vmatpush1.msra.mxu0 0.0
    %2573 = vmatprep.subr.mxu0 0.0
    %2574 = vmatpush1.msra.mxu0 0.0
    %2575 = vmatprep.subr.mxu0 0.0
    %2576 = vmatpush1.msra.mxu0 0.0
    %2577 = vmatprep.subr.mxu0 0.0
    %2578 = vmatpush1.msra.mxu0 0.0
    %2579 = vmatprep.subr.mxu0 0.0
    %2580 = vmatpush1.msra.mxu0 0.0
    %2581 = vmatprep.subr.mxu0 0.0
    %2582 = vmatpush1.msra.mxu0 0.0
    %2583 = vmatprep.subr.mxu0 0.0
    %2584 = vmatpush1.msra.mxu0 0.0
    %2585 = vmatprep.subr.mxu0 0.0
    %2586 = vmatpush1.msra.mxu0 0.0
    %2587 = vmatprep.subr.mxu0 0.0
    %2588 = vmatpush1.msra.mxu0 0.0
    %2589 = vmatprep.subr.mxu0 0.0
    %2590 = vmatpush1.msra.mxu0 0.0
    %2591 = vmatprep.subr.mxu0 0.0
    %2592 = vmatpush1.msra.mxu0 0.0
    %2593 = vmatprep.subr.mxu0 0.0
    %2594 = vmatpush1.msra.mxu0 0.0
    %2595 = vmatprep.subr.mxu0 0.0
    %2596 = vmatpush1.msra.mxu0 0.0
    %2597 = vmatprep.subr.mxu0 0.0
    %2598 = vmatpush1.msra.mxu0 0.0
    %2599 = vmatprep.subr.mxu0 0.0
    %2600 = vmatpush1.msra.mxu0 0.0
    %2601 = vmatprep.subr.mxu0 0.0
    %2602 = vmatpush1.msra.mxu0 0.0
    %2603 = vmatprep.subr.mxu0 0.0
    %2604 = vmatpush1.msra.mxu0 0.0
    %2605 = vmatprep.subr.mxu0 0.0
    %2606 = vmatpush1.msra.mxu0 0.0
    %2607 = vmatprep.subr.mxu0 0.0
    %2608 = vmatpush1.msra.mxu0 0.0
    %2609 = vmatprep.subr.mxu0 0.0
    %2610 = vmatpush1.msra.mxu0 0.0
    %2611 = vmatprep.mubr.f32.mxu0 0.0
    %2612 = vmatmul.mubr.f32.gmra.mrb[0].mxu0 %v2545
    %v2613 = vpop.f32.mrb[0].mxu0
    %v2614 = vadd.f32 %v278, %v2613
    %v2615 = vpop.f32.mrb[0].mxu0
    %2616 = vdwg.mxu0
    %v2617 = vmul.f32 %v2614, 0.5
    %v2618 = vtanh.pop %v2617
    %v2619 = vmul.f32 %v2618, 0.5
    %v2620 = vadd.f32 %v2619, 0.5
    %2622 = vrot.lane.b32.xlu0 %v2614, 32
    %v2623 = vpop.permute.xlu0 %2622
    %v2625 = vmul.f32 %v2620, %v2623
    %2627 = vrot.lane.b32.xlu0 %v2625, 64
    %v2628 = vpop.permute.xlu0 %2627
    %v2630 = vadd.f32 %v2614, %v2628
    %v2631 = vtanh.pop %v2630
    %v2632 = vsub.f32 %v2079, %v2631
    %2634 = vrot.lane.b32.xlu0 %v2632, 96
    %v2635 = vpop.permute.xlu0 %2634
    %v2637 = vmul.f32 %v2620, %v2635
    %2639 = vrot.lane.b32.xlu0 %v2637, 32
    %v2640 = vpop.permute.xlu0 %2639
    %v2642 = vadd.f32 %v2631, %v2640
    %2644 = vrot.lane.b32.xlu0 %v2642, 64
    %v2645 = vpop.permute.xlu0 %2644
    %v2646 = vsel %vm199, %v2645, 0
    %2648 = vmatprep.subr.mxu0 0.0
    %2649 = vmatpush1.msra.mxu0 %v391
    %2650 = vmatprep.subr.mxu0 0.0
    %2651 = vmatpush1.msra.mxu0 %v393
    %2652 = vmatprep.subr.mxu0 0.0
    %2653 = vmatpush1.msra.mxu0 %v395
    %2654 = vmatprep.subr.mxu0 0.0
    %2655 = vmatpush1.msra.mxu0 %v397
    %2656 = vmatprep.subr.mxu0 0.0
    %2657 = vmatpush1.msra.mxu0 0.0
    %2658 = vmatprep.subr.mxu0 0.0
    %2659 = vmatpush1.msra.mxu0 0.0
    %2660 = vmatprep.subr.mxu0 0.0
    %2661 = vmatpush1.msra.mxu0 0.0
    %2662 = vmatprep.subr.mxu0 0.0
    %2663 = vmatpush1.msra.mxu0 0.0
    %2664 = vmatprep.subr.mxu0 0.0
    %2665 = vmatpush1.msra.mxu0 0.0
    %2666 = vmatprep.subr.mxu0 0.0
    %2667 = vmatpush1.msra.mxu0 0.0
    %2668 = vmatprep.subr.mxu0 0.0
    %2669 = vmatpush1.msra.mxu0 0.0
    %2670 = vmatprep.subr.mxu0 0.0
    %2671 = vmatpush1.msra.mxu0 0.0
    %2672 = vmatprep.subr.mxu0 0.0
    %2673 = vmatpush1.msra.mxu0 0.0
    %2674 = vmatprep.subr.mxu0 0.0
    %2675 = vmatpush1.msra.mxu0 0.0
    %2676 = vmatprep.subr.mxu0 0.0
    %2677 = vmatpush1.msra.mxu0 0.0
    %2678 = vmatprep.subr.mxu0 0.0
    %2679 = vmatpush1.msra.mxu0 0.0
    %2680 = vmatprep.subr.mxu0 0.0
    %2681 = vmatpush1.msra.mxu0 0.0
    %2682 = vmatprep.subr.mxu0 0.0
    %2683 = vmatpush1.msra.mxu0 0.0
    %2684 = vmatprep.subr.mxu0 0.0
    %2685 = vmatpush1.msra.mxu0 0.0
    %2686 = vmatprep.subr.mxu0 0.0
    %2687 = vmatpush1.msra.mxu0 0.0
    %2688 = vmatprep.subr.mxu0 0.0
    %2689 = vmatpush1.msra.mxu0 0.0
    %2690 = vmatprep.subr.mxu0 0.0
    %2691 = vmatpush1.msra.mxu0 0.0
    %2692 = vmatprep.subr.mxu0 0.0
    %2693 = vmatpush1.msra.mxu0 0.0
    %2694 = vmatprep.subr.mxu0 0.0
    %2695 = vmatpush1.msra.mxu0 0.0
    %2696 = vmatprep.subr.mxu0 0.0
    %2697 = vmatpush1.msra.mxu0 0.0
    %2698 = vmatprep.subr.mxu0 0.0
    %2699 = vmatpush1.msra.mxu0 0.0
    %2700 = vmatprep.subr.mxu0 0.0
    %2701 = vmatpush1.msra.mxu0 0.0
    %2702 = vmatprep.subr.mxu0 0.0
    %2703 = vmatpush1.msra.mxu0 0.0
    %2704 = vmatprep.subr.mxu0 0.0
    %2705 = vmatpush1.msra.mxu0 0.0
    %2706 = vmatprep.subr.mxu0 0.0
    %2707 = vmatpush1.msra.mxu0 0.0
    %2708 = vmatprep.subr.mxu0 0.0
    %2709 = vmatpush1.msra.mxu0 0.0
    %2710 = vmatprep.subr.mxu0 0.0
    %2711 = vmatpush1.msra.mxu0 0.0
    %2712 = vmatprep.mubr.f32.mxu0 0.0
    %2713 = vmatmul.mubr.f32.gmra.mrb[0].mxu0 %v2646
    %v2714 = vpop.f32.mrb[0].mxu0
    %v2715 = vadd.f32 %v382, %v2714
    %v2716 = vpop.f32.mrb[0].mxu0
    %2717 = vdwg.mxu0
    %v2718 = vmax.f32 %v2715, 0.0
    %v2719 = vmul.f32 %v2718, %v478
    %v2720 = vsel %vm480, %v2719, 0.0
    %2721 = vadd.xlane.f32.xlu0 %v2720
    %v2722 = vpop.xlane.xlu0 %2721
    %v2723 = vadd.f32 %v2722, %v487
    %v2724 = vtanh.pop %v2723
    %v2725 = vmul.f32 %v2718, %v493
    %v2726 = vsel %vm480, %v2725, 0.0
    %2727 = vadd.xlane.f32.xlu0 %v2726
    %v2728 = vpop.xlane.xlu0 %2727
    %v2729 = vadd.f32 %v2728, %v487
    %v2730 = vtanh.pop %v2729
    %2732 = vset.pattern.permute.xlu0 0
    %2733 = vperm.xlu0 %2732, %v2444
    %v2734 = vpop.permute.xlu0 %2733
    %v2736 = vmul.f32 %v2734, %v185
    %2738 = vset.pattern.permute.xlu0 1
    %2739 = vperm.xlu0 %2738, %v2450
    %v2740 = vpop.permute.xlu0 %2739
    %v2742 = vmul.f32 %v2740, %v190
    %v2743 = vadd.f32 %v2736, %v2742
    %v2745 = vrot.slane %v164, 4
    %v2747 = vadd.f32 %v2743, %v2745
    %v2748 = vmax.f32 %v2747, 0.0
    %v2750 = vsel %vm199, %v2748, 0
    %2752 = vmatprep.subr.mxu0 0.0
    %2753 = vmatpush1.msra.mxu0 %v31
    %2754 = vmatprep.subr.mxu0 0.0
    %2755 = vmatpush1.msra.mxu0 %v32
    %2756 = vmatprep.subr.mxu0 0.0
    %2757 = vmatpush1.msra.mxu0 %v33
    %2758 = vmatprep.subr.mxu0 0.0
    %2759 = vmatpush1.msra.mxu0 %v34
    %2760 = vmatprep.subr.mxu0 0.0
    %2761 = vmatpush1.msra.mxu0 0.0
    %2762 = vmatprep.subr.mxu0 0.0
    %2763 = vmatpush1.msra.mxu0 0.0
    %2764 = vmatprep.subr.mxu0 0.0
    %2765 = vmatpush1.msra.mxu0 0.0
    %2766 = vmatprep.subr.mxu0 0.0
    %2767 = vmatpush1.msra.mxu0 0.0
    %2768 = vmatprep.subr.mxu0 0.0
    %2769 = vmatpush1.msra.mxu0 0.0
    %2770 = vmatprep.subr.mxu0 0.0
    %2771 = vmatpush1.msra.mxu0 0.0
    %2772 = vmatprep.subr.mxu0 0.0
    %2773 = vmatpush1.msra.mxu0 0.0
    %2774 = vmatprep.subr.mxu0 0.0
    %2775 = vmatpush1.msra.mxu0 0.0
    %2776 = vmatprep.subr.mxu0 0.0
    %2777 = vmatpush1.msra.mxu0 0.0
    %2778 = vmatprep.subr.mxu0 0.0
    %2779 = vmatpush1.msra.mxu0 0.0
    %2780 = vmatprep.subr.mxu0 0.0
    %2781 = vmatpush1.msra.mxu0 0.0
    %2782 = vmatprep.subr.mxu0 0.0
    %2783 = vmatpush1.msra.mxu0 0.0
    %2784 = vmatprep.subr.mxu0 0.0
    %2785 = vmatpush1.msra.mxu0 0.0
    %2786 = vmatprep.subr.mxu0 0.0
    %2787 = vmatpush1.msra.mxu0 0.0
    %2788 = vmatprep.subr.mxu0 0.0
    %2789 = vmatpush1.msra.mxu0 0.0
    %2790 = vmatprep.subr.mxu0 0.0
    %2791 = vmatpush1.msra.mxu0 0.0
    %2792 = vmatprep.subr.mxu0 0.0
    %2793 = vmatpush1.msra.mxu0 0.0
    %2794 = vmatprep.subr.mxu0 0.0
    %2795 = vmatpush1.msra.mxu0 0.0
    %2796 = vmatprep.subr.mxu0 0.0
    %2797 = vmatpush1.msra.mxu0 0.0
    %2798 = vmatprep.subr.mxu0 0.0
    %2799 = vmatpush1.msra.mxu0 0.0
    %2800 = vmatprep.subr.mxu0 0.0
    %2801 = vmatpush1.msra.mxu0 0.0
    %2802 = vmatprep.subr.mxu0 0.0
    %2803 = vmatpush1.msra.mxu0 0.0
    %2804 = vmatprep.subr.mxu0 0.0
    %2805 = vmatpush1.msra.mxu0 0.0
    %2806 = vmatprep.subr.mxu0 0.0
    %2807 = vmatpush1.msra.mxu0 0.0
    %2808 = vmatprep.subr.mxu0 0.0
    %2809 = vmatpush1.msra.mxu0 0.0
    %2810 = vmatprep.subr.mxu0 0.0
    %2811 = vmatpush1.msra.mxu0 0.0
    %2812 = vmatprep.subr.mxu0 0.0
    %2813 = vmatpush1.msra.mxu0 0.0
    %2814 = vmatprep.subr.mxu0 0.0
    %2815 = vmatpush1.msra.mxu0 0.0
    %2816 = vmatprep.mubr.f32.mxu0 0.0
    %2817 = vmatmul.mubr.f32.gmra.mrb[0].mxu0 %v2750
    %v2818 = vpop.f32.mrb[0].mxu0
    %v2819 = vadd.f32 %v198, %v2818
    %v2820 = vpop.f32.mrb[0].mxu0
    %2821 = vdwg.mxu0
    %v2822 = vmax.f32 %v2819, 0.0
    %2823 = vrot.lane.b32.xlu0 %v2362, 96
    %v2824 = vpop.permute.xlu0 %2823
    %v2826 = vsel %vm199, %v2822, %v2824
    %v2828 = vsel %vm279, %v2826, 0
    %2830 = vmatprep.subr.mxu0 0.0
    %2831 = vmatpush1.msra.mxu0 %v14
    %2832 = vmatprep.subr.mxu0 0.0
    %2833 = vmatpush1.msra.mxu0 %v15
    %2834 = vmatprep.subr.mxu0 0.0
    %2835 = vmatpush1.msra.mxu0 %v16
    %2836 = vmatprep.subr.mxu0 0.0
    %2837 = vmatpush1.msra.mxu0 %v17
    %2838 = vmatprep.subr.mxu0 0.0
    %2839 = vmatpush1.msra.mxu0 %v18
    %2840 = vmatprep.subr.mxu0 0.0
    %2841 = vmatpush1.msra.mxu0 %v19
    %2842 = vmatprep.subr.mxu0 0.0
    %2843 = vmatpush1.msra.mxu0 %v20
    %2844 = vmatprep.subr.mxu0 0.0
    %2845 = vmatpush1.msra.mxu0 %v21
    %2846 = vmatprep.subr.mxu0 0.0
    %2847 = vmatpush1.msra.mxu0 0.0
    %2848 = vmatprep.subr.mxu0 0.0
    %2849 = vmatpush1.msra.mxu0 0.0
    %2850 = vmatprep.subr.mxu0 0.0
    %2851 = vmatpush1.msra.mxu0 0.0
    %2852 = vmatprep.subr.mxu0 0.0
    %2853 = vmatpush1.msra.mxu0 0.0
    %2854 = vmatprep.subr.mxu0 0.0
    %2855 = vmatpush1.msra.mxu0 0.0
    %2856 = vmatprep.subr.mxu0 0.0
    %2857 = vmatpush1.msra.mxu0 0.0
    %2858 = vmatprep.subr.mxu0 0.0
    %2859 = vmatpush1.msra.mxu0 0.0
    %2860 = vmatprep.subr.mxu0 0.0
    %2861 = vmatpush1.msra.mxu0 0.0
    %2862 = vmatprep.subr.mxu0 0.0
    %2863 = vmatpush1.msra.mxu0 0.0
    %2864 = vmatprep.subr.mxu0 0.0
    %2865 = vmatpush1.msra.mxu0 0.0
    %2866 = vmatprep.subr.mxu0 0.0
    %2867 = vmatpush1.msra.mxu0 0.0
    %2868 = vmatprep.subr.mxu0 0.0
    %2869 = vmatpush1.msra.mxu0 0.0
    %2870 = vmatprep.subr.mxu0 0.0
    %2871 = vmatpush1.msra.mxu0 0.0
    %2872 = vmatprep.subr.mxu0 0.0
    %2873 = vmatpush1.msra.mxu0 0.0
    %2874 = vmatprep.subr.mxu0 0.0
    %2875 = vmatpush1.msra.mxu0 0.0
    %2876 = vmatprep.subr.mxu0 0.0
    %2877 = vmatpush1.msra.mxu0 0.0
    %2878 = vmatprep.subr.mxu0 0.0
    %2879 = vmatpush1.msra.mxu0 0.0
    %2880 = vmatprep.subr.mxu0 0.0
    %2881 = vmatpush1.msra.mxu0 0.0
    %2882 = vmatprep.subr.mxu0 0.0
    %2883 = vmatpush1.msra.mxu0 0.0
    %2884 = vmatprep.subr.mxu0 0.0
    %2885 = vmatpush1.msra.mxu0 0.0
    %2886 = vmatprep.subr.mxu0 0.0
    %2887 = vmatpush1.msra.mxu0 0.0
    %2888 = vmatprep.subr.mxu0 0.0
    %2889 = vmatpush1.msra.mxu0 0.0
    %2890 = vmatprep.subr.mxu0 0.0
    %2891 = vmatpush1.msra.mxu0 0.0
    %2892 = vmatprep.subr.mxu0 0.0
    %2893 = vmatpush1.msra.mxu0 0.0
    %2894 = vmatprep.mubr.f32.mxu0 0.0
    %2895 = vmatmul.mubr.f32.gmra.mrb[0].mxu0 %v2828
    %v2896 = vpop.f32.mrb[0].mxu0
    %v2897 = vadd.f32 %v278, %v2896
    %v2898 = vpop.f32.mrb[0].mxu0
    %2899 = vdwg.mxu0
    %v2900 = vmul.f32 %v2897, 0.5
    %v2901 = vtanh.pop %v2900
    %v2902 = vmul.f32 %v2901, 0.5
    %v2903 = vadd.f32 %v2902, 0.5
    %2905 = vrot.lane.b32.xlu0 %v2897, 32
    %v2906 = vpop.permute.xlu0 %2905
    %v2908 = vmul.f32 %v2903, %v2906
    %2910 = vrot.lane.b32.xlu0 %v2908, 64
    %v2911 = vpop.permute.xlu0 %2910
    %v2913 = vadd.f32 %v2897, %v2911
    %v2914 = vtanh.pop %v2913
    %v2915 = vsub.f32 %v2362, %v2914
    %2917 = vrot.lane.b32.xlu0 %v2915, 96
    %v2918 = vpop.permute.xlu0 %2917
    %v2920 = vmul.f32 %v2903, %v2918
    %2922 = vrot.lane.b32.xlu0 %v2920, 32
    %v2923 = vpop.permute.xlu0 %2922
    %v2925 = vadd.f32 %v2914, %v2923
    %2927 = vrot.lane.b32.xlu0 %v2925, 64
    %v2928 = vpop.permute.xlu0 %2927
    %v2929 = vsel %vm199, %v2928, 0
    %2931 = vmatprep.subr.mxu0 0.0
    %2932 = vmatpush1.msra.mxu0 %v391
    %2933 = vmatprep.subr.mxu0 0.0
    %2934 = vmatpush1.msra.mxu0 %v393
    %2935 = vmatprep.subr.mxu0 0.0
    %2936 = vmatpush1.msra.mxu0 %v395
    %2937 = vmatprep.subr.mxu0 0.0
    %2938 = vmatpush1.msra.mxu0 %v397
    %2939 = vmatprep.subr.mxu0 0.0
    %2940 = vmatpush1.msra.mxu0 0.0
    %2941 = vmatprep.subr.mxu0 0.0
    %2942 = vmatpush1.msra.mxu0 0.0
    %2943 = vmatprep.subr.mxu0 0.0
    %2944 = vmatpush1.msra.mxu0 0.0
    %2945 = vmatprep.subr.mxu0 0.0
    %2946 = vmatpush1.msra.mxu0 0.0
    %2947 = vmatprep.subr.mxu0 0.0
    %2948 = vmatpush1.msra.mxu0 0.0
    %2949 = vmatprep.subr.mxu0 0.0
    %2950 = vmatpush1.msra.mxu0 0.0
    %2951 = vmatprep.subr.mxu0 0.0
    %2952 = vmatpush1.msra.mxu0 0.0
    %2953 = vmatprep.subr.mxu0 0.0
    %2954 = vmatpush1.msra.mxu0 0.0
    %2955 = vmatprep.subr.mxu0 0.0
    %2956 = vmatpush1.msra.mxu0 0.0
    %2957 = vmatprep.subr.mxu0 0.0
    %2958 = vmatpush1.msra.mxu0 0.0
    %2959 = vmatprep.subr.mxu0 0.0
    %2960 = vmatpush1.msra.mxu0 0.0
    %2961 = vmatprep.subr.mxu0 0.0
    %2962 = vmatpush1.msra.mxu0 0.0
    %2963 = vmatprep.subr.mxu0 0.0
    %2964 = vmatpush1.msra.mxu0 0.0
    %2965 = vmatprep.subr.mxu0 0.0
    %2966 = vmatpush1.msra.mxu0 0.0
    %2967 = vmatprep.subr.mxu0 0.0
    %2968 = vmatpush1.msra.mxu0 0.0
    %2969 = vmatprep.subr.mxu0 0.0
    %2970 = vmatpush1.msra.mxu0 0.0
    %2971 = vmatprep.subr.mxu0 0.0
    %2972 = vmatpush1.msra.mxu0 0.0
    %2973 = vmatprep.subr.mxu0 0.0
    %2974 = vmatpush1.msra.mxu0 0.0
    %2975 = vmatprep.subr.mxu0 0.0
    %2976 = vmatpush1.msra.mxu0 0.0
    %2977 = vmatprep.subr.mxu0 0.0
    %2978 = vmatpush1.msra.mxu0 0.0
    %2979 = vmatprep.subr.mxu0 0.0
    %2980 = vmatpush1.msra.mxu0 0.0
    %2981 = vmatprep.subr.mxu0 0.0
    %2982 = vmatpush1.msra.mxu0 0.0
    %2983 = vmatprep.subr.mxu0 0.0
    %2984 = vmatpush1.msra.mxu0 0.0
    %2985 = vmatprep.subr.mxu0 0.0
    %2986 = vmatpush1.msra.mxu0 0.0
    %2987 = vmatprep.subr.mxu0 0.0
    %2988 = vmatpush1.msra.mxu0 0.0
    %2989 = vmatprep.subr.mxu0 0.0
    %2990 = vmatpush1.msra.mxu0 0.0
    %2991 = vmatprep.subr.mxu0 0.0
    %2992 = vmatpush1.msra.mxu0 0.0
    %2993 = vmatprep.subr.mxu0 0.0
    %2994 = vmatpush1.msra.mxu0 0.0
    %2995 = vmatprep.mubr.f32.mxu0 0.0
    %2996 = vmatmul.mubr.f32.gmra.mrb[0].mxu0 %v2929
    %v2997 = vpop.f32.mrb[0].mxu0
    %v2998 = vadd.f32 %v382, %v2997
    %v2999 = vpop.f32.mrb[0].mxu0
    %3000 = vdwg.mxu0
    %v3001 = vmax.f32 %v2998, 0.0
    %v3002 = vmul.f32 %v3001, %v478
    %v3003 = vsel %vm480, %v3002, 0.0
    %3004 = vadd.xlane.f32.xlu0 %v3003
    %v3005 = vpop.xlane.xlu0 %3004
    %v3006 = vadd.f32 %v3005, %v487
    %v3007 = vtanh.pop %v3006
    %v3008 = vmul.f32 %v3001, %v493
    %v3009 = vsel %vm480, %v3008, 0.0
    %3010 = vadd.xlane.f32.xlu0 %v3009
    %v3011 = vpop.xlane.xlu0 %3010
    %v3012 = vadd.f32 %v3011, %v487
    %v3013 = vtanh.pop %v3012
    %3015 = vset.pattern.permute.xlu0 0
    %3016 = vperm.xlu0 %3015, %v2724
    %v3017 = vpop.permute.xlu0 %3016
    %v3019 = vmul.f32 %v3017, %v185
    %3021 = vset.pattern.permute.xlu0 1
    %3022 = vperm.xlu0 %3021, %v2730
    %v3023 = vpop.permute.xlu0 %3022
    %v3025 = vmul.f32 %v3023, %v190
    %v3026 = vadd.f32 %v3019, %v3025
    %v3027 = vadd.f32 %v3026, %v169
    %v3028 = vmax.f32 %v3027, 0.0
    %v3030 = vsel %vm199, %v3028, 0
    %3032 = vmatprep.subr.mxu0 0.0
    %3033 = vmatpush1.msra.mxu0 %v31
    %3034 = vmatprep.subr.mxu0 0.0
    %3035 = vmatpush1.msra.mxu0 %v32
    %3036 = vmatprep.subr.mxu0 0.0
    %3037 = vmatpush1.msra.mxu0 %v33
    %3038 = vmatprep.subr.mxu0 0.0
    %3039 = vmatpush1.msra.mxu0 %v34
    %3040 = vmatprep.subr.mxu0 0.0
    %3041 = vmatpush1.msra.mxu0 0.0
    %3042 = vmatprep.subr.mxu0 0.0
    %3043 = vmatpush1.msra.mxu0 0.0
    %3044 = vmatprep.subr.mxu0 0.0
    %3045 = vmatpush1.msra.mxu0 0.0
    %3046 = vmatprep.subr.mxu0 0.0
    %3047 = vmatpush1.msra.mxu0 0.0
    %3048 = vmatprep.subr.mxu0 0.0
    %3049 = vmatpush1.msra.mxu0 0.0
    %3050 = vmatprep.subr.mxu0 0.0
    %3051 = vmatpush1.msra.mxu0 0.0
    %3052 = vmatprep.subr.mxu0 0.0
    %3053 = vmatpush1.msra.mxu0 0.0
    %3054 = vmatprep.subr.mxu0 0.0
    %3055 = vmatpush1.msra.mxu0 0.0
    %3056 = vmatprep.subr.mxu0 0.0
    %3057 = vmatpush1.msra.mxu0 0.0
    %3058 = vmatprep.subr.mxu0 0.0
    %3059 = vmatpush1.msra.mxu0 0.0
    %3060 = vmatprep.subr.mxu0 0.0
    %3061 = vmatpush1.msra.mxu0 0.0
    %3062 = vmatprep.subr.mxu0 0.0
    %3063 = vmatpush1.msra.mxu0 0.0
    %3064 = vmatprep.subr.mxu0 0.0
    %3065 = vmatpush1.msra.mxu0 0.0
    %3066 = vmatprep.subr.mxu0 0.0
    %3067 = vmatpush1.msra.mxu0 0.0
    %3068 = vmatprep.subr.mxu0 0.0
    %3069 = vmatpush1.msra.mxu0 0.0
    %3070 = vmatprep.subr.mxu0 0.0
    %3071 = vmatpush1.msra.mxu0 0.0
    %3072 = vmatprep.subr.mxu0 0.0
    %3073 = vmatpush1.msra.mxu0 0.0
    %3074 = vmatprep.subr.mxu0 0.0
    %3075 = vmatpush1.msra.mxu0 0.0
    %3076 = vmatprep.subr.mxu0 0.0
    %3077 = vmatpush1.msra.mxu0 0.0
    %3078 = vmatprep.subr.mxu0 0.0
    %3079 = vmatpush1.msra.mxu0 0.0
    %3080 = vmatprep.subr.mxu0 0.0
    %3081 = vmatpush1.msra.mxu0 0.0
    %3082 = vmatprep.subr.mxu0 0.0
    %3083 = vmatpush1.msra.mxu0 0.0
    %3084 = vmatprep.subr.mxu0 0.0
    %3085 = vmatpush1.msra.mxu0 0.0
    %3086 = vmatprep.subr.mxu0 0.0
    %3087 = vmatpush1.msra.mxu0 0.0
    %3088 = vmatprep.subr.mxu0 0.0
    %3089 = vmatpush1.msra.mxu0 0.0
    %3090 = vmatprep.subr.mxu0 0.0
    %3091 = vmatpush1.msra.mxu0 0.0
    %3092 = vmatprep.subr.mxu0 0.0
    %3093 = vmatpush1.msra.mxu0 0.0
    %3094 = vmatprep.subr.mxu0 0.0
    %3095 = vmatpush1.msra.mxu0 0.0
    %3096 = vmatprep.mubr.f32.mxu0 0.0
    %3097 = vmatmul.mubr.f32.gmra.mrb[0].mxu0 %v3030
    %v3098 = vpop.f32.mrb[0].mxu0
    %v3099 = vadd.f32 %v198, %v3098
    %v3100 = vpop.f32.mrb[0].mxu0
    %3101 = vdwg.mxu0
    %v3102 = vmax.f32 %v3099, 0.0
    %3103 = vrot.lane.b32.xlu0 %v2642, 96
    %v3104 = vpop.permute.xlu0 %3103
    %v3106 = vsel %vm199, %v3102, %v3104
    %v3108 = vsel %vm279, %v3106, 0
    %3110 = vmatprep.subr.mxu0 0.0
    %3111 = vmatpush1.msra.mxu0 %v14
    %3112 = vmatprep.subr.mxu0 0.0
    %3113 = vmatpush1.msra.mxu0 %v15
    %3114 = vmatprep.subr.mxu0 0.0
    %3115 = vmatpush1.msra.mxu0 %v16
    %3116 = vmatprep.subr.mxu0 0.0
    %3117 = vmatpush1.msra.mxu0 %v17
    %3118 = vmatprep.subr.mxu0 0.0
    %3119 = vmatpush1.msra.mxu0 %v18
    %3120 = vmatprep.subr.mxu0 0.0
    %3121 = vmatpush1.msra.mxu0 %v19
    %3122 = vmatprep.subr.mxu0 0.0
    %3123 = vmatpush1.msra.mxu0 %v20
    %3124 = vmatprep.subr.mxu0 0.0
    %3125 = vmatpush1.msra.mxu0 %v21
    %3126 = vmatprep.subr.mxu0 0.0
    %3127 = vmatpush1.msra.mxu0 0.0
    %3128 = vmatprep.subr.mxu0 0.0
    %3129 = vmatpush1.msra.mxu0 0.0
    %3130 = vmatprep.subr.mxu0 0.0
    %3131 = vmatpush1.msra.mxu0 0.0
    %3132 = vmatprep.subr.mxu0 0.0
    %3133 = vmatpush1.msra.mxu0 0.0
    %3134 = vmatprep.subr.mxu0 0.0
    %3135 = vmatpush1.msra.mxu0 0.0
    %3136 = vmatprep.subr.mxu0 0.0
    %3137 = vmatpush1.msra.mxu0 0.0
    %3138 = vmatprep.subr.mxu0 0.0
    %3139 = vmatpush1.msra.mxu0 0.0
    %3140 = vmatprep.subr.mxu0 0.0
    %3141 = vmatpush1.msra.mxu0 0.0
    %3142 = vmatprep.subr.mxu0 0.0
    %3143 = vmatpush1.msra.mxu0 0.0
    %3144 = vmatprep.subr.mxu0 0.0
    %3145 = vmatpush1.msra.mxu0 0.0
    %3146 = vmatprep.subr.mxu0 0.0
    %3147 = vmatpush1.msra.mxu0 0.0
    %3148 = vmatprep.subr.mxu0 0.0
    %3149 = vmatpush1.msra.mxu0 0.0
    %3150 = vmatprep.subr.mxu0 0.0
    %3151 = vmatpush1.msra.mxu0 0.0
    %3152 = vmatprep.subr.mxu0 0.0
    %3153 = vmatpush1.msra.mxu0 0.0
    %3154 = vmatprep.subr.mxu0 0.0
    %3155 = vmatpush1.msra.mxu0 0.0
    %3156 = vmatprep.subr.mxu0 0.0
    %3157 = vmatpush1.msra.mxu0 0.0
    %3158 = vmatprep.subr.mxu0 0.0
    %3159 = vmatpush1.msra.mxu0 0.0
    %3160 = vmatprep.subr.mxu0 0.0
    %3161 = vmatpush1.msra.mxu0 0.0
    %3162 = vmatprep.subr.mxu0 0.0
    %3163 = vmatpush1.msra.mxu0 0.0
    %3164 = vmatprep.subr.mxu0 0.0
    %3165 = vmatpush1.msra.mxu0 0.0
    %3166 = vmatprep.subr.mxu0 0.0
    %3167 = vmatpush1.msra.mxu0 0.0
    %3168 = vmatprep.subr.mxu0 0.0
    %3169 = vmatpush1.msra.mxu0 0.0
    %3170 = vmatprep.subr.mxu0 0.0
    %3171 = vmatpush1.msra.mxu0 0.0
    %3172 = vmatprep.subr.mxu0 0.0
    %3173 = vmatpush1.msra.mxu0 0.0
    %3174 = vmatprep.mubr.f32.mxu0 0.0
    %3175 = vmatmul.mubr.f32.gmra.mrb[0].mxu0 %v3108
    %v3176 = vpop.f32.mrb[0].mxu0
    %v3177 = vadd.f32 %v278, %v3176
    %v3178 = vpop.f32.mrb[0].mxu0
    %3179 = vdwg.mxu0
    %v3180 = vmul.f32 %v3177, 0.5
    %v3181 = vtanh.pop %v3180
    %v3182 = vmul.f32 %v3181, 0.5
    %v3183 = vadd.f32 %v3182, 0.5
    %3185 = vrot.lane.b32.xlu0 %v3177, 32
    %v3186 = vpop.permute.xlu0 %3185
    %v3188 = vmul.f32 %v3183, %v3186
    %3190 = vrot.lane.b32.xlu0 %v3188, 64
    %v3191 = vpop.permute.xlu0 %3190
    %v3193 = vadd.f32 %v3177, %v3191
    %v3194 = vtanh.pop %v3193
    %v3195 = vsub.f32 %v2642, %v3194
    %3197 = vrot.lane.b32.xlu0 %v3195, 96
    %v3198 = vpop.permute.xlu0 %3197
    %v3200 = vmul.f32 %v3183, %v3198
    %3202 = vrot.lane.b32.xlu0 %v3200, 32
    %v3203 = vpop.permute.xlu0 %3202
    %v3205 = vadd.f32 %v3194, %v3203
    %3207 = vrot.lane.b32.xlu0 %v3205, 64
    %v3208 = vpop.permute.xlu0 %3207
    %v3209 = vsel %vm199, %v3208, 0
    %3211 = vmatprep.subr.mxu0 0.0
    %3212 = vmatpush1.msra.mxu0 %v391
    %3213 = vmatprep.subr.mxu0 0.0
    %3214 = vmatpush1.msra.mxu0 %v393
    %3215 = vmatprep.subr.mxu0 0.0
    %3216 = vmatpush1.msra.mxu0 %v395
    %3217 = vmatprep.subr.mxu0 0.0
    %3218 = vmatpush1.msra.mxu0 %v397
    %3219 = vmatprep.subr.mxu0 0.0
    %3220 = vmatpush1.msra.mxu0 0.0
    %3221 = vmatprep.subr.mxu0 0.0
    %3222 = vmatpush1.msra.mxu0 0.0
    %3223 = vmatprep.subr.mxu0 0.0
    %3224 = vmatpush1.msra.mxu0 0.0
    %3225 = vmatprep.subr.mxu0 0.0
    %3226 = vmatpush1.msra.mxu0 0.0
    %3227 = vmatprep.subr.mxu0 0.0
    %3228 = vmatpush1.msra.mxu0 0.0
    %3229 = vmatprep.subr.mxu0 0.0
    %3230 = vmatpush1.msra.mxu0 0.0
    %3231 = vmatprep.subr.mxu0 0.0
    %3232 = vmatpush1.msra.mxu0 0.0
    %3233 = vmatprep.subr.mxu0 0.0
    %3234 = vmatpush1.msra.mxu0 0.0
    %3235 = vmatprep.subr.mxu0 0.0
    %3236 = vmatpush1.msra.mxu0 0.0
    %3237 = vmatprep.subr.mxu0 0.0
    %3238 = vmatpush1.msra.mxu0 0.0
    %3239 = vmatprep.subr.mxu0 0.0
    %3240 = vmatpush1.msra.mxu0 0.0
    %3241 = vmatprep.subr.mxu0 0.0
    %3242 = vmatpush1.msra.mxu0 0.0
    %3243 = vmatprep.subr.mxu0 0.0
    %3244 = vmatpush1.msra.mxu0 0.0
    %3245 = vmatprep.subr.mxu0 0.0
    %3246 = vmatpush1.msra.mxu0 0.0
    %3247 = vmatprep.subr.mxu0 0.0
    %3248 = vmatpush1.msra.mxu0 0.0
    %3249 = vmatprep.subr.mxu0 0.0
    %3250 = vmatpush1.msra.mxu0 0.0
    %3251 = vmatprep.subr.mxu0 0.0
    %3252 = vmatpush1.msra.mxu0 0.0
    %3253 = vmatprep.subr.mxu0 0.0
    %3254 = vmatpush1.msra.mxu0 0.0
    %3255 = vmatprep.subr.mxu0 0.0
    %3256 = vmatpush1.msra.mxu0 0.0
    %3257 = vmatprep.subr.mxu0 0.0
    %3258 = vmatpush1.msra.mxu0 0.0
    %3259 = vmatprep.subr.mxu0 0.0
    %3260 = vmatpush1.msra.mxu0 0.0
    %3261 = vmatprep.subr.mxu0 0.0
    %3262 = vmatpush1.msra.mxu0 0.0
    %3263 = vmatprep.subr.mxu0 0.0
    %3264 = vmatpush1.msra.mxu0 0.0
    %3265 = vmatprep.subr.mxu0 0.0
    %3266 = vmatpush1.msra.mxu0 0.0
    %3267 = vmatprep.subr.mxu0 0.0
    %3268 = vmatpush1.msra.mxu0 0.0
    %3269 = vmatprep.subr.mxu0 0.0
    %3270 = vmatpush1.msra.mxu0 0.0
    %3271 = vmatprep.subr.mxu0 0.0
    %3272 = vmatpush1.msra.mxu0 0.0
    %3273 = vmatprep.subr.mxu0 0.0
    %3274 = vmatpush1.msra.mxu0 0.0
    %3275 = vmatprep.mubr.f32.mxu0 0.0
    %3276 = vmatmul.mubr.f32.gmra.mrb[0].mxu0 %v3209
    %v3277 = vpop.f32.mrb[0].mxu0
    %v3278 = vadd.f32 %v382, %v3277
    %v3279 = vpop.f32.mrb[0].mxu0
    %3280 = vdwg.mxu0
    %v3281 = vmax.f32 %v3278, 0.0
    %v3282 = vmul.f32 %v3281, %v478
    %v3283 = vsel %vm480, %v3282, 0.0
    %3284 = vadd.xlane.f32.xlu0 %v3283
    %v3285 = vpop.xlane.xlu0 %3284
    %v3286 = vadd.f32 %v3285, %v487
    %v3287 = vtanh.pop %v3286
    %v3288 = vmul.f32 %v3281, %v493
    %v3289 = vsel %vm480, %v3288, 0.0
    %3290 = vadd.xlane.f32.xlu0 %v3289
    %v3291 = vpop.xlane.xlu0 %3290
    %v3292 = vadd.f32 %v3291, %v487
    %v3293 = vtanh.pop %v3292
    %3295 = vset.pattern.permute.xlu0 0
    %3296 = vperm.xlu0 %3295, %v3007
    %v3297 = vpop.permute.xlu0 %3296
    %v3299 = vmul.f32 %v3297, %v185
    %3301 = vset.pattern.permute.xlu0 1
    %3302 = vperm.xlu0 %3301, %v3013
    %v3303 = vpop.permute.xlu0 %3302
    %v3305 = vmul.f32 %v3303, %v190
    %v3306 = vadd.f32 %v3299, %v3305
    %v3308 = vrot.slane %v169, 4
    %v3310 = vadd.f32 %v3306, %v3308
    %v3311 = vmax.f32 %v3310, 0.0
    %v3313 = vsel %vm199, %v3311, 0
    %3315 = vmatprep.subr.mxu0 0.0
    %3316 = vmatpush1.msra.mxu0 %v31
    %3317 = vmatprep.subr.mxu0 0.0
    %3318 = vmatpush1.msra.mxu0 %v32
    %3319 = vmatprep.subr.mxu0 0.0
    %3320 = vmatpush1.msra.mxu0 %v33
    %3321 = vmatprep.subr.mxu0 0.0
    %3322 = vmatpush1.msra.mxu0 %v34
    %3323 = vmatprep.subr.mxu0 0.0
    %3324 = vmatpush1.msra.mxu0 0.0
    %3325 = vmatprep.subr.mxu0 0.0
    %3326 = vmatpush1.msra.mxu0 0.0
    %3327 = vmatprep.subr.mxu0 0.0
    %3328 = vmatpush1.msra.mxu0 0.0
    %3329 = vmatprep.subr.mxu0 0.0
    %3330 = vmatpush1.msra.mxu0 0.0
    %3331 = vmatprep.subr.mxu0 0.0
    %3332 = vmatpush1.msra.mxu0 0.0
    %3333 = vmatprep.subr.mxu0 0.0
    %3334 = vmatpush1.msra.mxu0 0.0
    %3335 = vmatprep.subr.mxu0 0.0
    %3336 = vmatpush1.msra.mxu0 0.0
    %3337 = vmatprep.subr.mxu0 0.0
    %3338 = vmatpush1.msra.mxu0 0.0
    %3339 = vmatprep.subr.mxu0 0.0
    %3340 = vmatpush1.msra.mxu0 0.0
    %3341 = vmatprep.subr.mxu0 0.0
    %3342 = vmatpush1.msra.mxu0 0.0
    %3343 = vmatprep.subr.mxu0 0.0
    %3344 = vmatpush1.msra.mxu0 0.0
    %3345 = vmatprep.subr.mxu0 0.0
    %3346 = vmatpush1.msra.mxu0 0.0
    %3347 = vmatprep.subr.mxu0 0.0
    %3348 = vmatpush1.msra.mxu0 0.0
    %3349 = vmatprep.subr.mxu0 0.0
    %3350 = vmatpush1.msra.mxu0 0.0
    %3351 = vmatprep.subr.mxu0 0.0
    %3352 = vmatpush1.msra.mxu0 0.0
    %3353 = vmatprep.subr.mxu0 0.0
    %3354 = vmatpush1.msra.mxu0 0.0
    %3355 = vmatprep.subr.mxu0 0.0
    %3356 = vmatpush1.msra.mxu0 0.0
    %3357 = vmatprep.subr.mxu0 0.0
    %3358 = vmatpush1.msra.mxu0 0.0
    %3359 = vmatprep.subr.mxu0 0.0
    %3360 = vmatpush1.msra.mxu0 0.0
    %3361 = vmatprep.subr.mxu0 0.0
    %3362 = vmatpush1.msra.mxu0 0.0
    %3363 = vmatprep.subr.mxu0 0.0
    %3364 = vmatpush1.msra.mxu0 0.0
    %3365 = vmatprep.subr.mxu0 0.0
    %3366 = vmatpush1.msra.mxu0 0.0
    %3367 = vmatprep.subr.mxu0 0.0
    %3368 = vmatpush1.msra.mxu0 0.0
    %3369 = vmatprep.subr.mxu0 0.0
    %3370 = vmatpush1.msra.mxu0 0.0
    %3371 = vmatprep.subr.mxu0 0.0
    %3372 = vmatpush1.msra.mxu0 0.0
    %3373 = vmatprep.subr.mxu0 0.0
    %3374 = vmatpush1.msra.mxu0 0.0
    %3375 = vmatprep.subr.mxu0 0.0
    %3376 = vmatpush1.msra.mxu0 0.0
    %3377 = vmatprep.subr.mxu0 0.0
    %3378 = vmatpush1.msra.mxu0 0.0
    %3379 = vmatprep.mubr.f32.mxu0 0.0
    %3380 = vmatmul.mubr.f32.gmra.mrb[0].mxu0 %v3313
    %v3381 = vpop.f32.mrb[0].mxu0
    %v3382 = vadd.f32 %v198, %v3381
    %v3383 = vpop.f32.mrb[0].mxu0
    %3384 = vdwg.mxu0
    %v3385 = vmax.f32 %v3382, 0.0
    %3386 = vrot.lane.b32.xlu0 %v2925, 96
    %v3387 = vpop.permute.xlu0 %3386
    %v3389 = vsel %vm199, %v3385, %v3387
    %v3391 = vsel %vm279, %v3389, 0
    %3393 = vmatprep.subr.mxu0 0.0
    %3394 = vmatpush1.msra.mxu0 %v14
    %3395 = vmatprep.subr.mxu0 0.0
    %3396 = vmatpush1.msra.mxu0 %v15
    %3397 = vmatprep.subr.mxu0 0.0
    %3398 = vmatpush1.msra.mxu0 %v16
    %3399 = vmatprep.subr.mxu0 0.0
    %3400 = vmatpush1.msra.mxu0 %v17
    %3401 = vmatprep.subr.mxu0 0.0
    %3402 = vmatpush1.msra.mxu0 %v18
    %3403 = vmatprep.subr.mxu0 0.0
    %3404 = vmatpush1.msra.mxu0 %v19
    %3405 = vmatprep.subr.mxu0 0.0
    %3406 = vmatpush1.msra.mxu0 %v20
    %3407 = vmatprep.subr.mxu0 0.0
    %3408 = vmatpush1.msra.mxu0 %v21
    %3409 = vmatprep.subr.mxu0 0.0
    %3410 = vmatpush1.msra.mxu0 0.0
    %3411 = vmatprep.subr.mxu0 0.0
    %3412 = vmatpush1.msra.mxu0 0.0
    %3413 = vmatprep.subr.mxu0 0.0
    %3414 = vmatpush1.msra.mxu0 0.0
    %3415 = vmatprep.subr.mxu0 0.0
    %3416 = vmatpush1.msra.mxu0 0.0
    %3417 = vmatprep.subr.mxu0 0.0
    %3418 = vmatpush1.msra.mxu0 0.0
    %3419 = vmatprep.subr.mxu0 0.0
    %3420 = vmatpush1.msra.mxu0 0.0
    %3421 = vmatprep.subr.mxu0 0.0
    %3422 = vmatpush1.msra.mxu0 0.0
    %3423 = vmatprep.subr.mxu0 0.0
    %3424 = vmatpush1.msra.mxu0 0.0
    %3425 = vmatprep.subr.mxu0 0.0
    %3426 = vmatpush1.msra.mxu0 0.0
    %3427 = vmatprep.subr.mxu0 0.0
    %3428 = vmatpush1.msra.mxu0 0.0
    %3429 = vmatprep.subr.mxu0 0.0
    %3430 = vmatpush1.msra.mxu0 0.0
    %3431 = vmatprep.subr.mxu0 0.0
    %3432 = vmatpush1.msra.mxu0 0.0
    %3433 = vmatprep.subr.mxu0 0.0
    %3434 = vmatpush1.msra.mxu0 0.0
    %3435 = vmatprep.subr.mxu0 0.0
    %3436 = vmatpush1.msra.mxu0 0.0
    %3437 = vmatprep.subr.mxu0 0.0
    %3438 = vmatpush1.msra.mxu0 0.0
    %3439 = vmatprep.subr.mxu0 0.0
    %3440 = vmatpush1.msra.mxu0 0.0
    %3441 = vmatprep.subr.mxu0 0.0
    %3442 = vmatpush1.msra.mxu0 0.0
    %3443 = vmatprep.subr.mxu0 0.0
    %3444 = vmatpush1.msra.mxu0 0.0
    %3445 = vmatprep.subr.mxu0 0.0
    %3446 = vmatpush1.msra.mxu0 0.0
    %3447 = vmatprep.subr.mxu0 0.0
    %3448 = vmatpush1.msra.mxu0 0.0
    %3449 = vmatprep.subr.mxu0 0.0
    %3450 = vmatpush1.msra.mxu0 0.0
    %3451 = vmatprep.subr.mxu0 0.0
    %3452 = vmatpush1.msra.mxu0 0.0
    %3453 = vmatprep.subr.mxu0 0.0
    %3454 = vmatpush1.msra.mxu0 0.0
    %3455 = vmatprep.subr.mxu0 0.0
    %3456 = vmatpush1.msra.mxu0 0.0
    %3457 = vmatprep.mubr.f32.mxu0 0.0
    %3458 = vmatmul.mubr.f32.gmra.mrb[0].mxu0 %v3391
    %v3459 = vpop.f32.mrb[0].mxu0
    %v3460 = vadd.f32 %v278, %v3459
    %v3461 = vpop.f32.mrb[0].mxu0
    %3462 = vdwg.mxu0
    %v3463 = vmul.f32 %v3460, 0.5
    %v3464 = vtanh.pop %v3463
    %v3465 = vmul.f32 %v3464, 0.5
    %v3466 = vadd.f32 %v3465, 0.5
    %3468 = vrot.lane.b32.xlu0 %v3460, 32
    %v3469 = vpop.permute.xlu0 %3468
    %v3471 = vmul.f32 %v3466, %v3469
    %3473 = vrot.lane.b32.xlu0 %v3471, 64
    %v3474 = vpop.permute.xlu0 %3473
    %v3476 = vadd.f32 %v3460, %v3474
    %v3477 = vtanh.pop %v3476
    %v3478 = vsub.f32 %v2925, %v3477
    %3480 = vrot.lane.b32.xlu0 %v3478, 96
    %v3481 = vpop.permute.xlu0 %3480
    %v3483 = vmul.f32 %v3466, %v3481
    %3485 = vrot.lane.b32.xlu0 %v3483, 32
    %v3486 = vpop.permute.xlu0 %3485
    %v3488 = vadd.f32 %v3477, %v3486
    %3490 = vrot.lane.b32.xlu0 %v3488, 64
    %v3491 = vpop.permute.xlu0 %3490
    %v3492 = vsel %vm199, %v3491, 0
    %3494 = vmatprep.subr.mxu0 0.0
    %3495 = vmatpush1.msra.mxu0 %v391
    %3496 = vmatprep.subr.mxu0 0.0
    %3497 = vmatpush1.msra.mxu0 %v393
    %3498 = vmatprep.subr.mxu0 0.0
    %3499 = vmatpush1.msra.mxu0 %v395
    %3500 = vmatprep.subr.mxu0 0.0
    %3501 = vmatpush1.msra.mxu0 %v397
    %3502 = vmatprep.subr.mxu0 0.0
    %3503 = vmatpush1.msra.mxu0 0.0
    %3504 = vmatprep.subr.mxu0 0.0
    %3505 = vmatpush1.msra.mxu0 0.0
    %3506 = vmatprep.subr.mxu0 0.0
    %3507 = vmatpush1.msra.mxu0 0.0
    %3508 = vmatprep.subr.mxu0 0.0
    %3509 = vmatpush1.msra.mxu0 0.0
    %3510 = vmatprep.subr.mxu0 0.0
    %3511 = vmatpush1.msra.mxu0 0.0
    %3512 = vmatprep.subr.mxu0 0.0
    %3513 = vmatpush1.msra.mxu0 0.0
    %3514 = vmatprep.subr.mxu0 0.0
    %3515 = vmatpush1.msra.mxu0 0.0
    %3516 = vmatprep.subr.mxu0 0.0
    %3517 = vmatpush1.msra.mxu0 0.0
    %3518 = vmatprep.subr.mxu0 0.0
    %3519 = vmatpush1.msra.mxu0 0.0
    %3520 = vmatprep.subr.mxu0 0.0
    %3521 = vmatpush1.msra.mxu0 0.0
    %3522 = vmatprep.subr.mxu0 0.0
    %3523 = vmatpush1.msra.mxu0 0.0
    %3524 = vmatprep.subr.mxu0 0.0
    %3525 = vmatpush1.msra.mxu0 0.0
    %3526 = vmatprep.subr.mxu0 0.0
    %3527 = vmatpush1.msra.mxu0 0.0
    %3528 = vmatprep.subr.mxu0 0.0
    %3529 = vmatpush1.msra.mxu0 0.0
    %3530 = vmatprep.subr.mxu0 0.0
    %3531 = vmatpush1.msra.mxu0 0.0
    %3532 = vmatprep.subr.mxu0 0.0
    %3533 = vmatpush1.msra.mxu0 0.0
    %3534 = vmatprep.subr.mxu0 0.0
    %3535 = vmatpush1.msra.mxu0 0.0
    %3536 = vmatprep.subr.mxu0 0.0
    %3537 = vmatpush1.msra.mxu0 0.0
    %3538 = vmatprep.subr.mxu0 0.0
    %3539 = vmatpush1.msra.mxu0 0.0
    %3540 = vmatprep.subr.mxu0 0.0
    %3541 = vmatpush1.msra.mxu0 0.0
    %3542 = vmatprep.subr.mxu0 0.0
    %3543 = vmatpush1.msra.mxu0 0.0
    %3544 = vmatprep.subr.mxu0 0.0
    %3545 = vmatpush1.msra.mxu0 0.0
    %3546 = vmatprep.subr.mxu0 0.0
    %3547 = vmatpush1.msra.mxu0 0.0
    %3548 = vmatprep.subr.mxu0 0.0
    %3549 = vmatpush1.msra.mxu0 0.0
    %3550 = vmatprep.subr.mxu0 0.0
    %3551 = vmatpush1.msra.mxu0 0.0
    %3552 = vmatprep.subr.mxu0 0.0
    %3553 = vmatpush1.msra.mxu0 0.0
    %3554 = vmatprep.subr.mxu0 0.0
    %3555 = vmatpush1.msra.mxu0 0.0
    %3556 = vmatprep.subr.mxu0 0.0
    %3557 = vmatpush1.msra.mxu0 0.0
    %3558 = vmatprep.mubr.f32.mxu0 0.0
    %3559 = vmatmul.mubr.f32.gmra.mrb[0].mxu0 %v3492
    %v3560 = vpop.f32.mrb[0].mxu0
    %v3561 = vadd.f32 %v382, %v3560
    %v3562 = vpop.f32.mrb[0].mxu0
    %3563 = vdwg.mxu0
    %v3564 = vmax.f32 %v3561, 0.0
    %v3565 = vmul.f32 %v3564, %v478
    %v3566 = vsel %vm480, %v3565, 0.0
    %3567 = vadd.xlane.f32.xlu0 %v3566
    %v3568 = vpop.xlane.xlu0 %3567
    %v3569 = vadd.f32 %v3568, %v487
    %v3570 = vtanh.pop %v3569
    %v3571 = vmul.f32 %v3564, %v493
    %v3572 = vsel %vm480, %v3571, 0.0
    %3573 = vadd.xlane.f32.xlu0 %v3572
    %v3574 = vpop.xlane.xlu0 %3573
    %v3575 = vadd.f32 %v3574, %v487
    %v3576 = vtanh.pop %v3575
    %3578 = vset.pattern.permute.xlu0 0
    %3579 = vperm.xlu0 %3578, %v3287
    %v3580 = vpop.permute.xlu0 %3579
    %v3582 = vmul.f32 %v3580, %v185
    %3584 = vset.pattern.permute.xlu0 1
    %3585 = vperm.xlu0 %3584, %v3293
    %v3586 = vpop.permute.xlu0 %3585
    %v3588 = vmul.f32 %v3586, %v190
    %v3589 = vadd.f32 %v3582, %v3588
    %v3590 = vadd.f32 %v3589, %v174
    %v3591 = vmax.f32 %v3590, 0.0
    %v3593 = vsel %vm199, %v3591, 0
    %3595 = vmatprep.subr.mxu0 0.0
    %3596 = vmatpush1.msra.mxu0 %v31
    %3597 = vmatprep.subr.mxu0 0.0
    %3598 = vmatpush1.msra.mxu0 %v32
    %3599 = vmatprep.subr.mxu0 0.0
    %3600 = vmatpush1.msra.mxu0 %v33
    %3601 = vmatprep.subr.mxu0 0.0
    %3602 = vmatpush1.msra.mxu0 %v34
    %3603 = vmatprep.subr.mxu0 0.0
    %3604 = vmatpush1.msra.mxu0 0.0
    %3605 = vmatprep.subr.mxu0 0.0
    %3606 = vmatpush1.msra.mxu0 0.0
    %3607 = vmatprep.subr.mxu0 0.0
    %3608 = vmatpush1.msra.mxu0 0.0
    %3609 = vmatprep.subr.mxu0 0.0
    %3610 = vmatpush1.msra.mxu0 0.0
    %3611 = vmatprep.subr.mxu0 0.0
    %3612 = vmatpush1.msra.mxu0 0.0
    %3613 = vmatprep.subr.mxu0 0.0
    %3614 = vmatpush1.msra.mxu0 0.0
    %3615 = vmatprep.subr.mxu0 0.0
    %3616 = vmatpush1.msra.mxu0 0.0
    %3617 = vmatprep.subr.mxu0 0.0
    %3618 = vmatpush1.msra.mxu0 0.0
    %3619 = vmatprep.subr.mxu0 0.0
    %3620 = vmatpush1.msra.mxu0 0.0
    %3621 = vmatprep.subr.mxu0 0.0
    %3622 = vmatpush1.msra.mxu0 0.0
    %3623 = vmatprep.subr.mxu0 0.0
    %3624 = vmatpush1.msra.mxu0 0.0
    %3625 = vmatprep.subr.mxu0 0.0
    %3626 = vmatpush1.msra.mxu0 0.0
    %3627 = vmatprep.subr.mxu0 0.0
    %3628 = vmatpush1.msra.mxu0 0.0
    %3629 = vmatprep.subr.mxu0 0.0
    %3630 = vmatpush1.msra.mxu0 0.0
    %3631 = vmatprep.subr.mxu0 0.0
    %3632 = vmatpush1.msra.mxu0 0.0
    %3633 = vmatprep.subr.mxu0 0.0
    %3634 = vmatpush1.msra.mxu0 0.0
    %3635 = vmatprep.subr.mxu0 0.0
    %3636 = vmatpush1.msra.mxu0 0.0
    %3637 = vmatprep.subr.mxu0 0.0
    %3638 = vmatpush1.msra.mxu0 0.0
    %3639 = vmatprep.subr.mxu0 0.0
    %3640 = vmatpush1.msra.mxu0 0.0
    %3641 = vmatprep.subr.mxu0 0.0
    %3642 = vmatpush1.msra.mxu0 0.0
    %3643 = vmatprep.subr.mxu0 0.0
    %3644 = vmatpush1.msra.mxu0 0.0
    %3645 = vmatprep.subr.mxu0 0.0
    %3646 = vmatpush1.msra.mxu0 0.0
    %3647 = vmatprep.subr.mxu0 0.0
    %3648 = vmatpush1.msra.mxu0 0.0
    %3649 = vmatprep.subr.mxu0 0.0
    %3650 = vmatpush1.msra.mxu0 0.0
    %3651 = vmatprep.subr.mxu0 0.0
    %3652 = vmatpush1.msra.mxu0 0.0
    %3653 = vmatprep.subr.mxu0 0.0
    %3654 = vmatpush1.msra.mxu0 0.0
    %3655 = vmatprep.subr.mxu0 0.0
    %3656 = vmatpush1.msra.mxu0 0.0
    %3657 = vmatprep.subr.mxu0 0.0
    %3658 = vmatpush1.msra.mxu0 0.0
    %3659 = vmatprep.mubr.f32.mxu0 0.0
    %3660 = vmatmul.mubr.f32.gmra.mrb[0].mxu0 %v3593
    %v3661 = vpop.f32.mrb[0].mxu0
    %v3662 = vadd.f32 %v198, %v3661
    %v3663 = vpop.f32.mrb[0].mxu0
    %3664 = vdwg.mxu0
    %v3665 = vmax.f32 %v3662, 0.0
    %3666 = vrot.lane.b32.xlu0 %v3205, 96
    %v3667 = vpop.permute.xlu0 %3666
    %v3669 = vsel %vm199, %v3665, %v3667
    %v3671 = vsel %vm279, %v3669, 0
    %3673 = vmatprep.subr.mxu0 0.0
    %3674 = vmatpush1.msra.mxu0 %v14
    %3675 = vmatprep.subr.mxu0 0.0
    %3676 = vmatpush1.msra.mxu0 %v15
    %3677 = vmatprep.subr.mxu0 0.0
    %3678 = vmatpush1.msra.mxu0 %v16
    %3679 = vmatprep.subr.mxu0 0.0
    %3680 = vmatpush1.msra.mxu0 %v17
    %3681 = vmatprep.subr.mxu0 0.0
    %3682 = vmatpush1.msra.mxu0 %v18
    %3683 = vmatprep.subr.mxu0 0.0
    %3684 = vmatpush1.msra.mxu0 %v19
    %3685 = vmatprep.subr.mxu0 0.0
    %3686 = vmatpush1.msra.mxu0 %v20
    %3687 = vmatprep.subr.mxu0 0.0
    %3688 = vmatpush1.msra.mxu0 %v21
    %3689 = vmatprep.subr.mxu0 0.0
    %3690 = vmatpush1.msra.mxu0 0.0
    %3691 = vmatprep.subr.mxu0 0.0
    %3692 = vmatpush1.msra.mxu0 0.0
    %3693 = vmatprep.subr.mxu0 0.0
    %3694 = vmatpush1.msra.mxu0 0.0
    %3695 = vmatprep.subr.mxu0 0.0
    %3696 = vmatpush1.msra.mxu0 0.0
    %3697 = vmatprep.subr.mxu0 0.0
    %3698 = vmatpush1.msra.mxu0 0.0
    %3699 = vmatprep.subr.mxu0 0.0
    %3700 = vmatpush1.msra.mxu0 0.0
    %3701 = vmatprep.subr.mxu0 0.0
    %3702 = vmatpush1.msra.mxu0 0.0
    %3703 = vmatprep.subr.mxu0 0.0
    %3704 = vmatpush1.msra.mxu0 0.0
    %3705 = vmatprep.subr.mxu0 0.0
    %3706 = vmatpush1.msra.mxu0 0.0
    %3707 = vmatprep.subr.mxu0 0.0
    %3708 = vmatpush1.msra.mxu0 0.0
    %3709 = vmatprep.subr.mxu0 0.0
    %3710 = vmatpush1.msra.mxu0 0.0
    %3711 = vmatprep.subr.mxu0 0.0
    %3712 = vmatpush1.msra.mxu0 0.0
    %3713 = vmatprep.subr.mxu0 0.0
    %3714 = vmatpush1.msra.mxu0 0.0
    %3715 = vmatprep.subr.mxu0 0.0
    %3716 = vmatpush1.msra.mxu0 0.0
    %3717 = vmatprep.subr.mxu0 0.0
    %3718 = vmatpush1.msra.mxu0 0.0
    %3719 = vmatprep.subr.mxu0 0.0
    %3720 = vmatpush1.msra.mxu0 0.0
    %3721 = vmatprep.subr.mxu0 0.0
    %3722 = vmatpush1.msra.mxu0 0.0
    %3723 = vmatprep.subr.mxu0 0.0
    %3724 = vmatpush1.msra.mxu0 0.0
    %3725 = vmatprep.subr.mxu0 0.0
    %3726 = vmatpush1.msra.mxu0 0.0
    %3727 = vmatprep.subr.mxu0 0.0
    %3728 = vmatpush1.msra.mxu0 0.0
    %3729 = vmatprep.subr.mxu0 0.0
    %3730 = vmatpush1.msra.mxu0 0.0
    %3731 = vmatprep.subr.mxu0 0.0
    %3732 = vmatpush1.msra.mxu0 0.0
    %3733 = vmatprep.subr.mxu0 0.0
    %3734 = vmatpush1.msra.mxu0 0.0
    %3735 = vmatprep.subr.mxu0 0.0
    %3736 = vmatpush1.msra.mxu0 0.0
    %3737 = vmatprep.mubr.f32.mxu0 0.0
    %3738 = vmatmul.mubr.f32.gmra.mrb[0].mxu0 %v3671
    %v3739 = vpop.f32.mrb[0].mxu0
    %v3740 = vadd.f32 %v278, %v3739
    %v3741 = vpop.f32.mrb[0].mxu0
    %3742 = vdwg.mxu0
    %v3743 = vmul.f32 %v3740, 0.5
    %v3744 = vtanh.pop %v3743
    %v3745 = vmul.f32 %v3744, 0.5
    %v3746 = vadd.f32 %v3745, 0.5
    %3748 = vrot.lane.b32.xlu0 %v3740, 32
    %v3749 = vpop.permute.xlu0 %3748
    %v3751 = vmul.f32 %v3746, %v3749
    %3753 = vrot.lane.b32.xlu0 %v3751, 64
    %v3754 = vpop.permute.xlu0 %3753
    %v3756 = vadd.f32 %v3740, %v3754
    %v3757 = vtanh.pop %v3756
    %v3758 = vsub.f32 %v3205, %v3757
    %3760 = vrot.lane.b32.xlu0 %v3758, 96
    %v3761 = vpop.permute.xlu0 %3760
    %v3763 = vmul.f32 %v3746, %v3761
    %3765 = vrot.lane.b32.xlu0 %v3763, 32
    %v3766 = vpop.permute.xlu0 %3765
    %v3768 = vadd.f32 %v3757, %v3766
    %3770 = vrot.lane.b32.xlu0 %v3768, 64
    %v3771 = vpop.permute.xlu0 %3770
    %v3772 = vsel %vm199, %v3771, 0
    %3774 = vmatprep.subr.mxu0 0.0
    %3775 = vmatpush1.msra.mxu0 %v391
    %3776 = vmatprep.subr.mxu0 0.0
    %3777 = vmatpush1.msra.mxu0 %v393
    %3778 = vmatprep.subr.mxu0 0.0
    %3779 = vmatpush1.msra.mxu0 %v395
    %3780 = vmatprep.subr.mxu0 0.0
    %3781 = vmatpush1.msra.mxu0 %v397
    %3782 = vmatprep.subr.mxu0 0.0
    %3783 = vmatpush1.msra.mxu0 0.0
    %3784 = vmatprep.subr.mxu0 0.0
    %3785 = vmatpush1.msra.mxu0 0.0
    %3786 = vmatprep.subr.mxu0 0.0
    %3787 = vmatpush1.msra.mxu0 0.0
    %3788 = vmatprep.subr.mxu0 0.0
    %3789 = vmatpush1.msra.mxu0 0.0
    %3790 = vmatprep.subr.mxu0 0.0
    %3791 = vmatpush1.msra.mxu0 0.0
    %3792 = vmatprep.subr.mxu0 0.0
    %3793 = vmatpush1.msra.mxu0 0.0
    %3794 = vmatprep.subr.mxu0 0.0
    %3795 = vmatpush1.msra.mxu0 0.0
    %3796 = vmatprep.subr.mxu0 0.0
    %3797 = vmatpush1.msra.mxu0 0.0
    %3798 = vmatprep.subr.mxu0 0.0
    %3799 = vmatpush1.msra.mxu0 0.0
    %3800 = vmatprep.subr.mxu0 0.0
    %3801 = vmatpush1.msra.mxu0 0.0
    %3802 = vmatprep.subr.mxu0 0.0
    %3803 = vmatpush1.msra.mxu0 0.0
    %3804 = vmatprep.subr.mxu0 0.0
    %3805 = vmatpush1.msra.mxu0 0.0
    %3806 = vmatprep.subr.mxu0 0.0
    %3807 = vmatpush1.msra.mxu0 0.0
    %3808 = vmatprep.subr.mxu0 0.0
    %3809 = vmatpush1.msra.mxu0 0.0
    %3810 = vmatprep.subr.mxu0 0.0
    %3811 = vmatpush1.msra.mxu0 0.0
    %3812 = vmatprep.subr.mxu0 0.0
    %3813 = vmatpush1.msra.mxu0 0.0
    %3814 = vmatprep.subr.mxu0 0.0
    %3815 = vmatpush1.msra.mxu0 0.0
    %3816 = vmatprep.subr.mxu0 0.0
    %3817 = vmatpush1.msra.mxu0 0.0
    %3818 = vmatprep.subr.mxu0 0.0
    %3819 = vmatpush1.msra.mxu0 0.0
    %3820 = vmatprep.subr.mxu0 0.0
    %3821 = vmatpush1.msra.mxu0 0.0
    %3822 = vmatprep.subr.mxu0 0.0
    %3823 = vmatpush1.msra.mxu0 0.0
    %3824 = vmatprep.subr.mxu0 0.0
    %3825 = vmatpush1.msra.mxu0 0.0
    %3826 = vmatprep.subr.mxu0 0.0
    %3827 = vmatpush1.msra.mxu0 0.0
    %3828 = vmatprep.subr.mxu0 0.0
    %3829 = vmatpush1.msra.mxu0 0.0
    %3830 = vmatprep.subr.mxu0 0.0
    %3831 = vmatpush1.msra.mxu0 0.0
    %3832 = vmatprep.subr.mxu0 0.0
    %3833 = vmatpush1.msra.mxu0 0.0
    %3834 = vmatprep.subr.mxu0 0.0
    %3835 = vmatpush1.msra.mxu0 0.0
    %3836 = vmatprep.subr.mxu0 0.0
    %3837 = vmatpush1.msra.mxu0 0.0
    %3838 = vmatprep.mubr.f32.mxu0 0.0
    %3839 = vmatmul.mubr.f32.gmra.mrb[0].mxu0 %v3772
    %v3840 = vpop.f32.mrb[0].mxu0
    %v3841 = vadd.f32 %v382, %v3840
    %v3842 = vpop.f32.mrb[0].mxu0
    %3843 = vdwg.mxu0
    %v3844 = vmax.f32 %v3841, 0.0
    %v3845 = vmul.f32 %v3844, %v478
    %v3846 = vsel %vm480, %v3845, 0.0
    %3847 = vadd.xlane.f32.xlu0 %v3846
    %v3848 = vpop.xlane.xlu0 %3847
    %v3849 = vadd.f32 %v3848, %v487
    %v3850 = vtanh.pop %v3849
    %v3851 = vmul.f32 %v3844, %v493
    %v3852 = vsel %vm480, %v3851, 0.0
    %3853 = vadd.xlane.f32.xlu0 %v3852
    %v3854 = vpop.xlane.xlu0 %3853
    %v3855 = vadd.f32 %v3854, %v487
    %v3856 = vtanh.pop %v3855
    %3858 = vset.pattern.permute.xlu0 0
    %3859 = vperm.xlu0 %3858, %v3570
    %v3860 = vpop.permute.xlu0 %3859
    %v3862 = vmul.f32 %v3860, %v185
    %3864 = vset.pattern.permute.xlu0 1
    %3865 = vperm.xlu0 %3864, %v3576
    %v3866 = vpop.permute.xlu0 %3865
    %v3868 = vmul.f32 %v3866, %v190
    %v3869 = vadd.f32 %v3862, %v3868
    %v3871 = vrot.slane %v174, 4
    %v3873 = vadd.f32 %v3869, %v3871
    %v3874 = vmax.f32 %v3873, 0.0
    %v3876 = vsel %vm199, %v3874, 0
    %3878 = vmatprep.subr.mxu0 0.0
    %3879 = vmatpush1.msra.mxu0 %v31
    %3880 = vmatprep.subr.mxu0 0.0
    %3881 = vmatpush1.msra.mxu0 %v32
    %3882 = vmatprep.subr.mxu0 0.0
    %3883 = vmatpush1.msra.mxu0 %v33
    %3884 = vmatprep.subr.mxu0 0.0
    %3885 = vmatpush1.msra.mxu0 %v34
    %3886 = vmatprep.subr.mxu0 0.0
    %3887 = vmatpush1.msra.mxu0 0.0
    %3888 = vmatprep.subr.mxu0 0.0
    %3889 = vmatpush1.msra.mxu0 0.0
    %3890 = vmatprep.subr.mxu0 0.0
    %3891 = vmatpush1.msra.mxu0 0.0
    %3892 = vmatprep.subr.mxu0 0.0
    %3893 = vmatpush1.msra.mxu0 0.0
    %3894 = vmatprep.subr.mxu0 0.0
    %3895 = vmatpush1.msra.mxu0 0.0
    %3896 = vmatprep.subr.mxu0 0.0
    %3897 = vmatpush1.msra.mxu0 0.0
    %3898 = vmatprep.subr.mxu0 0.0
    %3899 = vmatpush1.msra.mxu0 0.0
    %3900 = vmatprep.subr.mxu0 0.0
    %3901 = vmatpush1.msra.mxu0 0.0
    %3902 = vmatprep.subr.mxu0 0.0
    %3903 = vmatpush1.msra.mxu0 0.0
    %3904 = vmatprep.subr.mxu0 0.0
    %3905 = vmatpush1.msra.mxu0 0.0
    %3906 = vmatprep.subr.mxu0 0.0
    %3907 = vmatpush1.msra.mxu0 0.0
    %3908 = vmatprep.subr.mxu0 0.0
    %3909 = vmatpush1.msra.mxu0 0.0
    %3910 = vmatprep.subr.mxu0 0.0
    %3911 = vmatpush1.msra.mxu0 0.0
    %3912 = vmatprep.subr.mxu0 0.0
    %3913 = vmatpush1.msra.mxu0 0.0
    %3914 = vmatprep.subr.mxu0 0.0
    %3915 = vmatpush1.msra.mxu0 0.0
    %3916 = vmatprep.subr.mxu0 0.0
    %3917 = vmatpush1.msra.mxu0 0.0
    %3918 = vmatprep.subr.mxu0 0.0
    %3919 = vmatpush1.msra.mxu0 0.0
    %3920 = vmatprep.subr.mxu0 0.0
    %3921 = vmatpush1.msra.mxu0 0.0
    %3922 = vmatprep.subr.mxu0 0.0
    %3923 = vmatpush1.msra.mxu0 0.0
    %3924 = vmatprep.subr.mxu0 0.0
    %3925 = vmatpush1.msra.mxu0 0.0
    %3926 = vmatprep.subr.mxu0 0.0
    %3927 = vmatpush1.msra.mxu0 0.0
    %3928 = vmatprep.subr.mxu0 0.0
    %3929 = vmatpush1.msra.mxu0 0.0
    %3930 = vmatprep.subr.mxu0 0.0
    %3931 = vmatpush1.msra.mxu0 0.0
    %3932 = vmatprep.subr.mxu0 0.0
    %3933 = vmatpush1.msra.mxu0 0.0
    %3934 = vmatprep.subr.mxu0 0.0
    %3935 = vmatpush1.msra.mxu0 0.0
    %3936 = vmatprep.subr.mxu0 0.0
    %3937 = vmatpush1.msra.mxu0 0.0
    %3938 = vmatprep.subr.mxu0 0.0
    %3939 = vmatpush1.msra.mxu0 0.0
    %3940 = vmatprep.subr.mxu0 0.0
    %3941 = vmatpush1.msra.mxu0 0.0
    %3942 = vmatprep.mubr.f32.mxu0 0.0
    %3943 = vmatmul.mubr.f32.gmra.mrb[0].mxu0 %v3876
    %v3944 = vpop.f32.mrb[0].mxu0
    %v3945 = vadd.f32 %v198, %v3944
    %v3946 = vpop.f32.mrb[0].mxu0
    %3947 = vdwg.mxu0
    %v3948 = vmax.f32 %v3945, 0.0
    %3949 = vrot.lane.b32.xlu0 %v3488, 96
    %v3950 = vpop.permute.xlu0 %3949
    %v3952 = vsel %vm199, %v3948, %v3950
    %v3954 = vsel %vm279, %v3952, 0
    %3956 = vmatprep.subr.mxu0 0.0
    %3957 = vmatpush1.msra.mxu0 %v14
    %3958 = vmatprep.subr.mxu0 0.0
    %3959 = vmatpush1.msra.mxu0 %v15
    %3960 = vmatprep.subr.mxu0 0.0
    %3961 = vmatpush1.msra.mxu0 %v16
    %3962 = vmatprep.subr.mxu0 0.0
    %3963 = vmatpush1.msra.mxu0 %v17
    %3964 = vmatprep.subr.mxu0 0.0
    %3965 = vmatpush1.msra.mxu0 %v18
    %3966 = vmatprep.subr.mxu0 0.0
    %3967 = vmatpush1.msra.mxu0 %v19
    %3968 = vmatprep.subr.mxu0 0.0
    %3969 = vmatpush1.msra.mxu0 %v20
    %3970 = vmatprep.subr.mxu0 0.0
    %3971 = vmatpush1.msra.mxu0 %v21
    %3972 = vmatprep.subr.mxu0 0.0
    %3973 = vmatpush1.msra.mxu0 0.0
    %3974 = vmatprep.subr.mxu0 0.0
    %3975 = vmatpush1.msra.mxu0 0.0
    %3976 = vmatprep.subr.mxu0 0.0
    %3977 = vmatpush1.msra.mxu0 0.0
    %3978 = vmatprep.subr.mxu0 0.0
    %3979 = vmatpush1.msra.mxu0 0.0
    %3980 = vmatprep.subr.mxu0 0.0
    %3981 = vmatpush1.msra.mxu0 0.0
    %3982 = vmatprep.subr.mxu0 0.0
    %3983 = vmatpush1.msra.mxu0 0.0
    %3984 = vmatprep.subr.mxu0 0.0
    %3985 = vmatpush1.msra.mxu0 0.0
    %3986 = vmatprep.subr.mxu0 0.0
    %3987 = vmatpush1.msra.mxu0 0.0
    %3988 = vmatprep.subr.mxu0 0.0
    %3989 = vmatpush1.msra.mxu0 0.0
    %3990 = vmatprep.subr.mxu0 0.0
    %3991 = vmatpush1.msra.mxu0 0.0
    %3992 = vmatprep.subr.mxu0 0.0
    %3993 = vmatpush1.msra.mxu0 0.0
    %3994 = vmatprep.subr.mxu0 0.0
    %3995 = vmatpush1.msra.mxu0 0.0
    %3996 = vmatprep.subr.mxu0 0.0
    %3997 = vmatpush1.msra.mxu0 0.0
    %3998 = vmatprep.subr.mxu0 0.0
    %3999 = vmatpush1.msra.mxu0 0.0
    %4000 = vmatprep.subr.mxu0 0.0
    %4001 = vmatpush1.msra.mxu0 0.0
    %4002 = vmatprep.subr.mxu0 0.0
    %4003 = vmatpush1.msra.mxu0 0.0
    %4004 = vmatprep.subr.mxu0 0.0
    %4005 = vmatpush1.msra.mxu0 0.0
    %4006 = vmatprep.subr.mxu0 0.0
    %4007 = vmatpush1.msra.mxu0 0.0
    %4008 = vmatprep.subr.mxu0 0.0
    %4009 = vmatpush1.msra.mxu0 0.0
    %4010 = vmatprep.subr.mxu0 0.0
    %4011 = vmatpush1.msra.mxu0 0.0
    %4012 = vmatprep.subr.mxu0 0.0
    %4013 = vmatpush1.msra.mxu0 0.0
    %4014 = vmatprep.subr.mxu0 0.0
    %4015 = vmatpush1.msra.mxu0 0.0
    %4016 = vmatprep.subr.mxu0 0.0
    %4017 = vmatpush1.msra.mxu0 0.0
    %4018 = vmatprep.subr.mxu0 0.0
    %4019 = vmatpush1.msra.mxu0 0.0
    %4020 = vmatprep.mubr.f32.mxu0 0.0
    %4021 = vmatmul.mubr.f32.gmra.mrb[0].mxu0 %v3954
    %v4022 = vpop.f32.mrb[0].mxu0
    %v4023 = vadd.f32 %v278, %v4022
    %v4024 = vpop.f32.mrb[0].mxu0
    %4025 = vdwg.mxu0
    %v4026 = vmul.f32 %v4023, 0.5
    %v4027 = vtanh.pop %v4026
    %v4028 = vmul.f32 %v4027, 0.5
    %v4029 = vadd.f32 %v4028, 0.5
    %4031 = vrot.lane.b32.xlu0 %v4023, 32
    %v4032 = vpop.permute.xlu0 %4031
    %v4034 = vmul.f32 %v4029, %v4032
    %4036 = vrot.lane.b32.xlu0 %v4034, 64
    %v4037 = vpop.permute.xlu0 %4036
    %v4039 = vadd.f32 %v4023, %v4037
    %v4040 = vtanh.pop %v4039
    %v4041 = vsub.f32 %v3488, %v4040
    %4043 = vrot.lane.b32.xlu0 %v4041, 96
    %v4044 = vpop.permute.xlu0 %4043
    %v4046 = vmul.f32 %v4029, %v4044
    %4048 = vrot.lane.b32.xlu0 %v4046, 32
    %v4049 = vpop.permute.xlu0 %4048
    %v4051 = vadd.f32 %v4040, %v4049
    %4053 = vrot.lane.b32.xlu0 %v4051, 64
    %v4054 = vpop.permute.xlu0 %4053
    %v4055 = vsel %vm199, %v4054, 0
    %4057 = vmatprep.subr.mxu0 0.0
    %4058 = vmatpush1.msra.mxu0 %v391
    %4059 = vmatprep.subr.mxu0 0.0
    %4060 = vmatpush1.msra.mxu0 %v393
    %4061 = vmatprep.subr.mxu0 0.0
    %4062 = vmatpush1.msra.mxu0 %v395
    %4063 = vmatprep.subr.mxu0 0.0
    %4064 = vmatpush1.msra.mxu0 %v397
    %4065 = vmatprep.subr.mxu0 0.0
    %4066 = vmatpush1.msra.mxu0 0.0
    %4067 = vmatprep.subr.mxu0 0.0
    %4068 = vmatpush1.msra.mxu0 0.0
    %4069 = vmatprep.subr.mxu0 0.0
    %4070 = vmatpush1.msra.mxu0 0.0
    %4071 = vmatprep.subr.mxu0 0.0
    %4072 = vmatpush1.msra.mxu0 0.0
    %4073 = vmatprep.subr.mxu0 0.0
    %4074 = vmatpush1.msra.mxu0 0.0
    %4075 = vmatprep.subr.mxu0 0.0
    %4076 = vmatpush1.msra.mxu0 0.0
    %4077 = vmatprep.subr.mxu0 0.0
    %4078 = vmatpush1.msra.mxu0 0.0
    %4079 = vmatprep.subr.mxu0 0.0
    %4080 = vmatpush1.msra.mxu0 0.0
    %4081 = vmatprep.subr.mxu0 0.0
    %4082 = vmatpush1.msra.mxu0 0.0
    %4083 = vmatprep.subr.mxu0 0.0
    %4084 = vmatpush1.msra.mxu0 0.0
    %4085 = vmatprep.subr.mxu0 0.0
    %4086 = vmatpush1.msra.mxu0 0.0
    %4087 = vmatprep.subr.mxu0 0.0
    %4088 = vmatpush1.msra.mxu0 0.0
    %4089 = vmatprep.subr.mxu0 0.0
    %4090 = vmatpush1.msra.mxu0 0.0
    %4091 = vmatprep.subr.mxu0 0.0
    %4092 = vmatpush1.msra.mxu0 0.0
    %4093 = vmatprep.subr.mxu0 0.0
    %4094 = vmatpush1.msra.mxu0 0.0
    %4095 = vmatprep.subr.mxu0 0.0
    %4096 = vmatpush1.msra.mxu0 0.0
    %4097 = vmatprep.subr.mxu0 0.0
    %4098 = vmatpush1.msra.mxu0 0.0
    %4099 = vmatprep.subr.mxu0 0.0
    %4100 = vmatpush1.msra.mxu0 0.0
    %4101 = vmatprep.subr.mxu0 0.0
    %4102 = vmatpush1.msra.mxu0 0.0
    %4103 = vmatprep.subr.mxu0 0.0
    %4104 = vmatpush1.msra.mxu0 0.0
    %4105 = vmatprep.subr.mxu0 0.0
    %4106 = vmatpush1.msra.mxu0 0.0
    %4107 = vmatprep.subr.mxu0 0.0
    %4108 = vmatpush1.msra.mxu0 0.0
    %4109 = vmatprep.subr.mxu0 0.0
    %4110 = vmatpush1.msra.mxu0 0.0
    %4111 = vmatprep.subr.mxu0 0.0
    %4112 = vmatpush1.msra.mxu0 0.0
    %4113 = vmatprep.subr.mxu0 0.0
    %4114 = vmatpush1.msra.mxu0 0.0
    %4115 = vmatprep.subr.mxu0 0.0
    %4116 = vmatpush1.msra.mxu0 0.0
    %4117 = vmatprep.subr.mxu0 0.0
    %4118 = vmatpush1.msra.mxu0 0.0
    %4119 = vmatprep.subr.mxu0 0.0
    %4120 = vmatpush1.msra.mxu0 0.0
    %4121 = vmatprep.mubr.f32.mxu0 0.0
    %4122 = vmatmul.mubr.f32.gmra.mrb[0].mxu0 %v4055
    %v4123 = vpop.f32.mrb[0].mxu0
    %v4124 = vadd.f32 %v382, %v4123
    %v4125 = vpop.f32.mrb[0].mxu0
    %4126 = vdwg.mxu0
    %v4127 = vmax.f32 %v4124, 0.0
    %v4128 = vmul.f32 %v4127, %v478
    %v4129 = vsel %vm480, %v4128, 0.0
    %4130 = vadd.xlane.f32.xlu0 %v4129
    %v4131 = vpop.xlane.xlu0 %4130
    %v4132 = vadd.f32 %v4131, %v487
    %v4133 = vtanh.pop %v4132
    %v4134 = vmul.f32 %v4127, %v493
    %v4135 = vsel %vm480, %v4134, 0.0
    %4136 = vadd.xlane.f32.xlu0 %v4135
    %v4137 = vpop.xlane.xlu0 %4136
    %v4138 = vadd.f32 %v4137, %v487
    %v4139 = vtanh.pop %v4138
    %4141 = vset.pattern.permute.xlu0 0
    %4142 = vperm.xlu0 %4141, %v3850
    %v4143 = vpop.permute.xlu0 %4142
    %v4145 = vmul.f32 %v4143, %v185
    %4147 = vset.pattern.permute.xlu0 1
    %4148 = vperm.xlu0 %4147, %v3856
    %v4149 = vpop.permute.xlu0 %4148
    %v4151 = vmul.f32 %v4149, %v190
    %v4152 = vadd.f32 %v4145, %v4151
    %v4153 = vadd.f32 %v4152, %v179
    %v4154 = vmax.f32 %v4153, 0.0
    %v4156 = vsel %vm199, %v4154, 0
    %4158 = vmatprep.subr.mxu0 0.0
    %4159 = vmatpush1.msra.mxu0 %v31
    %4160 = vmatprep.subr.mxu0 0.0
    %4161 = vmatpush1.msra.mxu0 %v32
    %4162 = vmatprep.subr.mxu0 0.0
    %4163 = vmatpush1.msra.mxu0 %v33
    %4164 = vmatprep.subr.mxu0 0.0
    %4165 = vmatpush1.msra.mxu0 %v34
    %4166 = vmatprep.subr.mxu0 0.0
    %4167 = vmatpush1.msra.mxu0 0.0
    %4168 = vmatprep.subr.mxu0 0.0
    %4169 = vmatpush1.msra.mxu0 0.0
    %4170 = vmatprep.subr.mxu0 0.0
    %4171 = vmatpush1.msra.mxu0 0.0
    %4172 = vmatprep.subr.mxu0 0.0
    %4173 = vmatpush1.msra.mxu0 0.0
    %4174 = vmatprep.subr.mxu0 0.0
    %4175 = vmatpush1.msra.mxu0 0.0
    %4176 = vmatprep.subr.mxu0 0.0
    %4177 = vmatpush1.msra.mxu0 0.0
    %4178 = vmatprep.subr.mxu0 0.0
    %4179 = vmatpush1.msra.mxu0 0.0
    %4180 = vmatprep.subr.mxu0 0.0
    %4181 = vmatpush1.msra.mxu0 0.0
    %4182 = vmatprep.subr.mxu0 0.0
    %4183 = vmatpush1.msra.mxu0 0.0
    %4184 = vmatprep.subr.mxu0 0.0
    %4185 = vmatpush1.msra.mxu0 0.0
    %4186 = vmatprep.subr.mxu0 0.0
    %4187 = vmatpush1.msra.mxu0 0.0
    %4188 = vmatprep.subr.mxu0 0.0
    %4189 = vmatpush1.msra.mxu0 0.0
    %4190 = vmatprep.subr.mxu0 0.0
    %4191 = vmatpush1.msra.mxu0 0.0
    %4192 = vmatprep.subr.mxu0 0.0
    %4193 = vmatpush1.msra.mxu0 0.0
    %4194 = vmatprep.subr.mxu0 0.0
    %4195 = vmatpush1.msra.mxu0 0.0
    %4196 = vmatprep.subr.mxu0 0.0
    %4197 = vmatpush1.msra.mxu0 0.0
    %4198 = vmatprep.subr.mxu0 0.0
    %4199 = vmatpush1.msra.mxu0 0.0
    %4200 = vmatprep.subr.mxu0 0.0
    %4201 = vmatpush1.msra.mxu0 0.0
    %4202 = vmatprep.subr.mxu0 0.0
    %4203 = vmatpush1.msra.mxu0 0.0
    %4204 = vmatprep.subr.mxu0 0.0
    %4205 = vmatpush1.msra.mxu0 0.0
    %4206 = vmatprep.subr.mxu0 0.0
    %4207 = vmatpush1.msra.mxu0 0.0
    %4208 = vmatprep.subr.mxu0 0.0
    %4209 = vmatpush1.msra.mxu0 0.0
    %4210 = vmatprep.subr.mxu0 0.0
    %4211 = vmatpush1.msra.mxu0 0.0
    %4212 = vmatprep.subr.mxu0 0.0
    %4213 = vmatpush1.msra.mxu0 0.0
    %4214 = vmatprep.subr.mxu0 0.0
    %4215 = vmatpush1.msra.mxu0 0.0
    %4216 = vmatprep.subr.mxu0 0.0
    %4217 = vmatpush1.msra.mxu0 0.0
    %4218 = vmatprep.subr.mxu0 0.0
    %4219 = vmatpush1.msra.mxu0 0.0
    %4220 = vmatprep.subr.mxu0 0.0
    %4221 = vmatpush1.msra.mxu0 0.0
    %4222 = vmatprep.mubr.f32.mxu0 0.0
    %4223 = vmatmul.mubr.f32.gmra.mrb[0].mxu0 %v4156
    %v4224 = vpop.f32.mrb[0].mxu0
    %v4225 = vadd.f32 %v198, %v4224
    %v4226 = vpop.f32.mrb[0].mxu0
    %4227 = vdwg.mxu0
    %v4228 = vmax.f32 %v4225, 0.0
    %4229 = vrot.lane.b32.xlu0 %v3768, 96
    %v4230 = vpop.permute.xlu0 %4229
    %v4232 = vsel %vm199, %v4228, %v4230
    %v4234 = vsel %vm279, %v4232, 0
    %4236 = vmatprep.subr.mxu0 0.0
    %4237 = vmatpush1.msra.mxu0 %v14
    %4238 = vmatprep.subr.mxu0 0.0
    %4239 = vmatpush1.msra.mxu0 %v15
    %4240 = vmatprep.subr.mxu0 0.0
    %4241 = vmatpush1.msra.mxu0 %v16
    %4242 = vmatprep.subr.mxu0 0.0
    %4243 = vmatpush1.msra.mxu0 %v17
    %4244 = vmatprep.subr.mxu0 0.0
    %4245 = vmatpush1.msra.mxu0 %v18
    %4246 = vmatprep.subr.mxu0 0.0
    %4247 = vmatpush1.msra.mxu0 %v19
    %4248 = vmatprep.subr.mxu0 0.0
    %4249 = vmatpush1.msra.mxu0 %v20
    %4250 = vmatprep.subr.mxu0 0.0
    %4251 = vmatpush1.msra.mxu0 %v21
    %4252 = vmatprep.subr.mxu0 0.0
    %4253 = vmatpush1.msra.mxu0 0.0
    %4254 = vmatprep.subr.mxu0 0.0
    %4255 = vmatpush1.msra.mxu0 0.0
    %4256 = vmatprep.subr.mxu0 0.0
    %4257 = vmatpush1.msra.mxu0 0.0
    %4258 = vmatprep.subr.mxu0 0.0
    %4259 = vmatpush1.msra.mxu0 0.0
    %4260 = vmatprep.subr.mxu0 0.0
    %4261 = vmatpush1.msra.mxu0 0.0
    %4262 = vmatprep.subr.mxu0 0.0
    %4263 = vmatpush1.msra.mxu0 0.0
    %4264 = vmatprep.subr.mxu0 0.0
    %4265 = vmatpush1.msra.mxu0 0.0
    %4266 = vmatprep.subr.mxu0 0.0
    %4267 = vmatpush1.msra.mxu0 0.0
    %4268 = vmatprep.subr.mxu0 0.0
    %4269 = vmatpush1.msra.mxu0 0.0
    %4270 = vmatprep.subr.mxu0 0.0
    %4271 = vmatpush1.msra.mxu0 0.0
    %4272 = vmatprep.subr.mxu0 0.0
    %4273 = vmatpush1.msra.mxu0 0.0
    %4274 = vmatprep.subr.mxu0 0.0
    %4275 = vmatpush1.msra.mxu0 0.0
    %4276 = vmatprep.subr.mxu0 0.0
    %4277 = vmatpush1.msra.mxu0 0.0
    %4278 = vmatprep.subr.mxu0 0.0
    %4279 = vmatpush1.msra.mxu0 0.0
    %4280 = vmatprep.subr.mxu0 0.0
    %4281 = vmatpush1.msra.mxu0 0.0
    %4282 = vmatprep.subr.mxu0 0.0
    %4283 = vmatpush1.msra.mxu0 0.0
    %4284 = vmatprep.subr.mxu0 0.0
    %4285 = vmatpush1.msra.mxu0 0.0
    %4286 = vmatprep.subr.mxu0 0.0
    %4287 = vmatpush1.msra.mxu0 0.0
    %4288 = vmatprep.subr.mxu0 0.0
    %4289 = vmatpush1.msra.mxu0 0.0
    %4290 = vmatprep.subr.mxu0 0.0
    %4291 = vmatpush1.msra.mxu0 0.0
    %4292 = vmatprep.subr.mxu0 0.0
    %4293 = vmatpush1.msra.mxu0 0.0
    %4294 = vmatprep.subr.mxu0 0.0
    %4295 = vmatpush1.msra.mxu0 0.0
    %4296 = vmatprep.subr.mxu0 0.0
    %4297 = vmatpush1.msra.mxu0 0.0
    %4298 = vmatprep.subr.mxu0 0.0
    %4299 = vmatpush1.msra.mxu0 0.0
    %4300 = vmatprep.mubr.f32.mxu0 0.0
    %4301 = vmatmul.mubr.f32.gmra.mrb[0].mxu0 %v4234
    %v4302 = vpop.f32.mrb[0].mxu0
    %v4303 = vadd.f32 %v278, %v4302
    %v4304 = vpop.f32.mrb[0].mxu0
    %4305 = vdwg.mxu0
    %v4306 = vmul.f32 %v4303, 0.5
    %v4307 = vtanh.pop %v4306
    %v4308 = vmul.f32 %v4307, 0.5
    %v4309 = vadd.f32 %v4308, 0.5
    %4311 = vrot.lane.b32.xlu0 %v4303, 32
    %v4312 = vpop.permute.xlu0 %4311
    %v4314 = vmul.f32 %v4309, %v4312
    %4316 = vrot.lane.b32.xlu0 %v4314, 64
    %v4317 = vpop.permute.xlu0 %4316
    %v4319 = vadd.f32 %v4303, %v4317
    %v4320 = vtanh.pop %v4319
    %v4321 = vsub.f32 %v3768, %v4320
    %4323 = vrot.lane.b32.xlu0 %v4321, 96
    %v4324 = vpop.permute.xlu0 %4323
    %v4326 = vmul.f32 %v4309, %v4324
    %4328 = vrot.lane.b32.xlu0 %v4326, 32
    %v4329 = vpop.permute.xlu0 %4328
    %v4331 = vadd.f32 %v4320, %v4329
    %4333 = vrot.lane.b32.xlu0 %v4331, 64
    %v4334 = vpop.permute.xlu0 %4333
    %v4335 = vsel %vm199, %v4334, 0
    %4337 = vmatprep.subr.mxu0 0.0
    %4338 = vmatpush1.msra.mxu0 %v391
    %4339 = vmatprep.subr.mxu0 0.0
    %4340 = vmatpush1.msra.mxu0 %v393
    %4341 = vmatprep.subr.mxu0 0.0
    %4342 = vmatpush1.msra.mxu0 %v395
    %4343 = vmatprep.subr.mxu0 0.0
    %4344 = vmatpush1.msra.mxu0 %v397
    %4345 = vmatprep.subr.mxu0 0.0
    %4346 = vmatpush1.msra.mxu0 0.0
    %4347 = vmatprep.subr.mxu0 0.0
    %4348 = vmatpush1.msra.mxu0 0.0
    %4349 = vmatprep.subr.mxu0 0.0
    %4350 = vmatpush1.msra.mxu0 0.0
    %4351 = vmatprep.subr.mxu0 0.0
    %4352 = vmatpush1.msra.mxu0 0.0
    %4353 = vmatprep.subr.mxu0 0.0
    %4354 = vmatpush1.msra.mxu0 0.0
    %4355 = vmatprep.subr.mxu0 0.0
    %4356 = vmatpush1.msra.mxu0 0.0
    %4357 = vmatprep.subr.mxu0 0.0
    %4358 = vmatpush1.msra.mxu0 0.0
    %4359 = vmatprep.subr.mxu0 0.0
    %4360 = vmatpush1.msra.mxu0 0.0
    %4361 = vmatprep.subr.mxu0 0.0
    %4362 = vmatpush1.msra.mxu0 0.0
    %4363 = vmatprep.subr.mxu0 0.0
    %4364 = vmatpush1.msra.mxu0 0.0
    %4365 = vmatprep.subr.mxu0 0.0
    %4366 = vmatpush1.msra.mxu0 0.0
    %4367 = vmatprep.subr.mxu0 0.0
    %4368 = vmatpush1.msra.mxu0 0.0
    %4369 = vmatprep.subr.mxu0 0.0
    %4370 = vmatpush1.msra.mxu0 0.0
    %4371 = vmatprep.subr.mxu0 0.0
    %4372 = vmatpush1.msra.mxu0 0.0
    %4373 = vmatprep.subr.mxu0 0.0
    %4374 = vmatpush1.msra.mxu0 0.0
    %4375 = vmatprep.subr.mxu0 0.0
    %4376 = vmatpush1.msra.mxu0 0.0
    %4377 = vmatprep.subr.mxu0 0.0
    %4378 = vmatpush1.msra.mxu0 0.0
    %4379 = vmatprep.subr.mxu0 0.0
    %4380 = vmatpush1.msra.mxu0 0.0
    %4381 = vmatprep.subr.mxu0 0.0
    %4382 = vmatpush1.msra.mxu0 0.0
    %4383 = vmatprep.subr.mxu0 0.0
    %4384 = vmatpush1.msra.mxu0 0.0
    %4385 = vmatprep.subr.mxu0 0.0
    %4386 = vmatpush1.msra.mxu0 0.0
    %4387 = vmatprep.subr.mxu0 0.0
    %4388 = vmatpush1.msra.mxu0 0.0
    %4389 = vmatprep.subr.mxu0 0.0
    %4390 = vmatpush1.msra.mxu0 0.0
    %4391 = vmatprep.subr.mxu0 0.0
    %4392 = vmatpush1.msra.mxu0 0.0
    %4393 = vmatprep.subr.mxu0 0.0
    %4394 = vmatpush1.msra.mxu0 0.0
    %4395 = vmatprep.subr.mxu0 0.0
    %4396 = vmatpush1.msra.mxu0 0.0
    %4397 = vmatprep.subr.mxu0 0.0
    %4398 = vmatpush1.msra.mxu0 0.0
    %4399 = vmatprep.subr.mxu0 0.0
    %4400 = vmatpush1.msra.mxu0 0.0
    %4401 = vmatprep.mubr.f32.mxu0 0.0
    %4402 = vmatmul.mubr.f32.gmra.mrb[0].mxu0 %v4335
    %v4403 = vpop.f32.mrb[0].mxu0
    %v4404 = vadd.f32 %v382, %v4403
    %v4405 = vpop.f32.mrb[0].mxu0
    %4406 = vdwg.mxu0
    %v4407 = vmax.f32 %v4404, 0.0
    %v4408 = vmul.f32 %v4407, %v478
    %v4409 = vsel %vm480, %v4408, 0.0
    %4410 = vadd.xlane.f32.xlu0 %v4409
    %v4411 = vpop.xlane.xlu0 %4410
    %v4412 = vadd.f32 %v4411, %v487
    %v4413 = vtanh.pop %v4412
    %v4414 = vmul.f32 %v4407, %v493
    %v4415 = vsel %vm480, %v4414, 0.0
    %4416 = vadd.xlane.f32.xlu0 %v4415
    %v4417 = vpop.xlane.xlu0 %4416
    %v4418 = vadd.f32 %v4417, %v487
    %v4419 = vtanh.pop %v4418
    %4421 = vset.pattern.permute.xlu0 0
    %4422 = vperm.xlu0 %4421, %v4133
    %v4423 = vpop.permute.xlu0 %4422
    %v4425 = vmul.f32 %v4423, %v185
    %4427 = vset.pattern.permute.xlu0 1
    %4428 = vperm.xlu0 %4427, %v4139
    %v4429 = vpop.permute.xlu0 %4428
    %v4431 = vmul.f32 %v4429, %v190
    %v4432 = vadd.f32 %v4425, %v4431
    %v4434 = vrot.slane %v179, 4
    %v4436 = vadd.f32 %v4432, %v4434
    %v4437 = vmax.f32 %v4436, 0.0
    %v4439 = vsel %vm199, %v4437, 0
    %4441 = vmatprep.subr.mxu0 0.0
    %4442 = vmatpush1.msra.mxu0 %v31
    %4443 = vmatprep.subr.mxu0 0.0
    %4444 = vmatpush1.msra.mxu0 %v32
    %4445 = vmatprep.subr.mxu0 0.0
    %4446 = vmatpush1.msra.mxu0 %v33
    %4447 = vmatprep.subr.mxu0 0.0
    %4448 = vmatpush1.msra.mxu0 %v34
    %4449 = vmatprep.subr.mxu0 0.0
    %4450 = vmatpush1.msra.mxu0 0.0
    %4451 = vmatprep.subr.mxu0 0.0
    %4452 = vmatpush1.msra.mxu0 0.0
    %4453 = vmatprep.subr.mxu0 0.0
    %4454 = vmatpush1.msra.mxu0 0.0
    %4455 = vmatprep.subr.mxu0 0.0
    %4456 = vmatpush1.msra.mxu0 0.0
    %4457 = vmatprep.subr.mxu0 0.0
    %4458 = vmatpush1.msra.mxu0 0.0
    %4459 = vmatprep.subr.mxu0 0.0
    %4460 = vmatpush1.msra.mxu0 0.0
    %4461 = vmatprep.subr.mxu0 0.0
    %4462 = vmatpush1.msra.mxu0 0.0
    %4463 = vmatprep.subr.mxu0 0.0
    %4464 = vmatpush1.msra.mxu0 0.0
    %4465 = vmatprep.subr.mxu0 0.0
    %4466 = vmatpush1.msra.mxu0 0.0
    %4467 = vmatprep.subr.mxu0 0.0
    %4468 = vmatpush1.msra.mxu0 0.0
    %4469 = vmatprep.subr.mxu0 0.0
    %4470 = vmatpush1.msra.mxu0 0.0
    %4471 = vmatprep.subr.mxu0 0.0
    %4472 = vmatpush1.msra.mxu0 0.0
    %4473 = vmatprep.subr.mxu0 0.0
    %4474 = vmatpush1.msra.mxu0 0.0
    %4475 = vmatprep.subr.mxu0 0.0
    %4476 = vmatpush1.msra.mxu0 0.0
    %4477 = vmatprep.subr.mxu0 0.0
    %4478 = vmatpush1.msra.mxu0 0.0
    %4479 = vmatprep.subr.mxu0 0.0
    %4480 = vmatpush1.msra.mxu0 0.0
    %4481 = vmatprep.subr.mxu0 0.0
    %4482 = vmatpush1.msra.mxu0 0.0
    %4483 = vmatprep.subr.mxu0 0.0
    %4484 = vmatpush1.msra.mxu0 0.0
    %4485 = vmatprep.subr.mxu0 0.0
    %4486 = vmatpush1.msra.mxu0 0.0
    %4487 = vmatprep.subr.mxu0 0.0
    %4488 = vmatpush1.msra.mxu0 0.0
    %4489 = vmatprep.subr.mxu0 0.0
    %4490 = vmatpush1.msra.mxu0 0.0
    %4491 = vmatprep.subr.mxu0 0.0
    %4492 = vmatpush1.msra.mxu0 0.0
    %4493 = vmatprep.subr.mxu0 0.0
    %4494 = vmatpush1.msra.mxu0 0.0
    %4495 = vmatprep.subr.mxu0 0.0
    %4496 = vmatpush1.msra.mxu0 0.0
    %4497 = vmatprep.subr.mxu0 0.0
    %4498 = vmatpush1.msra.mxu0 0.0
    %4499 = vmatprep.subr.mxu0 0.0
    %4500 = vmatpush1.msra.mxu0 0.0
    %4501 = vmatprep.subr.mxu0 0.0
    %4502 = vmatpush1.msra.mxu0 0.0
    %4503 = vmatprep.subr.mxu0 0.0
    %4504 = vmatpush1.msra.mxu0 0.0
    %4505 = vmatprep.mubr.f32.mxu0 0.0
    %4506 = vmatmul.mubr.f32.gmra.mrb[0].mxu0 %v4439
    %v4507 = vpop.f32.mrb[0].mxu0
    %v4508 = vadd.f32 %v198, %v4507
    %v4509 = vpop.f32.mrb[0].mxu0
    %4510 = vdwg.mxu0
    %v4511 = vmax.f32 %v4508, 0.0
    %4512 = vrot.lane.b32.xlu0 %v4051, 96
    %v4513 = vpop.permute.xlu0 %4512
    %v4515 = vsel %vm199, %v4511, %v4513
    %v4517 = vsel %vm279, %v4515, 0
    %4519 = vmatprep.subr.mxu0 0.0
    %4520 = vmatpush1.msra.mxu0 %v14
    %4521 = vmatprep.subr.mxu0 0.0
    %4522 = vmatpush1.msra.mxu0 %v15
    %4523 = vmatprep.subr.mxu0 0.0
    %4524 = vmatpush1.msra.mxu0 %v16
    %4525 = vmatprep.subr.mxu0 0.0
    %4526 = vmatpush1.msra.mxu0 %v17
    %4527 = vmatprep.subr.mxu0 0.0
    %4528 = vmatpush1.msra.mxu0 %v18
    %4529 = vmatprep.subr.mxu0 0.0
    %4530 = vmatpush1.msra.mxu0 %v19
    %4531 = vmatprep.subr.mxu0 0.0
    %4532 = vmatpush1.msra.mxu0 %v20
    %4533 = vmatprep.subr.mxu0 0.0
    %4534 = vmatpush1.msra.mxu0 %v21
    %4535 = vmatprep.subr.mxu0 0.0
    %4536 = vmatpush1.msra.mxu0 0.0
    %4537 = vmatprep.subr.mxu0 0.0
    %4538 = vmatpush1.msra.mxu0 0.0
    %4539 = vmatprep.subr.mxu0 0.0
    %4540 = vmatpush1.msra.mxu0 0.0
    %4541 = vmatprep.subr.mxu0 0.0
    %4542 = vmatpush1.msra.mxu0 0.0
    %4543 = vmatprep.subr.mxu0 0.0
    %4544 = vmatpush1.msra.mxu0 0.0
    %4545 = vmatprep.subr.mxu0 0.0
    %4546 = vmatpush1.msra.mxu0 0.0
    %4547 = vmatprep.subr.mxu0 0.0
    %4548 = vmatpush1.msra.mxu0 0.0
    %4549 = vmatprep.subr.mxu0 0.0
    %4550 = vmatpush1.msra.mxu0 0.0
    %4551 = vmatprep.subr.mxu0 0.0
    %4552 = vmatpush1.msra.mxu0 0.0
    %4553 = vmatprep.subr.mxu0 0.0
    %4554 = vmatpush1.msra.mxu0 0.0
    %4555 = vmatprep.subr.mxu0 0.0
    %4556 = vmatpush1.msra.mxu0 0.0
    %4557 = vmatprep.subr.mxu0 0.0
    %4558 = vmatpush1.msra.mxu0 0.0
    %4559 = vmatprep.subr.mxu0 0.0
    %4560 = vmatpush1.msra.mxu0 0.0
    %4561 = vmatprep.subr.mxu0 0.0
    %4562 = vmatpush1.msra.mxu0 0.0
    %4563 = vmatprep.subr.mxu0 0.0
    %4564 = vmatpush1.msra.mxu0 0.0
    %4565 = vmatprep.subr.mxu0 0.0
    %4566 = vmatpush1.msra.mxu0 0.0
    %4567 = vmatprep.subr.mxu0 0.0
    %4568 = vmatpush1.msra.mxu0 0.0
    %4569 = vmatprep.subr.mxu0 0.0
    %4570 = vmatpush1.msra.mxu0 0.0
    %4571 = vmatprep.subr.mxu0 0.0
    %4572 = vmatpush1.msra.mxu0 0.0
    %4573 = vmatprep.subr.mxu0 0.0
    %4574 = vmatpush1.msra.mxu0 0.0
    %4575 = vmatprep.subr.mxu0 0.0
    %4576 = vmatpush1.msra.mxu0 0.0
    %4577 = vmatprep.subr.mxu0 0.0
    %4578 = vmatpush1.msra.mxu0 0.0
    %4579 = vmatprep.subr.mxu0 0.0
    %4580 = vmatpush1.msra.mxu0 0.0
    %4581 = vmatprep.subr.mxu0 0.0
    %4582 = vmatpush1.msra.mxu0 0.0
    %4583 = vmatprep.mubr.f32.mxu0 0.0
    %4584 = vmatmul.mubr.f32.gmra.mrb[0].mxu0 %v4517
    %v4585 = vpop.f32.mrb[0].mxu0
    %v4586 = vadd.f32 %v278, %v4585
    %v4587 = vpop.f32.mrb[0].mxu0
    %4588 = vdwg.mxu0
    %v4589 = vmul.f32 %v4586, 0.5
    %v4590 = vtanh.pop %v4589
    %v4591 = vmul.f32 %v4590, 0.5
    %v4592 = vadd.f32 %v4591, 0.5
    %4594 = vrot.lane.b32.xlu0 %v4586, 32
    %v4595 = vpop.permute.xlu0 %4594
    %v4597 = vmul.f32 %v4592, %v4595
    %4599 = vrot.lane.b32.xlu0 %v4597, 64
    %v4600 = vpop.permute.xlu0 %4599
    %v4602 = vadd.f32 %v4586, %v4600
    %v4603 = vtanh.pop %v4602
    %v4604 = vsub.f32 %v4051, %v4603
    %4606 = vrot.lane.b32.xlu0 %v4604, 96
    %v4607 = vpop.permute.xlu0 %4606
    %v4609 = vmul.f32 %v4592, %v4607
    %4611 = vrot.lane.b32.xlu0 %v4609, 32
    %v4612 = vpop.permute.xlu0 %4611
    %v4614 = vadd.f32 %v4603, %v4612
    %4616 = vrot.lane.b32.xlu0 %v4614, 64
    %v4617 = vpop.permute.xlu0 %4616
    %v4618 = vsel %vm199, %v4617, 0
    %4620 = vmatprep.subr.mxu0 0.0
    %4621 = vmatpush1.msra.mxu0 %v391
    %4622 = vmatprep.subr.mxu0 0.0
    %4623 = vmatpush1.msra.mxu0 %v393
    %4624 = vmatprep.subr.mxu0 0.0
    %4625 = vmatpush1.msra.mxu0 %v395
    %4626 = vmatprep.subr.mxu0 0.0
    %4627 = vmatpush1.msra.mxu0 %v397
    %4628 = vmatprep.subr.mxu0 0.0
    %4629 = vmatpush1.msra.mxu0 0.0
    %4630 = vmatprep.subr.mxu0 0.0
    %4631 = vmatpush1.msra.mxu0 0.0
    %4632 = vmatprep.subr.mxu0 0.0
    %4633 = vmatpush1.msra.mxu0 0.0
    %4634 = vmatprep.subr.mxu0 0.0
    %4635 = vmatpush1.msra.mxu0 0.0
    %4636 = vmatprep.subr.mxu0 0.0
    %4637 = vmatpush1.msra.mxu0 0.0
    %4638 = vmatprep.subr.mxu0 0.0
    %4639 = vmatpush1.msra.mxu0 0.0
    %4640 = vmatprep.subr.mxu0 0.0
    %4641 = vmatpush1.msra.mxu0 0.0
    %4642 = vmatprep.subr.mxu0 0.0
    %4643 = vmatpush1.msra.mxu0 0.0
    %4644 = vmatprep.subr.mxu0 0.0
    %4645 = vmatpush1.msra.mxu0 0.0
    %4646 = vmatprep.subr.mxu0 0.0
    %4647 = vmatpush1.msra.mxu0 0.0
    %4648 = vmatprep.subr.mxu0 0.0
    %4649 = vmatpush1.msra.mxu0 0.0
    %4650 = vmatprep.subr.mxu0 0.0
    %4651 = vmatpush1.msra.mxu0 0.0
    %4652 = vmatprep.subr.mxu0 0.0
    %4653 = vmatpush1.msra.mxu0 0.0
    %4654 = vmatprep.subr.mxu0 0.0
    %4655 = vmatpush1.msra.mxu0 0.0
    %4656 = vmatprep.subr.mxu0 0.0
    %4657 = vmatpush1.msra.mxu0 0.0
    %4658 = vmatprep.subr.mxu0 0.0
    %4659 = vmatpush1.msra.mxu0 0.0
    %4660 = vmatprep.subr.mxu0 0.0
    %4661 = vmatpush1.msra.mxu0 0.0
    %4662 = vmatprep.subr.mxu0 0.0
    %4663 = vmatpush1.msra.mxu0 0.0
    %4664 = vmatprep.subr.mxu0 0.0
    %4665 = vmatpush1.msra.mxu0 0.0
    %4666 = vmatprep.subr.mxu0 0.0
    %4667 = vmatpush1.msra.mxu0 0.0
    %4668 = vmatprep.subr.mxu0 0.0
    %4669 = vmatpush1.msra.mxu0 0.0
    %4670 = vmatprep.subr.mxu0 0.0
    %4671 = vmatpush1.msra.mxu0 0.0
    %4672 = vmatprep.subr.mxu0 0.0
    %4673 = vmatpush1.msra.mxu0 0.0
    %4674 = vmatprep.subr.mxu0 0.0
    %4675 = vmatpush1.msra.mxu0 0.0
    %4676 = vmatprep.subr.mxu0 0.0
    %4677 = vmatpush1.msra.mxu0 0.0
    %4678 = vmatprep.subr.mxu0 0.0
    %4679 = vmatpush1.msra.mxu0 0.0
    %4680 = vmatprep.subr.mxu0 0.0
    %4681 = vmatpush1.msra.mxu0 0.0
    %4682 = vmatprep.subr.mxu0 0.0
    %4683 = vmatpush1.msra.mxu0 0.0
    %4684 = vmatprep.mubr.f32.mxu0 0.0
    %4685 = vmatmul.mubr.f32.gmra.mrb[0].mxu0 %v4618
    %v4686 = vpop.f32.mrb[0].mxu0
    %v4687 = vadd.f32 %v382, %v4686
    %v4688 = vpop.f32.mrb[0].mxu0
    %4689 = vdwg.mxu0
    %v4690 = vmax.f32 %v4687, 0.0
    %v4691 = vmul.f32 %v4690, %v478
    %v4692 = vsel %vm480, %v4691, 0.0
    %4693 = vadd.xlane.f32.xlu0 %v4692
    %v4694 = vpop.xlane.xlu0 %4693
    %v4695 = vadd.f32 %v4694, %v487
    %v4696 = vtanh.pop %v4695
    %v4697 = vmul.f32 %v4690, %v493
    %v4698 = vsel %vm480, %v4697, 0.0
    %4699 = vadd.xlane.f32.xlu0 %v4698
    %v4700 = vpop.xlane.xlu0 %4699
    %v4701 = vadd.f32 %v4700, %v487
    %v4702 = vtanh.pop %v4701
    %4703 = vrot.lane.b32.xlu0 %v1035, 2
    %v4704 = vpop.permute.xlu0 %4703
    %4706 = vrot.lane.b32.xlu0 %v1041, 2
    %v4707 = vpop.permute.xlu0 %4706
    %4709 = vrot.lane.b32.xlu0 %v1598, 4
    %v4710 = vpop.permute.xlu0 %4709
    %4712 = vrot.lane.b32.xlu0 %v1604, 4
    %v4713 = vpop.permute.xlu0 %4712
    %4715 = vrot.lane.b32.xlu0 %v2161, 6
    %v4716 = vpop.permute.xlu0 %4715
    %4718 = vrot.lane.b32.xlu0 %v2167, 6
    %v4719 = vpop.permute.xlu0 %4718
    %4721 = vrot.lane.b32.xlu0 %v2724, 8
    %v4722 = vpop.permute.xlu0 %4721
    %4724 = vrot.lane.b32.xlu0 %v2730, 8
    %v4725 = vpop.permute.xlu0 %4724
    %4727 = vrot.lane.b32.xlu0 %v3287, 10
    %v4728 = vpop.permute.xlu0 %4727
    %4730 = vrot.lane.b32.xlu0 %v3293, 10
    %v4731 = vpop.permute.xlu0 %4730
    %4733 = vrot.lane.b32.xlu0 %v3850, 12
    %v4734 = vpop.permute.xlu0 %4733
    %4736 = vrot.lane.b32.xlu0 %v3856, 12
    %v4737 = vpop.permute.xlu0 %4736
    %4740 = vrot.lane.b32.xlu0 %v4413, 14
    %v4741 = vpop.permute.xlu0 %4740
    %4744 = vrot.lane.b32.xlu0 %v4419, 14
    %v4745 = vpop.permute.xlu0 %4744
    %vm4747 = vcmask 7168
    %v4748 = vsel %vm4747, %v489, %v499
    %vm4749 = vcmask 15360
    %v4750 = vsel %vm4749, %v4748, %v4704
    %vm4751 = vcmask 23552
    %v4752 = vsel %vm4751, %v4750, %v4707
    %vm4753 = vcmask 31744
    %v4754 = vsel %vm4753, %v4752, %v4710
    %vm4755 = vcmask 39936
    %v4756 = vsel %vm4755, %v4754, %v4713
    %v4757 = vsel %vm48, %v4756, %v4716
    %vm4758 = vcmask 56320
    %v4759 = vsel %vm4758, %v4757, %v4719
    %vm4760 = vcmask 64512
    %v4761 = vsel %vm4760, %v4759, %v4722
    %vm4762 = vcmask 72704
    %v4763 = vsel %vm4762, %v4761, %v4725
    %vm4764 = vcmask 80896
    %v4765 = vsel %vm4764, %v4763, %v4728
    %vm4766 = vcmask 89088
    %v4767 = vsel %vm4766, %v4765, %v4731
    %vm4768 = vcmask 97280
    %v4769 = vsel %vm4768, %v4767, %v4734
    %vm4770 = vcmask 105472
    %v4771 = vsel %vm4770, %v4769, %v4737
    %vm4772 = vcmask 113664
    %v4773 = vsel %vm4772, %v4771, %v4741
    %vm4774 = vcmask 121856
    %v4775 = vsel %vm4774, %v4773, %v4745
    %4776 = vst.msk [vmem:[%s2] sm:$0xf] %vm480, %v4775
    %4777 = vrot.lane.b32.xlu0 %v1318, 2
    %v4778 = vpop.permute.xlu0 %4777
    %4780 = vrot.lane.b32.xlu0 %v1324, 2
    %v4781 = vpop.permute.xlu0 %4780
    %4783 = vrot.lane.b32.xlu0 %v1881, 4
    %v4784 = vpop.permute.xlu0 %4783
    %4786 = vrot.lane.b32.xlu0 %v1887, 4
    %v4787 = vpop.permute.xlu0 %4786
    %4789 = vrot.lane.b32.xlu0 %v2444, 6
    %v4790 = vpop.permute.xlu0 %4789
    %4792 = vrot.lane.b32.xlu0 %v2450, 6
    %v4793 = vpop.permute.xlu0 %4792
    %4795 = vrot.lane.b32.xlu0 %v3007, 8
    %v4796 = vpop.permute.xlu0 %4795
    %4798 = vrot.lane.b32.xlu0 %v3013, 8
    %v4799 = vpop.permute.xlu0 %4798
    %4801 = vrot.lane.b32.xlu0 %v3570, 10
    %v4802 = vpop.permute.xlu0 %4801
    %4804 = vrot.lane.b32.xlu0 %v3576, 10
    %v4805 = vpop.permute.xlu0 %4804
    %4807 = vrot.lane.b32.xlu0 %v4133, 12
    %v4808 = vpop.permute.xlu0 %4807
    %4810 = vrot.lane.b32.xlu0 %v4139, 12
    %v4811 = vpop.permute.xlu0 %4810
    %4814 = vrot.lane.b32.xlu0 %v4696, 14
    %v4815 = vpop.permute.xlu0 %4814
    %4818 = vrot.lane.b32.xlu0 %v4702, 14
    %v4819 = vpop.permute.xlu0 %4818
    %v4821 = vsel %vm4747, %v755, %v761
    %v4822 = vsel %vm4749, %v4821, %v4778
    %v4823 = vsel %vm4751, %v4822, %v4781
    %v4824 = vsel %vm4753, %v4823, %v4784
    %v4825 = vsel %vm4755, %v4824, %v4787
    %v4826 = vsel %vm48, %v4825, %v4790
    %v4827 = vsel %vm4758, %v4826, %v4793
    %v4828 = vsel %vm4760, %v4827, %v4796
    %v4829 = vsel %vm4762, %v4828, %v4799
    %v4830 = vsel %vm4764, %v4829, %v4802
    %v4831 = vsel %vm4766, %v4830, %v4805
    %v4832 = vsel %vm4768, %v4831, %v4808
    %v4833 = vsel %vm4770, %v4832, %v4811
    %v4834 = vsel %vm4772, %v4833, %v4815
    %v4835 = vsel %vm4774, %v4834, %v4819
    %4836 = vst.msk [vmem:[%s2 + $0x4] sm:$0xf] %vm480, %v4835
    %vm4838 = vcmask 257024
    %4839 = vst.msk [vmem:[#allocation2] sm:$0xf] %vm4838, %v4334
    %4841 = vst.msk [vmem:[#allocation2 + $0x4] sm:$0xf] %vm4838, %v4617
    // Predicated region
    $region10: #{lstm_decoder_forward.1} parent=1 // pred_check
      _
    $region11: #{lstm_decoder_forward.1} parent=1 // pred_check_branch
      %4843 = sbr.rel (0) target = $region13
    $region12: #{lstm_decoder_forward.1} parent=1 // pred_region
      _
    $region13: #{lstm_decoder_forward.1} parent=1 // pred_fallthru
      _
    // Predicated region
    $region14: #{lstm_decoder_forward.1} parent=1 // pred_check
      _
    $region15: #{lstm_decoder_forward.1} parent=1 // pred_check_branch
      %4845 = sbr.rel (0) target = $region17
    $region16: #{lstm_decoder_forward.1} parent=1 // pred_region
      %s4847 = ssub.s32 128, 128
      %4848 = vsyncadd [#allocation3], %s4847
      %s4850 = sshll.u32 [#allocation2], 4
      %s4851 = int_to_ptr.vmem [resolvable:$true] %s4850
      %4853 = dma.vmem_to_hbm [thread:$0]  %s4851, 128, %s3, [#allocation3]
    $region17: #{lstm_decoder_forward.1} parent=1 // pred_fallthru
      _
    // Predicated region
    $region18: #{lstm_decoder_forward.1} parent=1 // pred_check
      _
    $region19: #{lstm_decoder_forward.1} parent=1 // pred_check_branch
      %4855 = sbr.rel (0) target = $region21
    $region20: #{lstm_decoder_forward.1} parent=1 // pred_region
      _
    $region21: #{lstm_decoder_forward.1} parent=1 // pred_fallthru
      _
    // Predicated region
    $region22: #{lstm_decoder_forward.1} parent=1 // pred_check
      _
    $region23: #{lstm_decoder_forward.1} parent=1 // pred_check_branch
      %4857 = sbr.rel (0) target = $region25
    $region24: #{lstm_decoder_forward.1} parent=1 // pred_region
      %4858 = dma.done [#allocation3], 128
    $region25: #{lstm_decoder_forward.1} parent=1 // pred_fallthru
      _
    %4859 = vsyncpa [#allocation3], 1

</llo_original>
